<compile_context>
chip_gen: v7x
topology: tpu7x:2x2x1
jax: 0.10.0
libtpu: 0.0.40
codegen_flags: <defaults>
</compile_context>

<pallas_src>
import math
import jax
import jax.numpy as jnp
from jax.experimental import pallas as pl
from jax.experimental.pallas import tpu as pltpu

# ----- model config (module defaults scaled down: vocab 100) -----
VOCAB = 100
VOCAB_PAD = ((VOCAB + 127) // 128) * 128      # pad vocab rows to a full lane tile
D_MODEL = 64
N_HEAD = 4
HEAD_DIM = D_MODEL // N_HEAD
D_FF = 4 * D_MODEL
N_LAYERS = 2
OUT_DIM = 6
LN_EPS = 1e-5
NEG_INF = -1e9          # additive key-padding bias (equivalent to -inf after max-sub)

# bias/LN slab layout: (N_LAYERS, 8, BIAS_W) f32, one logical vector per row
BIAS_W = max(D_FF, 3 * D_MODEL)               # 256
(R_BQKV, R_BO, R_B1, R_B2, R_LN1W, R_LN1B, R_LN2W, R_LN2B) = range(8)


# ---------------------------- in-kernel helpers ----------------------------

def _softmax_last(x):
    # f32 throughout. NOTE: approx reciprocal (~1e-3 rel err) — use approx=False
    # if bit-close parity with the PyTorch reference is required.
    m = jnp.max(x, axis=-1, keepdims=True)
    e = jnp.exp(x - m)
    return e * pl.reciprocal(jnp.sum(e, axis=-1, keepdims=True), approx=True)


def _layernorm(x, w, b):
    mu = jnp.mean(x, axis=-1, keepdims=True)
    var = jnp.mean((x - mu) ** 2, axis=-1, keepdims=True)
    return (x - mu) * jax.lax.rsqrt(var + LN_EPS) * w + b


# ---------------------------- fused Pallas kernel ----------------------------

def fused_transformer_kernel(ids_ref, mask_ref, pe_ref, emb_ref,
                             wqkv_ref, wo_ref, w1_ref, w2_ref, bias_ref,
                             fcw_ref, fcb_ref, o_ref):
    # ids_ref  : (BT*S, 1) int32 token ids for this batch tile
    # mask_ref : (BT, S)   int32 attention mask (1 = keep, 0 = pad)
    # pe_ref   : (S, D)    f32 positional encoding
    # emb_ref  : (VOCAB_PAD, D) bf16 embedding table
    # wqkv/wo/w1/w2 : (L, ...) bf16 stacked per-layer weights (stored (in, out))
    # bias_ref : (L, 8, BIAS_W) f32 bias/LN slab
    # fcw_ref  : (D, OUT) bf16, fcb_ref: (1, OUT) f32 -> o_ref (BT, OUT) f32
    BT, S = mask_ref.shape
    D, HD = D_MODEL, HEAD_DIM
    M = BT * S

    # ---- fused embedding lookup: one-hot (M, VOCAB_PAD) @ emb on the MXU
    ids = ids_ref[...]                                                 # (M, 1)
    iota = jax.lax.broadcasted_iota(jnp.int32, (M, VOCAB_PAD), 1)
    onehot = jnp.where(iota == ids, 1.0, 0.0).astype(jnp.bfloat16)     # (M, VOCAB_PAD)
    x = jnp.dot(onehot, emb_ref[...], preferred_element_type=jnp.float32)
    x = x * math.sqrt(D)
    x = (x.reshape(BT, S, D) + pe_ref[...][None, :, :]).reshape(M, D)  # f32 resident

    # ---- additive key-padding bias, materialized ONCE (hoisted out of loops)
    maskb = jnp.where(mask_ref[...] != 0, 0.0, NEG_INF).astype(jnp.float32)
    maskb = jnp.broadcast_to(maskb.reshape(BT, 1, S), (BT, S, S))

    scale = 1.0 / math.sqrt(HD)

    for l in range(N_LAYERS):                       # static unroll over 2 layers
        bias = bias_ref[l]                          # (8, BIAS_W) f32
        bqkv = bias[R_BQKV:R_BQKV + 1, 0:3 * D]
        bo   = bias[R_BO:R_BO + 1, 0:D]
        b1   = bias[R_B1:R_B1 + 1, 0:D_FF]
        b2   = bias[R_B2:R_B2 + 1, 0:D]
        ln1w = bias[R_LN1W:R_LN1W + 1, 0:D]
        ln1b = bias[R_LN1B:R_LN1B + 1, 0:D]
        ln2w = bias[R_LN2W:R_LN2W + 1, 0:D]
        ln2b = bias[R_LN2B:R_LN2B + 1, 0:D]
        wo_l = wo_ref[l]                            # (D, D) bf16

        # ---- fused QKV projection: bf16 operands, f32 accumulation
        xb = x.astype(jnp.bfloat16)
        qkv = jnp.dot(xb, wqkv_ref[l], preferred_element_type=jnp.float32) + bqkv
        q = (qkv[:, 0:D] * scale).reshape(BT, S, D).astype(jnp.bfloat16)
        k = qkv[:, D:2 * D].reshape(BT, S, D).astype(jnp.bfloat16)
        v = qkv[:, 2 * D:3 * D].reshape(BT, S, D).astype(jnp.bfloat16)

        # ---- multi-head attention; per-head output projection accumulated
        # directly (concat(heads) @ Wo == sum_h head_h @ Wo[h*HD:(h+1)*HD]),
        # so no lane-axis concat of head outputs is ever materialized.
        # TODO(synk): fold the head loop into a single 'bqhd,bkhd->bhqk'
        # contraction once Mosaic dot_general reliably supports two batch dims.
        attn = None
        for h in range(N_HEAD):                     # static unroll over heads
            sl = slice(h * HD, (h + 1) * HD)
            s = jnp.einsum('bqd,bkd->bqk', q[:, :, sl], k[:, :, sl],
                           preferred_element_type=jnp.float32) + maskb
            p = _softmax_last(s).astype(jnp.bfloat16)                  # (BT,S,S)
            ctx = jnp.einsum('bqk,bkd->bqd', p, v[:, :, sl],
                             preferred_element_type=jnp.float32)       # (BT,S,HD)
            part = jnp.dot(ctx.reshape(M, HD).astype(jnp.bfloat16),
                           wo_l[h * HD:(h + 1) * HD, :],
                           preferred_element_type=jnp.float32)          # (M, D)
            attn = part if attn is None else attn + part
        attn = attn + bo

        # ---- post-norm residual blocks (PyTorch norm_first=False, ReLU FFN)
        x = _layernorm(x + attn, ln1w, ln1b)
        h1 = jnp.maximum(
            jnp.dot(x.astype(jnp.bfloat16), w1_ref[l],
                    preferred_element_type=jnp.float32) + b1, 0.0)
        h2 = jnp.dot(h1.astype(jnp.bfloat16), w2_ref[l],
                     preferred_element_type=jnp.float32) + b2
        x = _layernorm(x + h2, ln2w, ln2b)

    # ---- classifier head on the [CLS] (position 0) token of each sequence
    cls = x.reshape(BT, S, D)[:, 0, :].astype(jnp.bfloat16)            # (BT, D)
    o_ref[...] = (jnp.dot(cls, fcw_ref[...], preferred_element_type=jnp.float32)
                  + fcb_ref[...])


# ---------------------------- wrappers ----------------------------

def positional_encoding(seq_len, d_model):
    pos = jnp.arange(seq_len, dtype=jnp.float32)[:, None]
    div = jnp.exp(jnp.arange(0, d_model, 2, dtype=jnp.float32)
                  * (-math.log(10000.0) / d_model))
    pe = jnp.zeros((seq_len, d_model), jnp.float32)
    pe = pe.at[:, 0::2].set(jnp.sin(pos * div))
    pe = pe.at[:, 1::2].set(jnp.cos(pos * div))
    return pe


def _pick_batch_tile(B, S, target_rows=256):
    """Largest divisor of B whose tile has ~target_rows rows (VMEM bounding)."""
    bt = max(1, min(B, max(1, target_rows // max(S, 1))))
    while B % bt:
        bt -= 1
    return bt


def forward(source, attention_mask, emb, wqkv, wo, w1, w2, bias_slab, fcw, fcb):
    B, S = source.shape
    bt = _pick_batch_tile(B, S)
    grid = (B // bt,)

    ids = source.reshape(B * S, 1).astype(jnp.int32)
    maski = attention_mask.astype(jnp.int32)
    pe = positional_encoding(S, D_MODEL)            # constant-folded under jit

    const2 = lambda i: (0, 0)
    const3 = lambda i: (0, 0, 0)

    return pl.pallas_call(
        fused_transformer_kernel,
        out_shape=jax.ShapeDtypeStruct((B, OUT_DIM), jnp.float32),
        grid=grid,
        in_specs=[
            pl.BlockSpec((bt * S, 1), lambda i: (i, 0)),              # token ids
            pl.BlockSpec((bt, S), lambda i: (i, 0)),                  # mask
            pl.BlockSpec((S, D_MODEL), const2),                       # pos-enc
            pl.BlockSpec((VOCAB_PAD, D_MODEL), const2),               # embedding
            pl.BlockSpec((N_LAYERS, D_MODEL, 3 * D_MODEL), const3),   # wqkv
            pl.BlockSpec((N_LAYERS, D_MODEL, D_MODEL), const3),       # wo
            pl.BlockSpec((N_LAYERS, D_MODEL, D_FF), const3),          # w1
            pl.BlockSpec((N_LAYERS, D_FF, D_MODEL), const3),          # w2
            pl.BlockSpec((N_LAYERS, 8, BIAS_W), const3),              # bias/LN slab
            pl.BlockSpec((D_MODEL, OUT_DIM), const2),                 # fc weight
            pl.BlockSpec((1, OUT_DIM), const2),                       # fc bias
        ],
        out_specs=pl.BlockSpec((bt, OUT_DIM), lambda i: (i, 0)),
        compiler_params=pltpu.CompilerParams(
            dimension_semantics=("parallel",),      # batch tiles -> 2 TCs on v7x
            vmem_limit_bytes=48 * 1024 * 1024),
    )(ids, maski, pe, emb, wqkv, wo, w1, w2, bias_slab, fcw, fcb)


# ---------------------------- deterministic init ----------------------------

def xavier(key, shape):
    fan_in, fan_out = shape[0], shape[1]
    a = math.sqrt(6.0 / (fan_in + fan_out))
    return jax.random.uniform(key, shape, jnp.float32, -a, a)


def _pad_row(v, width=BIAS_W):
    return jnp.pad(v, (0, width - v.shape[0]))


def init_params(key):
    k_emb, k_fc, k_fcb, *k_layers = jax.random.split(key, 3 + N_LAYERS)

    emb = xavier(k_emb, (VOCAB, D_MODEL))
    emb = jnp.pad(emb, ((0, VOCAB_PAD - VOCAB), (0, 0))).astype(jnp.bfloat16)
    fcw = xavier(k_fc, (D_MODEL, OUT_DIM)).astype(jnp.bfloat16)       # (in, out)
    bound = 1.0 / math.sqrt(D_MODEL)
    fcb = jax.random.uniform(k_fcb, (1, OUT_DIM), jnp.float32, -bound, bound)

    wqkv, wo, w1, w2, bias = [], [], [], [], []
    for lk in k_layers:
        ks = jax.random.split(lk, 7)
        wq = xavier(ks[0], (D_MODEL, D_MODEL))
        wk = xavier(ks[1], (D_MODEL, D_MODEL))
        wv = xavier(ks[2], (D_MODEL, D_MODEL))
        wqkv.append(jnp.concatenate([wq, wk, wv], axis=1).astype(jnp.bfloat16))
        wo.append(xavier(ks[3], (D_MODEL, D_MODEL)).astype(jnp.bfloat16))
        w1.append(xavier(ks[4], (D_MODEL, D_FF)).astype(jnp.bfloat16))
        w2.append(xavier(ks[5], (D_FF, D_MODEL)).astype(jnp.bfloat16))
        kb1, kb2 = jax.random.split(ks[6])
        b1 = jax.random.uniform(kb1, (D_FF,), jnp.float32,
                                -1.0 / math.sqrt(D_MODEL), 1.0 / math.sqrt(D_MODEL))
        b2 = jax.random.uniform(kb2, (D_MODEL,), jnp.float32,
                                -1.0 / math.sqrt(D_FF), 1.0 / math.sqrt(D_FF))
        rows = jnp.stack([
            _pad_row(jnp.zeros((3 * D_MODEL,), jnp.float32)),   # qkv bias (torch: zeros)
            _pad_row(jnp.zeros((D_MODEL,), jnp.float32)),       # out_proj bias
            _pad_row(b1),                                       # linear1 bias
            _pad_row(b2),                                       # linear2 bias
            _pad_row(jnp.ones((D_MODEL,), jnp.float32)),        # norm1.weight
            _pad_row(jnp.zeros((D_MODEL,), jnp.float32)),       # norm1.bias
            _pad_row(jnp.ones((D_MODEL,), jnp.float32)),        # norm2.weight
            _pad_row(jnp.zeros((D_MODEL,), jnp.float32)),       # norm2.bias
        ], axis=0)
        bias.append(rows)

    stack = lambda xs: jnp.stack(xs, axis=0)
    return (emb, stack(wqkv), stack(wo), stack(w1), stack(w2), stack(bias), fcw, fcb)


if __name__ == "__main__":
    key = jax.random.PRNGKey(0)
    k_params, k_src = jax.random.split(key)
    params = init_params(k_params)

    B, S = 2, 8
    source = jax.random.randint(k_src, (B, S), 0, VOCAB, dtype=jnp.int32)
    attention_mask = jnp.array(
        [[True] * S,
         [True] * (S - 3) + [False] * 3], dtype=jnp.bool_)

    fwd = jax.jit(forward)
    out = fwd(source, attention_mask, *params)
    jax.block_until_ready(out)
    assert out.shape == (B, OUT_DIM) and out.dtype == jnp.float32
    print("KERNEL_OK")
</pallas_src>

<mosaic_0001>
module attributes {stable_mosaic.version = 11 : i64} {
  func.func @fused_transformer_kernel(%arg0: i32, %arg1: memref<16x1xi32, #tpu.memory_space<vmem>>, %arg2: memref<2x8xi32, #tpu.memory_space<vmem>>, %arg3: memref<8x64xf32, #tpu.memory_space<vmem>>, %arg4: memref<128x64xbf16, #tpu.memory_space<vmem>>, %arg5: memref<2x64x192xbf16, #tpu.memory_space<vmem>>, %arg6: memref<2x64x64xbf16, #tpu.memory_space<vmem>>, %arg7: memref<2x64x256xbf16, #tpu.memory_space<vmem>>, %arg8: memref<2x256x64xbf16, #tpu.memory_space<vmem>>, %arg9: memref<2x8x256xf32, #tpu.memory_space<vmem>>, %arg10: memref<64x6xbf16, #tpu.memory_space<vmem>>, %arg11: memref<1x6xf32, #tpu.memory_space<vmem>>, %arg12: memref<2x6xf32, #tpu.memory_space<vmem>>) attributes {dimension_semantics = [#tpu.dimension_semantics<parallel>], iteration_bounds = array<i64: 1>, scalar_prefetch = 0 : i64, scratch_operands = 0 : i64, tpu.core_type = #tpu.core_type<tc>, window_params = [{transform_indices = @transform_0, window_bounds = array<i64: 16, 1>}, {transform_indices = @transform_1, window_bounds = array<i64: 2, 8>}, {pipeline_mode = #tpu.pipeline_mode<synchronous>, transform_indices = @transform_2, window_bounds = array<i64: 8, 64>}, {pipeline_mode = #tpu.pipeline_mode<synchronous>, transform_indices = @transform_3, window_bounds = array<i64: 128, 64>}, {pipeline_mode = #tpu.pipeline_mode<synchronous>, transform_indices = @transform_4, window_bounds = array<i64: 2, 64, 192>}, {pipeline_mode = #tpu.pipeline_mode<synchronous>, transform_indices = @transform_5, window_bounds = array<i64: 2, 64, 64>}, {pipeline_mode = #tpu.pipeline_mode<synchronous>, transform_indices = @transform_6, window_bounds = array<i64: 2, 64, 256>}, {pipeline_mode = #tpu.pipeline_mode<synchronous>, transform_indices = @transform_7, window_bounds = array<i64: 2, 256, 64>}, {pipeline_mode = #tpu.pipeline_mode<synchronous>, transform_indices = @transform_8, window_bounds = array<i64: 2, 8, 256>}, {pipeline_mode = #tpu.pipeline_mode<synchronous>, transform_indices = @transform_9, window_bounds = array<i64: 64, 6>}, {pipeline_mode = #tpu.pipeline_mode<synchronous>, transform_indices = @transform_10, window_bounds = array<i64: 1, 6>}, {transform_indices = @transform_11, window_bounds = array<i64: 2, 6>}]} {
    %c0 = arith.constant 0 : index
    %c0_0 = arith.constant 0 : index
    %0 = vector.load %arg1[%c0, %c0_0] : memref<16x1xi32, #tpu.memory_space<vmem>>, vector<16x1xi32>
    %1 = tpu.iota {dimensions = array<i32: 1>} : vector<16x128xi32>
    %2 = vector.broadcast %0 : vector<16x1xi32> to vector<16x128xi32>
    %3 = arith.cmpi eq, %1, %2 : vector<16x128xi32>
    %cst = arith.constant 1.000000e+00 : f32
    %cst_1 = arith.constant 0.000000e+00 : f32
    %4 = vector.broadcast %cst : f32 to vector<16x128xf32>
    %5 = vector.broadcast %cst_1 : f32 to vector<16x128xf32>
    %6 = arith.select %3, %4, %5 : vector<16x128xi1>, vector<16x128xf32>
    %7 = arith.truncf %6 : vector<16x128xf32> to vector<16x128xbf16>
    %c0_2 = arith.constant 0 : index
    %c0_3 = arith.constant 0 : index
    %8 = vector.load %arg4[%c0_2, %c0_3] : memref<128x64xbf16, #tpu.memory_space<vmem>>, vector<128x64xbf16>
    %cst_4 = arith.constant dense<0.000000e+00> : vector<16x64xf32>
    %9 = tpu.matmul %7, %8, %cst_4 {dimension_numbers = #tpu.dot_dimension_numbers<[1], [0], [0], [1], [0, 0, 1, 1], [], []>} : vector<16x128xbf16>, vector<128x64xbf16>, vector<16x64xf32> -> vector<16x64xf32>
    %cst_5 = arith.constant 8.000000e+00 : f32
    %10 = vector.broadcast %cst_5 : f32 to vector<16x64xf32>
    %11 = arith.mulf %9, %10 : vector<16x64xf32>
    %12 = vector.shape_cast %11 : vector<16x64xf32> to vector<2x8x64xf32>
    %c0_6 = arith.constant 0 : index
    %c0_7 = arith.constant 0 : index
    %13 = vector.load %arg3[%c0_6, %c0_7] : memref<8x64xf32, #tpu.memory_space<vmem>>, vector<8x64xf32>
    %14 = vector.shape_cast %13 : vector<8x64xf32> to vector<1x8x64xf32>
    %15 = vector.broadcast %14 : vector<1x8x64xf32> to vector<2x8x64xf32>
    %16 = arith.addf %12, %15 : vector<2x8x64xf32>
    %17 = vector.shape_cast %16 : vector<2x8x64xf32> to vector<16x64xf32>
    %c0_8 = arith.constant 0 : index
    %c0_9 = arith.constant 0 : index
    %18 = vector.load %arg2[%c0_8, %c0_9] : memref<2x8xi32, #tpu.memory_space<vmem>>, vector<2x8xi32>
    %c0_i32 = arith.constant 0 : i32
    %19 = vector.broadcast %c0_i32 : i32 to vector<2x8xi32>
    %20 = arith.cmpi ne, %18, %19 : vector<2x8xi32>
    %cst_10 = arith.constant 0.000000e+00 : f32
    %cst_11 = arith.constant -1.000000e+09 : f32
    %21 = vector.broadcast %cst_10 : f32 to vector<2x8xf32>
    %22 = vector.broadcast %cst_11 : f32 to vector<2x8xf32>
    %23 = arith.select %20, %21, %22 : vector<2x8xi1>, vector<2x8xf32>
    %24 = vector.shape_cast %23 : vector<2x8xf32> to vector<2x1x8xf32>
    %25 = vector.shape_cast %24 : vector<2x1x8xf32> to vector<2x1x8xf32>
    %26 = vector.broadcast %25 : vector<2x1x8xf32> to vector<2x8x8xf32>
    %c0_12 = arith.constant 0 : index
    %c0_13 = arith.constant 0 : index
    %c0_14 = arith.constant 0 : index
    %27 = vector.load %arg9[%c0_12, %c0_13, %c0_14] : memref<2x8x256xf32, #tpu.memory_space<vmem>>, vector<1x8x256xf32>
    %28 = vector.shape_cast %27 : vector<1x8x256xf32> to vector<8x256xf32>
    %29 = vector.extract_strided_slice %28 {offsets = [0, 0], sizes = [1, 192], strides = [1, 1]} : vector<8x256xf32> to vector<1x192xf32>
    %30 = vector.extract_strided_slice %28 {offsets = [1, 0], sizes = [1, 64], strides = [1, 1]} : vector<8x256xf32> to vector<1x64xf32>
    %31 = vector.extract_strided_slice %28 {offsets = [2, 0], sizes = [1, 256], strides = [1, 1]} : vector<8x256xf32> to vector<1x256xf32>
    %32 = vector.extract_strided_slice %28 {offsets = [3, 0], sizes = [1, 64], strides = [1, 1]} : vector<8x256xf32> to vector<1x64xf32>
    %33 = vector.extract_strided_slice %28 {offsets = [4, 0], sizes = [1, 64], strides = [1, 1]} : vector<8x256xf32> to vector<1x64xf32>
    %34 = vector.extract_strided_slice %28 {offsets = [5, 0], sizes = [1, 64], strides = [1, 1]} : vector<8x256xf32> to vector<1x64xf32>
    %35 = vector.extract_strided_slice %28 {offsets = [6, 0], sizes = [1, 64], strides = [1, 1]} : vector<8x256xf32> to vector<1x64xf32>
    %36 = vector.extract_strided_slice %28 {offsets = [7, 0], sizes = [1, 64], strides = [1, 1]} : vector<8x256xf32> to vector<1x64xf32>
    %c0_15 = arith.constant 0 : index
    %c0_16 = arith.constant 0 : index
    %c0_17 = arith.constant 0 : index
    %37 = vector.load %arg6[%c0_15, %c0_16, %c0_17] : memref<2x64x64xbf16, #tpu.memory_space<vmem>>, vector<1x64x64xbf16>
    %38 = vector.shape_cast %37 : vector<1x64x64xbf16> to vector<64x64xbf16>
    %39 = arith.truncf %17 : vector<16x64xf32> to vector<16x64xbf16>
    %c0_18 = arith.constant 0 : index
    %c0_19 = arith.constant 0 : index
    %c0_20 = arith.constant 0 : index
    %40 = vector.load %arg5[%c0_18, %c0_19, %c0_20] : memref<2x64x192xbf16, #tpu.memory_space<vmem>>, vector<1x64x192xbf16>
    %41 = vector.shape_cast %40 : vector<1x64x192xbf16> to vector<64x192xbf16>
    %cst_21 = arith.constant dense<0.000000e+00> : vector<16x192xf32>
    %42 = tpu.matmul %39, %41, %cst_21 {dimension_numbers = #tpu.dot_dimension_numbers<[1], [0], [0], [1], [0, 0, 1, 1], [], []>} : vector<16x64xbf16>, vector<64x192xbf16>, vector<16x192xf32> -> vector<16x192xf32>
    %43 = vector.broadcast %29 : vector<1x192xf32> to vector<16x192xf32>
    %44 = arith.addf %42, %43 : vector<16x192xf32>
    %45 = vector.extract_strided_slice %44 {offsets = [0, 0], sizes = [16, 64], strides = [1, 1]} : vector<16x192xf32> to vector<16x64xf32>
    %cst_22 = arith.constant 2.500000e-01 : f32
    %46 = vector.broadcast %cst_22 : f32 to vector<16x64xf32>
    %47 = arith.mulf %45, %46 : vector<16x64xf32>
    %48 = vector.shape_cast %47 : vector<16x64xf32> to vector<2x8x64xf32>
    %49 = arith.truncf %48 : vector<2x8x64xf32> to vector<2x8x64xbf16>
    %50 = vector.extract_strided_slice %44 {offsets = [0, 64], sizes = [16, 64], strides = [1, 1]} : vector<16x192xf32> to vector<16x64xf32>
    %51 = vector.shape_cast %50 : vector<16x64xf32> to vector<2x8x64xf32>
    %52 = arith.truncf %51 : vector<2x8x64xf32> to vector<2x8x64xbf16>
    %53 = vector.extract_strided_slice %44 {offsets = [0, 128], sizes = [16, 64], strides = [1, 1]} : vector<16x192xf32> to vector<16x64xf32>
    %54 = vector.shape_cast %53 : vector<16x64xf32> to vector<2x8x64xf32>
    %55 = arith.truncf %54 : vector<2x8x64xf32> to vector<2x8x64xbf16>
    %56 = vector.extract_strided_slice %49 {offsets = [0, 0, 0], sizes = [2, 8, 16], strides = [1, 1, 1]} : vector<2x8x64xbf16> to vector<2x8x16xbf16>
    %57 = vector.extract_strided_slice %52 {offsets = [0, 0, 0], sizes = [2, 8, 16], strides = [1, 1, 1]} : vector<2x8x64xbf16> to vector<2x8x16xbf16>
    "tpu.trace_start"() <{level = 10 : i32, message = "bqd,bkd->bqk"}> : () -> ()
    %cst_23 = arith.constant dense<0.000000e+00> : vector<2x8x8xf32>
    %58 = tpu.matmul %56, %57, %cst_23 {dimension_numbers = #tpu.dot_dimension_numbers<[2], [2], [1], [1], [0, 0, 0, 1, 1, 1], [0], [0]>} : vector<2x8x16xbf16>, vector<2x8x16xbf16>, vector<2x8x8xf32> -> vector<2x8x8xf32>
    "tpu.trace_stop"() : () -> ()
    %59 = arith.addf %58, %26 : vector<2x8x8xf32>
    %cst_24 = arith.constant dense<0xFF800000> : vector<2x8xf32>
    %60 = vector.multi_reduction <maximumf>, %59, %cst_24 [2] : vector<2x8x8xf32> to vector<2x8xf32>
    %61 = vector.shape_cast %60 : vector<2x8xf32> to vector<2x8x1xf32>
    %62 = vector.broadcast %61 : vector<2x8x1xf32> to vector<2x8x8xf32>
    %63 = arith.subf %59, %62 : vector<2x8x8xf32>
    %64 = math.exp %63 : vector<2x8x8xf32>
    %cst_25 = arith.constant dense<0.000000e+00> : vector<2x8xf32>
    %65 = vector.multi_reduction <add>, %64, %cst_25 [2] : vector<2x8x8xf32> to vector<2x8xf32>
    %66 = vector.shape_cast %65 : vector<2x8xf32> to vector<2x8x1xf32>
    %67 = tpu.reciprocal %66 {approx = true} : vector<2x8x1xf32> -> vector<2x8x1xf32>
    %68 = vector.broadcast %67 : vector<2x8x1xf32> to vector<2x8x8xf32>
    %69 = arith.mulf %64, %68 : vector<2x8x8xf32>
    %70 = arith.truncf %69 : vector<2x8x8xf32> to vector<2x8x8xbf16>
    %71 = vector.extract_strided_slice %55 {offsets = [0, 0, 0], sizes = [2, 8, 16], strides = [1, 1, 1]} : vector<2x8x64xbf16> to vector<2x8x16xbf16>
    "tpu.trace_start"() <{level = 10 : i32, message = "bqk,bkd->bqd"}> : () -> ()
    %cst_26 = arith.constant dense<0.000000e+00> : vector<2x8x16xf32>
    %72 = tpu.matmul %70, %71, %cst_26 {dimension_numbers = #tpu.dot_dimension_numbers<[2], [1], [1], [2], [0, 0, 0, 1, 1, 2], [0], [0]>} : vector<2x8x8xbf16>, vector<2x8x16xbf16>, vector<2x8x16xf32> -> vector<2x8x16xf32>
    "tpu.trace_stop"() : () -> ()
    %73 = vector.shape_cast %72 : vector<2x8x16xf32> to vector<16x16xf32>
    %74 = arith.truncf %73 : vector<16x16xf32> to vector<16x16xbf16>
    %75 = vector.extract_strided_slice %38 {offsets = [0, 0], sizes = [16, 64], strides = [1, 1]} : vector<64x64xbf16> to vector<16x64xbf16>
    %cst_27 = arith.constant dense<0.000000e+00> : vector<16x64xf32>
    %76 = tpu.matmul %74, %75, %cst_27 {dimension_numbers = #tpu.dot_dimension_numbers<[1], [0], [0], [1], [0, 0, 1, 1], [], []>} : vector<16x16xbf16>, vector<16x64xbf16>, vector<16x64xf32> -> vector<16x64xf32>
    %77 = vector.extract_strided_slice %49 {offsets = [0, 0, 16], sizes = [2, 8, 16], strides = [1, 1, 1]} : vector<2x8x64xbf16> to vector<2x8x16xbf16>
    %78 = vector.extract_strided_slice %52 {offsets = [0, 0, 16], sizes = [2, 8, 16], strides = [1, 1, 1]} : vector<2x8x64xbf16> to vector<2x8x16xbf16>
    "tpu.trace_start"() <{level = 10 : i32, message = "bqd,bkd->bqk"}> : () -> ()
    %cst_28 = arith.constant dense<0.000000e+00> : vector<2x8x8xf32>
    %79 = tpu.matmul %77, %78, %cst_28 {dimension_numbers = #tpu.dot_dimension_numbers<[2], [2], [1], [1], [0, 0, 0, 1, 1, 1], [0], [0]>} : vector<2x8x16xbf16>, vector<2x8x16xbf16>, vector<2x8x8xf32> -> vector<2x8x8xf32>
    "tpu.trace_stop"() : () -> ()
    %80 = arith.addf %79, %26 : vector<2x8x8xf32>
    %cst_29 = arith.constant dense<0xFF800000> : vector<2x8xf32>
    %81 = vector.multi_reduction <maximumf>, %80, %cst_29 [2] : vector<2x8x8xf32> to vector<2x8xf32>
    %82 = vector.shape_cast %81 : vector<2x8xf32> to vector<2x8x1xf32>
    %83 = vector.broadcast %82 : vector<2x8x1xf32> to vector<2x8x8xf32>
    %84 = arith.subf %80, %83 : vector<2x8x8xf32>
    %85 = math.exp %84 : vector<2x8x8xf32>
    %cst_30 = arith.constant dense<0.000000e+00> : vector<2x8xf32>
    %86 = vector.multi_reduction <add>, %85, %cst_30 [2] : vector<2x8x8xf32> to vector<2x8xf32>
    %87 = vector.shape_cast %86 : vector<2x8xf32> to vector<2x8x1xf32>
    %88 = tpu.reciprocal %87 {approx = true} : vector<2x8x1xf32> -> vector<2x8x1xf32>
    %89 = vector.broadcast %88 : vector<2x8x1xf32> to vector<2x8x8xf32>
    %90 = arith.mulf %85, %89 : vector<2x8x8xf32>
    %91 = arith.truncf %90 : vector<2x8x8xf32> to vector<2x8x8xbf16>
    %92 = vector.extract_strided_slice %55 {offsets = [0, 0, 16], sizes = [2, 8, 16], strides = [1, 1, 1]} : vector<2x8x64xbf16> to vector<2x8x16xbf16>
    "tpu.trace_start"() <{level = 10 : i32, message = "bqk,bkd->bqd"}> : () -> ()
    %cst_31 = arith.constant dense<0.000000e+00> : vector<2x8x16xf32>
    %93 = tpu.matmul %91, %92, %cst_31 {dimension_numbers = #tpu.dot_dimension_numbers<[2], [1], [1], [2], [0, 0, 0, 1, 1, 2], [0], [0]>} : vector<2x8x8xbf16>, vector<2x8x16xbf16>, vector<2x8x16xf32> -> vector<2x8x16xf32>
    "tpu.trace_stop"() : () -> ()
    %94 = vector.shape_cast %93 : vector<2x8x16xf32> to vector<16x16xf32>
    %95 = arith.truncf %94 : vector<16x16xf32> to vector<16x16xbf16>
    %96 = vector.extract_strided_slice %38 {offsets = [16, 0], sizes = [16, 64], strides = [1, 1]} : vector<64x64xbf16> to vector<16x64xbf16>
    %cst_32 = arith.constant dense<0.000000e+00> : vector<16x64xf32>
    %97 = tpu.matmul %95, %96, %cst_32 {dimension_numbers = #tpu.dot_dimension_numbers<[1], [0], [0], [1], [0, 0, 1, 1], [], []>} : vector<16x16xbf16>, vector<16x64xbf16>, vector<16x64xf32> -> vector<16x64xf32>
    %98 = arith.addf %76, %97 : vector<16x64xf32>
    %99 = vector.extract_strided_slice %49 {offsets = [0, 0, 32], sizes = [2, 8, 16], strides = [1, 1, 1]} : vector<2x8x64xbf16> to vector<2x8x16xbf16>
    %100 = vector.extract_strided_slice %52 {offsets = [0, 0, 32], sizes = [2, 8, 16], strides = [1, 1, 1]} : vector<2x8x64xbf16> to vector<2x8x16xbf16>
    "tpu.trace_start"() <{level = 10 : i32, message = "bqd,bkd->bqk"}> : () -> ()
    %cst_33 = arith.constant dense<0.000000e+00> : vector<2x8x8xf32>
    %101 = tpu.matmul %99, %100, %cst_33 {dimension_numbers = #tpu.dot_dimension_numbers<[2], [2], [1], [1], [0, 0, 0, 1, 1, 1], [0], [0]>} : vector<2x8x16xbf16>, vector<2x8x16xbf16>, vector<2x8x8xf32> -> vector<2x8x8xf32>
    "tpu.trace_stop"() : () -> ()
    %102 = arith.addf %101, %26 : vector<2x8x8xf32>
    %cst_34 = arith.constant dense<0xFF800000> : vector<2x8xf32>
    %103 = vector.multi_reduction <maximumf>, %102, %cst_34 [2] : vector<2x8x8xf32> to vector<2x8xf32>
    %104 = vector.shape_cast %103 : vector<2x8xf32> to vector<2x8x1xf32>
    %105 = vector.broadcast %104 : vector<2x8x1xf32> to vector<2x8x8xf32>
    %106 = arith.subf %102, %105 : vector<2x8x8xf32>
    %107 = math.exp %106 : vector<2x8x8xf32>
    %cst_35 = arith.constant dense<0.000000e+00> : vector<2x8xf32>
    %108 = vector.multi_reduction <add>, %107, %cst_35 [2] : vector<2x8x8xf32> to vector<2x8xf32>
    %109 = vector.shape_cast %108 : vector<2x8xf32> to vector<2x8x1xf32>
    %110 = tpu.reciprocal %109 {approx = true} : vector<2x8x1xf32> -> vector<2x8x1xf32>
    %111 = vector.broadcast %110 : vector<2x8x1xf32> to vector<2x8x8xf32>
    %112 = arith.mulf %107, %111 : vector<2x8x8xf32>
    %113 = arith.truncf %112 : vector<2x8x8xf32> to vector<2x8x8xbf16>
    %114 = vector.extract_strided_slice %55 {offsets = [0, 0, 32], sizes = [2, 8, 16], strides = [1, 1, 1]} : vector<2x8x64xbf16> to vector<2x8x16xbf16>
    "tpu.trace_start"() <{level = 10 : i32, message = "bqk,bkd->bqd"}> : () -> ()
    %cst_36 = arith.constant dense<0.000000e+00> : vector<2x8x16xf32>
    %115 = tpu.matmul %113, %114, %cst_36 {dimension_numbers = #tpu.dot_dimension_numbers<[2], [1], [1], [2], [0, 0, 0, 1, 1, 2], [0], [0]>} : vector<2x8x8xbf16>, vector<2x8x16xbf16>, vector<2x8x16xf32> -> vector<2x8x16xf32>
    "tpu.trace_stop"() : () -> ()
    %116 = vector.shape_cast %115 : vector<2x8x16xf32> to vector<16x16xf32>
    %117 = arith.truncf %116 : vector<16x16xf32> to vector<16x16xbf16>
    %118 = vector.extract_strided_slice %38 {offsets = [32, 0], sizes = [16, 64], strides = [1, 1]} : vector<64x64xbf16> to vector<16x64xbf16>
    %cst_37 = arith.constant dense<0.000000e+00> : vector<16x64xf32>
    %119 = tpu.matmul %117, %118, %cst_37 {dimension_numbers = #tpu.dot_dimension_numbers<[1], [0], [0], [1], [0, 0, 1, 1], [], []>} : vector<16x16xbf16>, vector<16x64xbf16>, vector<16x64xf32> -> vector<16x64xf32>
    %120 = arith.addf %98, %119 : vector<16x64xf32>
    %121 = vector.extract_strided_slice %49 {offsets = [0, 0, 48], sizes = [2, 8, 16], strides = [1, 1, 1]} : vector<2x8x64xbf16> to vector<2x8x16xbf16>
    %122 = vector.extract_strided_slice %52 {offsets = [0, 0, 48], sizes = [2, 8, 16], strides = [1, 1, 1]} : vector<2x8x64xbf16> to vector<2x8x16xbf16>
    "tpu.trace_start"() <{level = 10 : i32, message = "bqd,bkd->bqk"}> : () -> ()
    %cst_38 = arith.constant dense<0.000000e+00> : vector<2x8x8xf32>
    %123 = tpu.matmul %121, %122, %cst_38 {dimension_numbers = #tpu.dot_dimension_numbers<[2], [2], [1], [1], [0, 0, 0, 1, 1, 1], [0], [0]>} : vector<2x8x16xbf16>, vector<2x8x16xbf16>, vector<2x8x8xf32> -> vector<2x8x8xf32>
    "tpu.trace_stop"() : () -> ()
    %124 = arith.addf %123, %26 : vector<2x8x8xf32>
    %cst_39 = arith.constant dense<0xFF800000> : vector<2x8xf32>
    %125 = vector.multi_reduction <maximumf>, %124, %cst_39 [2] : vector<2x8x8xf32> to vector<2x8xf32>
    %126 = vector.shape_cast %125 : vector<2x8xf32> to vector<2x8x1xf32>
    %127 = vector.broadcast %126 : vector<2x8x1xf32> to vector<2x8x8xf32>
    %128 = arith.subf %124, %127 : vector<2x8x8xf32>
    %129 = math.exp %128 : vector<2x8x8xf32>
    %cst_40 = arith.constant dense<0.000000e+00> : vector<2x8xf32>
    %130 = vector.multi_reduction <add>, %129, %cst_40 [2] : vector<2x8x8xf32> to vector<2x8xf32>
    %131 = vector.shape_cast %130 : vector<2x8xf32> to vector<2x8x1xf32>
    %132 = tpu.reciprocal %131 {approx = true} : vector<2x8x1xf32> -> vector<2x8x1xf32>
    %133 = vector.broadcast %132 : vector<2x8x1xf32> to vector<2x8x8xf32>
    %134 = arith.mulf %129, %133 : vector<2x8x8xf32>
    %135 = arith.truncf %134 : vector<2x8x8xf32> to vector<2x8x8xbf16>
    %136 = vector.extract_strided_slice %55 {offsets = [0, 0, 48], sizes = [2, 8, 16], strides = [1, 1, 1]} : vector<2x8x64xbf16> to vector<2x8x16xbf16>
    "tpu.trace_start"() <{level = 10 : i32, message = "bqk,bkd->bqd"}> : () -> ()
    %cst_41 = arith.constant dense<0.000000e+00> : vector<2x8x16xf32>
    %137 = tpu.matmul %135, %136, %cst_41 {dimension_numbers = #tpu.dot_dimension_numbers<[2], [1], [1], [2], [0, 0, 0, 1, 1, 2], [0], [0]>} : vector<2x8x8xbf16>, vector<2x8x16xbf16>, vector<2x8x16xf32> -> vector<2x8x16xf32>
    "tpu.trace_stop"() : () -> ()
    %138 = vector.shape_cast %137 : vector<2x8x16xf32> to vector<16x16xf32>
    %139 = arith.truncf %138 : vector<16x16xf32> to vector<16x16xbf16>
    %140 = vector.extract_strided_slice %38 {offsets = [48, 0], sizes = [16, 64], strides = [1, 1]} : vector<64x64xbf16> to vector<16x64xbf16>
    %cst_42 = arith.constant dense<0.000000e+00> : vector<16x64xf32>
    %141 = tpu.matmul %139, %140, %cst_42 {dimension_numbers = #tpu.dot_dimension_numbers<[1], [0], [0], [1], [0, 0, 1, 1], [], []>} : vector<16x16xbf16>, vector<16x64xbf16>, vector<16x64xf32> -> vector<16x64xf32>
    %142 = arith.addf %120, %141 : vector<16x64xf32>
    %143 = vector.broadcast %30 : vector<1x64xf32> to vector<16x64xf32>
    %144 = arith.addf %142, %143 : vector<16x64xf32>
    %145 = arith.addf %17, %144 : vector<16x64xf32>
    %cst_43 = arith.constant dense<0.000000e+00> : vector<16xf32>
    %146 = vector.multi_reduction <add>, %145, %cst_43 [1] : vector<16x64xf32> to vector<16xf32>
    %147 = vector.shape_cast %146 : vector<16xf32> to vector<16x1xf32>
    %cst_44 = arith.constant 6.400000e+01 : f32
    %148 = vector.broadcast %cst_44 : f32 to vector<16x1xf32>
    %149 = arith.divf %147, %148 : vector<16x1xf32>
    %150 = vector.broadcast %149 : vector<16x1xf32> to vector<16x64xf32>
    %151 = arith.subf %145, %150 : vector<16x64xf32>
    %152 = arith.mulf %151, %151 : vector<16x64xf32>
    %cst_45 = arith.constant dense<0.000000e+00> : vector<16xf32>
    %153 = vector.multi_reduction <add>, %152, %cst_45 [1] : vector<16x64xf32> to vector<16xf32>
    %154 = vector.shape_cast %153 : vector<16xf32> to vector<16x1xf32>
    %cst_46 = arith.constant 6.400000e+01 : f32
    %155 = vector.broadcast %cst_46 : f32 to vector<16x1xf32>
    %156 = arith.divf %154, %155 : vector<16x1xf32>
    %157 = vector.broadcast %149 : vector<16x1xf32> to vector<16x64xf32>
    %158 = arith.subf %145, %157 : vector<16x64xf32>
    %cst_47 = arith.constant 9.99999974E-6 : f32
    %159 = vector.broadcast %cst_47 : f32 to vector<16x1xf32>
    %160 = arith.addf %156, %159 : vector<16x1xf32>
    %161 = math.rsqrt %160 : vector<16x1xf32>
    %162 = vector.broadcast %161 : vector<16x1xf32> to vector<16x64xf32>
    %163 = arith.mulf %158, %162 : vector<16x64xf32>
    %164 = vector.broadcast %33 : vector<1x64xf32> to vector<16x64xf32>
    %165 = arith.mulf %163, %164 : vector<16x64xf32>
    %166 = vector.broadcast %34 : vector<1x64xf32> to vector<16x64xf32>
    %167 = arith.addf %165, %166 : vector<16x64xf32>
    %168 = arith.truncf %167 : vector<16x64xf32> to vector<16x64xbf16>
    %c0_48 = arith.constant 0 : index
    %c0_49 = arith.constant 0 : index
    %c0_50 = arith.constant 0 : index
    %169 = vector.load %arg7[%c0_48, %c0_49, %c0_50] : memref<2x64x256xbf16, #tpu.memory_space<vmem>>, vector<1x64x256xbf16>
    %170 = vector.shape_cast %169 : vector<1x64x256xbf16> to vector<64x256xbf16>
    %cst_51 = arith.constant dense<0.000000e+00> : vector<16x256xf32>
    %171 = tpu.matmul %168, %170, %cst_51 {dimension_numbers = #tpu.dot_dimension_numbers<[1], [0], [0], [1], [0, 0, 1, 1], [], []>} : vector<16x64xbf16>, vector<64x256xbf16>, vector<16x256xf32> -> vector<16x256xf32>
    %172 = vector.broadcast %31 : vector<1x256xf32> to vector<16x256xf32>
    %173 = arith.addf %171, %172 : vector<16x256xf32>
    %cst_52 = arith.constant 0.000000e+00 : f32
    %174 = vector.broadcast %cst_52 : f32 to vector<16x256xf32>
    %175 = arith.maximumf %173, %174 : vector<16x256xf32>
    %176 = arith.truncf %175 : vector<16x256xf32> to vector<16x256xbf16>
    %c0_53 = arith.constant 0 : index
    %c0_54 = arith.constant 0 : index
    %c0_55 = arith.constant 0 : index
    %177 = vector.load %arg8[%c0_53, %c0_54, %c0_55] : memref<2x256x64xbf16, #tpu.memory_space<vmem>>, vector<1x256x64xbf16>
    %178 = vector.shape_cast %177 : vector<1x256x64xbf16> to vector<256x64xbf16>
    %cst_56 = arith.constant dense<0.000000e+00> : vector<16x64xf32>
    %179 = tpu.matmul %176, %178, %cst_56 {dimension_numbers = #tpu.dot_dimension_numbers<[1], [0], [0], [1], [0, 0, 1, 1], [], []>} : vector<16x256xbf16>, vector<256x64xbf16>, vector<16x64xf32> -> vector<16x64xf32>
    %180 = vector.broadcast %32 : vector<1x64xf32> to vector<16x64xf32>
    %181 = arith.addf %179, %180 : vector<16x64xf32>
    %182 = arith.addf %167, %181 : vector<16x64xf32>
    %cst_57 = arith.constant dense<0.000000e+00> : vector<16xf32>
    %183 = vector.multi_reduction <add>, %182, %cst_57 [1] : vector<16x64xf32> to vector<16xf32>
    %184 = vector.shape_cast %183 : vector<16xf32> to vector<16x1xf32>
    %cst_58 = arith.constant 6.400000e+01 : f32
    %185 = vector.broadcast %cst_58 : f32 to vector<16x1xf32>
    %186 = arith.divf %184, %185 : vector<16x1xf32>
    %187 = vector.broadcast %186 : vector<16x1xf32> to vector<16x64xf32>
    %188 = arith.subf %182, %187 : vector<16x64xf32>
    %189 = arith.mulf %188, %188 : vector<16x64xf32>
    %cst_59 = arith.constant dense<0.000000e+00> : vector<16xf32>
    %190 = vector.multi_reduction <add>, %189, %cst_59 [1] : vector<16x64xf32> to vector<16xf32>
    %191 = vector.shape_cast %190 : vector<16xf32> to vector<16x1xf32>
    %cst_60 = arith.constant 6.400000e+01 : f32
    %192 = vector.broadcast %cst_60 : f32 to vector<16x1xf32>
    %193 = arith.divf %191, %192 : vector<16x1xf32>
    %194 = vector.broadcast %186 : vector<16x1xf32> to vector<16x64xf32>
    %195 = arith.subf %182, %194 : vector<16x64xf32>
    %cst_61 = arith.constant 9.99999974E-6 : f32
    %196 = vector.broadcast %cst_61 : f32 to vector<16x1xf32>
    %197 = arith.addf %193, %196 : vector<16x1xf32>
    %198 = math.rsqrt %197 : vector<16x1xf32>
    %199 = vector.broadcast %198 : vector<16x1xf32> to vector<16x64xf32>
    %200 = arith.mulf %195, %199 : vector<16x64xf32>
    %201 = vector.broadcast %35 : vector<1x64xf32> to vector<16x64xf32>
    %202 = arith.mulf %200, %201 : vector<16x64xf32>
    %203 = vector.broadcast %36 : vector<1x64xf32> to vector<16x64xf32>
    %204 = arith.addf %202, %203 : vector<16x64xf32>
    %c1 = arith.constant 1 : index
    %c0_62 = arith.constant 0 : index
    %c0_63 = arith.constant 0 : index
    %205 = vector.load %arg9[%c1, %c0_62, %c0_63] : memref<2x8x256xf32, #tpu.memory_space<vmem>>, vector<1x8x256xf32>
    %206 = vector.shape_cast %205 : vector<1x8x256xf32> to vector<8x256xf32>
    %207 = vector.extract_strided_slice %206 {offsets = [0, 0], sizes = [1, 192], strides = [1, 1]} : vector<8x256xf32> to vector<1x192xf32>
    %208 = vector.extract_strided_slice %206 {offsets = [1, 0], sizes = [1, 64], strides = [1, 1]} : vector<8x256xf32> to vector<1x64xf32>
    %209 = vector.extract_strided_slice %206 {offsets = [2, 0], sizes = [1, 256], strides = [1, 1]} : vector<8x256xf32> to vector<1x256xf32>
    %210 = vector.extract_strided_slice %206 {offsets = [3, 0], sizes = [1, 64], strides = [1, 1]} : vector<8x256xf32> to vector<1x64xf32>
    %211 = vector.extract_strided_slice %206 {offsets = [4, 0], sizes = [1, 64], strides = [1, 1]} : vector<8x256xf32> to vector<1x64xf32>
    %212 = vector.extract_strided_slice %206 {offsets = [5, 0], sizes = [1, 64], strides = [1, 1]} : vector<8x256xf32> to vector<1x64xf32>
    %213 = vector.extract_strided_slice %206 {offsets = [6, 0], sizes = [1, 64], strides = [1, 1]} : vector<8x256xf32> to vector<1x64xf32>
    %214 = vector.extract_strided_slice %206 {offsets = [7, 0], sizes = [1, 64], strides = [1, 1]} : vector<8x256xf32> to vector<1x64xf32>
    %c1_64 = arith.constant 1 : index
    %c0_65 = arith.constant 0 : index
    %c0_66 = arith.constant 0 : index
    %215 = vector.load %arg6[%c1_64, %c0_65, %c0_66] : memref<2x64x64xbf16, #tpu.memory_space<vmem>>, vector<1x64x64xbf16>
    %216 = vector.shape_cast %215 : vector<1x64x64xbf16> to vector<64x64xbf16>
    %217 = arith.truncf %204 : vector<16x64xf32> to vector<16x64xbf16>
    %c1_67 = arith.constant 1 : index
    %c0_68 = arith.constant 0 : index
    %c0_69 = arith.constant 0 : index
    %218 = vector.load %arg5[%c1_67, %c0_68, %c0_69] : memref<2x64x192xbf16, #tpu.memory_space<vmem>>, vector<1x64x192xbf16>
    %219 = vector.shape_cast %218 : vector<1x64x192xbf16> to vector<64x192xbf16>
    %cst_70 = arith.constant dense<0.000000e+00> : vector<16x192xf32>
    %220 = tpu.matmul %217, %219, %cst_70 {dimension_numbers = #tpu.dot_dimension_numbers<[1], [0], [0], [1], [0, 0, 1, 1], [], []>} : vector<16x64xbf16>, vector<64x192xbf16>, vector<16x192xf32> -> vector<16x192xf32>
    %221 = vector.broadcast %207 : vector<1x192xf32> to vector<16x192xf32>
    %222 = arith.addf %220, %221 : vector<16x192xf32>
    %223 = vector.extract_strided_slice %222 {offsets = [0, 0], sizes = [16, 64], strides = [1, 1]} : vector<16x192xf32> to vector<16x64xf32>
    %cst_71 = arith.constant 2.500000e-01 : f32
    %224 = vector.broadcast %cst_71 : f32 to vector<16x64xf32>
    %225 = arith.mulf %223, %224 : vector<16x64xf32>
    %226 = vector.shape_cast %225 : vector<16x64xf32> to vector<2x8x64xf32>
    %227 = arith.truncf %226 : vector<2x8x64xf32> to vector<2x8x64xbf16>
    %228 = vector.extract_strided_slice %222 {offsets = [0, 64], sizes = [16, 64], strides = [1, 1]} : vector<16x192xf32> to vector<16x64xf32>
    %229 = vector.shape_cast %228 : vector<16x64xf32> to vector<2x8x64xf32>
    %230 = arith.truncf %229 : vector<2x8x64xf32> to vector<2x8x64xbf16>
    %231 = vector.extract_strided_slice %222 {offsets = [0, 128], sizes = [16, 64], strides = [1, 1]} : vector<16x192xf32> to vector<16x64xf32>
    %232 = vector.shape_cast %231 : vector<16x64xf32> to vector<2x8x64xf32>
    %233 = arith.truncf %232 : vector<2x8x64xf32> to vector<2x8x64xbf16>
    %234 = vector.extract_strided_slice %227 {offsets = [0, 0, 0], sizes = [2, 8, 16], strides = [1, 1, 1]} : vector<2x8x64xbf16> to vector<2x8x16xbf16>
    %235 = vector.extract_strided_slice %230 {offsets = [0, 0, 0], sizes = [2, 8, 16], strides = [1, 1, 1]} : vector<2x8x64xbf16> to vector<2x8x16xbf16>
    "tpu.trace_start"() <{level = 10 : i32, message = "bqd,bkd->bqk"}> : () -> ()
    %cst_72 = arith.constant dense<0.000000e+00> : vector<2x8x8xf32>
    %236 = tpu.matmul %234, %235, %cst_72 {dimension_numbers = #tpu.dot_dimension_numbers<[2], [2], [1], [1], [0, 0, 0, 1, 1, 1], [0], [0]>} : vector<2x8x16xbf16>, vector<2x8x16xbf16>, vector<2x8x8xf32> -> vector<2x8x8xf32>
    "tpu.trace_stop"() : () -> ()
    %237 = arith.addf %236, %26 : vector<2x8x8xf32>
    %cst_73 = arith.constant dense<0xFF800000> : vector<2x8xf32>
    %238 = vector.multi_reduction <maximumf>, %237, %cst_73 [2] : vector<2x8x8xf32> to vector<2x8xf32>
    %239 = vector.shape_cast %238 : vector<2x8xf32> to vector<2x8x1xf32>
    %240 = vector.broadcast %239 : vector<2x8x1xf32> to vector<2x8x8xf32>
    %241 = arith.subf %237, %240 : vector<2x8x8xf32>
    %242 = math.exp %241 : vector<2x8x8xf32>
    %cst_74 = arith.constant dense<0.000000e+00> : vector<2x8xf32>
    %243 = vector.multi_reduction <add>, %242, %cst_74 [2] : vector<2x8x8xf32> to vector<2x8xf32>
    %244 = vector.shape_cast %243 : vector<2x8xf32> to vector<2x8x1xf32>
    %245 = tpu.reciprocal %244 {approx = true} : vector<2x8x1xf32> -> vector<2x8x1xf32>
    %246 = vector.broadcast %245 : vector<2x8x1xf32> to vector<2x8x8xf32>
    %247 = arith.mulf %242, %246 : vector<2x8x8xf32>
    %248 = arith.truncf %247 : vector<2x8x8xf32> to vector<2x8x8xbf16>
    %249 = vector.extract_strided_slice %233 {offsets = [0, 0, 0], sizes = [2, 8, 16], strides = [1, 1, 1]} : vector<2x8x64xbf16> to vector<2x8x16xbf16>
    "tpu.trace_start"() <{level = 10 : i32, message = "bqk,bkd->bqd"}> : () -> ()
    %cst_75 = arith.constant dense<0.000000e+00> : vector<2x8x16xf32>
    %250 = tpu.matmul %248, %249, %cst_75 {dimension_numbers = #tpu.dot_dimension_numbers<[2], [1], [1], [2], [0, 0, 0, 1, 1, 2], [0], [0]>} : vector<2x8x8xbf16>, vector<2x8x16xbf16>, vector<2x8x16xf32> -> vector<2x8x16xf32>
    "tpu.trace_stop"() : () -> ()
    %251 = vector.shape_cast %250 : vector<2x8x16xf32> to vector<16x16xf32>
    %252 = arith.truncf %251 : vector<16x16xf32> to vector<16x16xbf16>
    %253 = vector.extract_strided_slice %216 {offsets = [0, 0], sizes = [16, 64], strides = [1, 1]} : vector<64x64xbf16> to vector<16x64xbf16>
    %cst_76 = arith.constant dense<0.000000e+00> : vector<16x64xf32>
    %254 = tpu.matmul %252, %253, %cst_76 {dimension_numbers = #tpu.dot_dimension_numbers<[1], [0], [0], [1], [0, 0, 1, 1], [], []>} : vector<16x16xbf16>, vector<16x64xbf16>, vector<16x64xf32> -> vector<16x64xf32>
    %255 = vector.extract_strided_slice %227 {offsets = [0, 0, 16], sizes = [2, 8, 16], strides = [1, 1, 1]} : vector<2x8x64xbf16> to vector<2x8x16xbf16>
    %256 = vector.extract_strided_slice %230 {offsets = [0, 0, 16], sizes = [2, 8, 16], strides = [1, 1, 1]} : vector<2x8x64xbf16> to vector<2x8x16xbf16>
    "tpu.trace_start"() <{level = 10 : i32, message = "bqd,bkd->bqk"}> : () -> ()
    %cst_77 = arith.constant dense<0.000000e+00> : vector<2x8x8xf32>
    %257 = tpu.matmul %255, %256, %cst_77 {dimension_numbers = #tpu.dot_dimension_numbers<[2], [2], [1], [1], [0, 0, 0, 1, 1, 1], [0], [0]>} : vector<2x8x16xbf16>, vector<2x8x16xbf16>, vector<2x8x8xf32> -> vector<2x8x8xf32>
    "tpu.trace_stop"() : () -> ()
    %258 = arith.addf %257, %26 : vector<2x8x8xf32>
    %cst_78 = arith.constant dense<0xFF800000> : vector<2x8xf32>
    %259 = vector.multi_reduction <maximumf>, %258, %cst_78 [2] : vector<2x8x8xf32> to vector<2x8xf32>
    %260 = vector.shape_cast %259 : vector<2x8xf32> to vector<2x8x1xf32>
    %261 = vector.broadcast %260 : vector<2x8x1xf32> to vector<2x8x8xf32>
    %262 = arith.subf %258, %261 : vector<2x8x8xf32>
    %263 = math.exp %262 : vector<2x8x8xf32>
    %cst_79 = arith.constant dense<0.000000e+00> : vector<2x8xf32>
    %264 = vector.multi_reduction <add>, %263, %cst_79 [2] : vector<2x8x8xf32> to vector<2x8xf32>
    %265 = vector.shape_cast %264 : vector<2x8xf32> to vector<2x8x1xf32>
    %266 = tpu.reciprocal %265 {approx = true} : vector<2x8x1xf32> -> vector<2x8x1xf32>
    %267 = vector.broadcast %266 : vector<2x8x1xf32> to vector<2x8x8xf32>
    %268 = arith.mulf %263, %267 : vector<2x8x8xf32>
    %269 = arith.truncf %268 : vector<2x8x8xf32> to vector<2x8x8xbf16>
    %270 = vector.extract_strided_slice %233 {offsets = [0, 0, 16], sizes = [2, 8, 16], strides = [1, 1, 1]} : vector<2x8x64xbf16> to vector<2x8x16xbf16>
    "tpu.trace_start"() <{level = 10 : i32, message = "bqk,bkd->bqd"}> : () -> ()
    %cst_80 = arith.constant dense<0.000000e+00> : vector<2x8x16xf32>
    %271 = tpu.matmul %269, %270, %cst_80 {dimension_numbers = #tpu.dot_dimension_numbers<[2], [1], [1], [2], [0, 0, 0, 1, 1, 2], [0], [0]>} : vector<2x8x8xbf16>, vector<2x8x16xbf16>, vector<2x8x16xf32> -> vector<2x8x16xf32>
    "tpu.trace_stop"() : () -> ()
    %272 = vector.shape_cast %271 : vector<2x8x16xf32> to vector<16x16xf32>
    %273 = arith.truncf %272 : vector<16x16xf32> to vector<16x16xbf16>
    %274 = vector.extract_strided_slice %216 {offsets = [16, 0], sizes = [16, 64], strides = [1, 1]} : vector<64x64xbf16> to vector<16x64xbf16>
    %cst_81 = arith.constant dense<0.000000e+00> : vector<16x64xf32>
    %275 = tpu.matmul %273, %274, %cst_81 {dimension_numbers = #tpu.dot_dimension_numbers<[1], [0], [0], [1], [0, 0, 1, 1], [], []>} : vector<16x16xbf16>, vector<16x64xbf16>, vector<16x64xf32> -> vector<16x64xf32>
    %276 = arith.addf %254, %275 : vector<16x64xf32>
    %277 = vector.extract_strided_slice %227 {offsets = [0, 0, 32], sizes = [2, 8, 16], strides = [1, 1, 1]} : vector<2x8x64xbf16> to vector<2x8x16xbf16>
    %278 = vector.extract_strided_slice %230 {offsets = [0, 0, 32], sizes = [2, 8, 16], strides = [1, 1, 1]} : vector<2x8x64xbf16> to vector<2x8x16xbf16>
    "tpu.trace_start"() <{level = 10 : i32, message = "bqd,bkd->bqk"}> : () -> ()
    %cst_82 = arith.constant dense<0.000000e+00> : vector<2x8x8xf32>
    %279 = tpu.matmul %277, %278, %cst_82 {dimension_numbers = #tpu.dot_dimension_numbers<[2], [2], [1], [1], [0, 0, 0, 1, 1, 1], [0], [0]>} : vector<2x8x16xbf16>, vector<2x8x16xbf16>, vector<2x8x8xf32> -> vector<2x8x8xf32>
    "tpu.trace_stop"() : () -> ()
    %280 = arith.addf %279, %26 : vector<2x8x8xf32>
    %cst_83 = arith.constant dense<0xFF800000> : vector<2x8xf32>
    %281 = vector.multi_reduction <maximumf>, %280, %cst_83 [2] : vector<2x8x8xf32> to vector<2x8xf32>
    %282 = vector.shape_cast %281 : vector<2x8xf32> to vector<2x8x1xf32>
    %283 = vector.broadcast %282 : vector<2x8x1xf32> to vector<2x8x8xf32>
    %284 = arith.subf %280, %283 : vector<2x8x8xf32>
    %285 = math.exp %284 : vector<2x8x8xf32>
    %cst_84 = arith.constant dense<0.000000e+00> : vector<2x8xf32>
    %286 = vector.multi_reduction <add>, %285, %cst_84 [2] : vector<2x8x8xf32> to vector<2x8xf32>
    %287 = vector.shape_cast %286 : vector<2x8xf32> to vector<2x8x1xf32>
    %288 = tpu.reciprocal %287 {approx = true} : vector<2x8x1xf32> -> vector<2x8x1xf32>
    %289 = vector.broadcast %288 : vector<2x8x1xf32> to vector<2x8x8xf32>
    %290 = arith.mulf %285, %289 : vector<2x8x8xf32>
    %291 = arith.truncf %290 : vector<2x8x8xf32> to vector<2x8x8xbf16>
    %292 = vector.extract_strided_slice %233 {offsets = [0, 0, 32], sizes = [2, 8, 16], strides = [1, 1, 1]} : vector<2x8x64xbf16> to vector<2x8x16xbf16>
    "tpu.trace_start"() <{level = 10 : i32, message = "bqk,bkd->bqd"}> : () -> ()
    %cst_85 = arith.constant dense<0.000000e+00> : vector<2x8x16xf32>
    %293 = tpu.matmul %291, %292, %cst_85 {dimension_numbers = #tpu.dot_dimension_numbers<[2], [1], [1], [2], [0, 0, 0, 1, 1, 2], [0], [0]>} : vector<2x8x8xbf16>, vector<2x8x16xbf16>, vector<2x8x16xf32> -> vector<2x8x16xf32>
    "tpu.trace_stop"() : () -> ()
    %294 = vector.shape_cast %293 : vector<2x8x16xf32> to vector<16x16xf32>
    %295 = arith.truncf %294 : vector<16x16xf32> to vector<16x16xbf16>
    %296 = vector.extract_strided_slice %216 {offsets = [32, 0], sizes = [16, 64], strides = [1, 1]} : vector<64x64xbf16> to vector<16x64xbf16>
    %cst_86 = arith.constant dense<0.000000e+00> : vector<16x64xf32>
    %297 = tpu.matmul %295, %296, %cst_86 {dimension_numbers = #tpu.dot_dimension_numbers<[1], [0], [0], [1], [0, 0, 1, 1], [], []>} : vector<16x16xbf16>, vector<16x64xbf16>, vector<16x64xf32> -> vector<16x64xf32>
    %298 = arith.addf %276, %297 : vector<16x64xf32>
    %299 = vector.extract_strided_slice %227 {offsets = [0, 0, 48], sizes = [2, 8, 16], strides = [1, 1, 1]} : vector<2x8x64xbf16> to vector<2x8x16xbf16>
    %300 = vector.extract_strided_slice %230 {offsets = [0, 0, 48], sizes = [2, 8, 16], strides = [1, 1, 1]} : vector<2x8x64xbf16> to vector<2x8x16xbf16>
    "tpu.trace_start"() <{level = 10 : i32, message = "bqd,bkd->bqk"}> : () -> ()
    %cst_87 = arith.constant dense<0.000000e+00> : vector<2x8x8xf32>
    %301 = tpu.matmul %299, %300, %cst_87 {dimension_numbers = #tpu.dot_dimension_numbers<[2], [2], [1], [1], [0, 0, 0, 1, 1, 1], [0], [0]>} : vector<2x8x16xbf16>, vector<2x8x16xbf16>, vector<2x8x8xf32> -> vector<2x8x8xf32>
    "tpu.trace_stop"() : () -> ()
    %302 = arith.addf %301, %26 : vector<2x8x8xf32>
    %cst_88 = arith.constant dense<0xFF800000> : vector<2x8xf32>
    %303 = vector.multi_reduction <maximumf>, %302, %cst_88 [2] : vector<2x8x8xf32> to vector<2x8xf32>
    %304 = vector.shape_cast %303 : vector<2x8xf32> to vector<2x8x1xf32>
    %305 = vector.broadcast %304 : vector<2x8x1xf32> to vector<2x8x8xf32>
    %306 = arith.subf %302, %305 : vector<2x8x8xf32>
    %307 = math.exp %306 : vector<2x8x8xf32>
    %cst_89 = arith.constant dense<0.000000e+00> : vector<2x8xf32>
    %308 = vector.multi_reduction <add>, %307, %cst_89 [2] : vector<2x8x8xf32> to vector<2x8xf32>
    %309 = vector.shape_cast %308 : vector<2x8xf32> to vector<2x8x1xf32>
    %310 = tpu.reciprocal %309 {approx = true} : vector<2x8x1xf32> -> vector<2x8x1xf32>
    %311 = vector.broadcast %310 : vector<2x8x1xf32> to vector<2x8x8xf32>
    %312 = arith.mulf %307, %311 : vector<2x8x8xf32>
    %313 = arith.truncf %312 : vector<2x8x8xf32> to vector<2x8x8xbf16>
    %314 = vector.extract_strided_slice %233 {offsets = [0, 0, 48], sizes = [2, 8, 16], strides = [1, 1, 1]} : vector<2x8x64xbf16> to vector<2x8x16xbf16>
    "tpu.trace_start"() <{level = 10 : i32, message = "bqk,bkd->bqd"}> : () -> ()
    %cst_90 = arith.constant dense<0.000000e+00> : vector<2x8x16xf32>
    %315 = tpu.matmul %313, %314, %cst_90 {dimension_numbers = #tpu.dot_dimension_numbers<[2], [1], [1], [2], [0, 0, 0, 1, 1, 2], [0], [0]>} : vector<2x8x8xbf16>, vector<2x8x16xbf16>, vector<2x8x16xf32> -> vector<2x8x16xf32>
    "tpu.trace_stop"() : () -> ()
    %316 = vector.shape_cast %315 : vector<2x8x16xf32> to vector<16x16xf32>
    %317 = arith.truncf %316 : vector<16x16xf32> to vector<16x16xbf16>
    %318 = vector.extract_strided_slice %216 {offsets = [48, 0], sizes = [16, 64], strides = [1, 1]} : vector<64x64xbf16> to vector<16x64xbf16>
    %cst_91 = arith.constant dense<0.000000e+00> : vector<16x64xf32>
    %319 = tpu.matmul %317, %318, %cst_91 {dimension_numbers = #tpu.dot_dimension_numbers<[1], [0], [0], [1], [0, 0, 1, 1], [], []>} : vector<16x16xbf16>, vector<16x64xbf16>, vector<16x64xf32> -> vector<16x64xf32>
    %320 = arith.addf %298, %319 : vector<16x64xf32>
    %321 = vector.broadcast %208 : vector<1x64xf32> to vector<16x64xf32>
    %322 = arith.addf %320, %321 : vector<16x64xf32>
    %323 = arith.addf %204, %322 : vector<16x64xf32>
    %cst_92 = arith.constant dense<0.000000e+00> : vector<16xf32>
    %324 = vector.multi_reduction <add>, %323, %cst_92 [1] : vector<16x64xf32> to vector<16xf32>
    %325 = vector.shape_cast %324 : vector<16xf32> to vector<16x1xf32>
    %cst_93 = arith.constant 6.400000e+01 : f32
    %326 = vector.broadcast %cst_93 : f32 to vector<16x1xf32>
    %327 = arith.divf %325, %326 : vector<16x1xf32>
    %328 = vector.broadcast %327 : vector<16x1xf32> to vector<16x64xf32>
    %329 = arith.subf %323, %328 : vector<16x64xf32>
    %330 = arith.mulf %329, %329 : vector<16x64xf32>
    %cst_94 = arith.constant dense<0.000000e+00> : vector<16xf32>
    %331 = vector.multi_reduction <add>, %330, %cst_94 [1] : vector<16x64xf32> to vector<16xf32>
    %332 = vector.shape_cast %331 : vector<16xf32> to vector<16x1xf32>
    %cst_95 = arith.constant 6.400000e+01 : f32
    %333 = vector.broadcast %cst_95 : f32 to vector<16x1xf32>
    %334 = arith.divf %332, %333 : vector<16x1xf32>
    %335 = vector.broadcast %327 : vector<16x1xf32> to vector<16x64xf32>
    %336 = arith.subf %323, %335 : vector<16x64xf32>
    %cst_96 = arith.constant 9.99999974E-6 : f32
    %337 = vector.broadcast %cst_96 : f32 to vector<16x1xf32>
    %338 = arith.addf %334, %337 : vector<16x1xf32>
    %339 = math.rsqrt %338 : vector<16x1xf32>
    %340 = vector.broadcast %339 : vector<16x1xf32> to vector<16x64xf32>
    %341 = arith.mulf %336, %340 : vector<16x64xf32>
    %342 = vector.broadcast %211 : vector<1x64xf32> to vector<16x64xf32>
    %343 = arith.mulf %341, %342 : vector<16x64xf32>
    %344 = vector.broadcast %212 : vector<1x64xf32> to vector<16x64xf32>
    %345 = arith.addf %343, %344 : vector<16x64xf32>
    %346 = arith.truncf %345 : vector<16x64xf32> to vector<16x64xbf16>
    %c1_97 = arith.constant 1 : index
    %c0_98 = arith.constant 0 : index
    %c0_99 = arith.constant 0 : index
    %347 = vector.load %arg7[%c1_97, %c0_98, %c0_99] : memref<2x64x256xbf16, #tpu.memory_space<vmem>>, vector<1x64x256xbf16>
    %348 = vector.shape_cast %347 : vector<1x64x256xbf16> to vector<64x256xbf16>
    %cst_100 = arith.constant dense<0.000000e+00> : vector<16x256xf32>
    %349 = tpu.matmul %346, %348, %cst_100 {dimension_numbers = #tpu.dot_dimension_numbers<[1], [0], [0], [1], [0, 0, 1, 1], [], []>} : vector<16x64xbf16>, vector<64x256xbf16>, vector<16x256xf32> -> vector<16x256xf32>
    %350 = vector.broadcast %209 : vector<1x256xf32> to vector<16x256xf32>
    %351 = arith.addf %349, %350 : vector<16x256xf32>
    %cst_101 = arith.constant 0.000000e+00 : f32
    %352 = vector.broadcast %cst_101 : f32 to vector<16x256xf32>
    %353 = arith.maximumf %351, %352 : vector<16x256xf32>
    %354 = arith.truncf %353 : vector<16x256xf32> to vector<16x256xbf16>
    %c1_102 = arith.constant 1 : index
    %c0_103 = arith.constant 0 : index
    %c0_104 = arith.constant 0 : index
    %355 = vector.load %arg8[%c1_102, %c0_103, %c0_104] : memref<2x256x64xbf16, #tpu.memory_space<vmem>>, vector<1x256x64xbf16>
    %356 = vector.shape_cast %355 : vector<1x256x64xbf16> to vector<256x64xbf16>
    %cst_105 = arith.constant dense<0.000000e+00> : vector<16x64xf32>
    %357 = tpu.matmul %354, %356, %cst_105 {dimension_numbers = #tpu.dot_dimension_numbers<[1], [0], [0], [1], [0, 0, 1, 1], [], []>} : vector<16x256xbf16>, vector<256x64xbf16>, vector<16x64xf32> -> vector<16x64xf32>
    %358 = vector.broadcast %210 : vector<1x64xf32> to vector<16x64xf32>
    %359 = arith.addf %357, %358 : vector<16x64xf32>
    %360 = arith.addf %345, %359 : vector<16x64xf32>
    %cst_106 = arith.constant dense<0.000000e+00> : vector<16xf32>
    %361 = vector.multi_reduction <add>, %360, %cst_106 [1] : vector<16x64xf32> to vector<16xf32>
    %362 = vector.shape_cast %361 : vector<16xf32> to vector<16x1xf32>
    %cst_107 = arith.constant 6.400000e+01 : f32
    %363 = vector.broadcast %cst_107 : f32 to vector<16x1xf32>
    %364 = arith.divf %362, %363 : vector<16x1xf32>
    %365 = vector.broadcast %364 : vector<16x1xf32> to vector<16x64xf32>
    %366 = arith.subf %360, %365 : vector<16x64xf32>
    %367 = arith.mulf %366, %366 : vector<16x64xf32>
    %cst_108 = arith.constant dense<0.000000e+00> : vector<16xf32>
    %368 = vector.multi_reduction <add>, %367, %cst_108 [1] : vector<16x64xf32> to vector<16xf32>
    %369 = vector.shape_cast %368 : vector<16xf32> to vector<16x1xf32>
    %cst_109 = arith.constant 6.400000e+01 : f32
    %370 = vector.broadcast %cst_109 : f32 to vector<16x1xf32>
    %371 = arith.divf %369, %370 : vector<16x1xf32>
    %372 = vector.broadcast %364 : vector<16x1xf32> to vector<16x64xf32>
    %373 = arith.subf %360, %372 : vector<16x64xf32>
    %cst_110 = arith.constant 9.99999974E-6 : f32
    %374 = vector.broadcast %cst_110 : f32 to vector<16x1xf32>
    %375 = arith.addf %371, %374 : vector<16x1xf32>
    %376 = math.rsqrt %375 : vector<16x1xf32>
    %377 = vector.broadcast %376 : vector<16x1xf32> to vector<16x64xf32>
    %378 = arith.mulf %373, %377 : vector<16x64xf32>
    %379 = vector.broadcast %213 : vector<1x64xf32> to vector<16x64xf32>
    %380 = arith.mulf %378, %379 : vector<16x64xf32>
    %381 = vector.broadcast %214 : vector<1x64xf32> to vector<16x64xf32>
    %382 = arith.addf %380, %381 : vector<16x64xf32>
    %383 = vector.shape_cast %382 : vector<16x64xf32> to vector<2x8x64xf32>
    %384 = vector.extract_strided_slice %383 {offsets = [0, 0, 0], sizes = [2, 1, 64], strides = [1, 1, 1]} : vector<2x8x64xf32> to vector<2x1x64xf32>
    %385 = vector.shape_cast %384 : vector<2x1x64xf32> to vector<2x64xf32>
    %386 = arith.truncf %385 : vector<2x64xf32> to vector<2x64xbf16>
    %c0_111 = arith.constant 0 : index
    %c0_112 = arith.constant 0 : index
    %387 = vector.load %arg10[%c0_111, %c0_112] : memref<64x6xbf16, #tpu.memory_space<vmem>>, vector<64x6xbf16>
    %cst_113 = arith.constant dense<0.000000e+00> : vector<2x6xf32>
    %388 = tpu.matmul %386, %387, %cst_113 {dimension_numbers = #tpu.dot_dimension_numbers<[1], [0], [0], [1], [0, 0, 1, 1], [], []>} : vector<2x64xbf16>, vector<64x6xbf16>, vector<2x6xf32> -> vector<2x6xf32>
    %c0_114 = arith.constant 0 : index
    %c0_115 = arith.constant 0 : index
    %389 = vector.load %arg11[%c0_114, %c0_115] : memref<1x6xf32, #tpu.memory_space<vmem>>, vector<1x6xf32>
    %390 = vector.broadcast %389 : vector<1x6xf32> to vector<2x6xf32>
    %391 = arith.addf %388, %390 : vector<2x6xf32>
    %c0_116 = arith.constant 0 : index
    %c0_117 = arith.constant 0 : index
    %392 = vector.load %arg12[%c0_116, %c0_117] : memref<2x6xf32, #tpu.memory_space<vmem>>, vector<2x6xf32>
    tpu.vector_store %arg12[%c0_116, %c0_117], %391 {strides = array<i32>} : memref<2x6xf32, #tpu.memory_space<vmem>>, vector<2x6xf32>,
    return
  }
  func.func @transform_0(%arg0: i32) -> (i32, i32) {
    %c0_i32 = arith.constant 0 : i32
    %c0_i32_0 = arith.constant 0 : i32
    return %arg0, %c0_i32 : i32, i32
  }
  func.func @transform_1(%arg0: i32) -> (i32, i32) {
    %c0_i32 = arith.constant 0 : i32
    %c0_i32_0 = arith.constant 0 : i32
    return %arg0, %c0_i32 : i32, i32
  }
  func.func @transform_2(%arg0: i32) -> (i32, i32) {
    %c0_i32 = arith.constant 0 : i32
    %c0_i32_0 = arith.constant 0 : i32
    %c0_i32_1 = arith.constant 0 : i32
    return %c0_i32, %c0_i32_0 : i32, i32
  }
  func.func @transform_3(%arg0: i32) -> (i32, i32) {
    %c0_i32 = arith.constant 0 : i32
    %c0_i32_0 = arith.constant 0 : i32
    %c0_i32_1 = arith.constant 0 : i32
    return %c0_i32, %c0_i32_0 : i32, i32
  }
  func.func @transform_4(%arg0: i32) -> (i32, i32, i32) {
    %c0_i32 = arith.constant 0 : i32
    %c0_i32_0 = arith.constant 0 : i32
    %c0_i32_1 = arith.constant 0 : i32
    %c0_i32_2 = arith.constant 0 : i32
    return %c0_i32, %c0_i32_0, %c0_i32_1 : i32, i32, i32
  }
  func.func @transform_5(%arg0: i32) -> (i32, i32, i32) {
    %c0_i32 = arith.constant 0 : i32
    %c0_i32_0 = arith.constant 0 : i32
    %c0_i32_1 = arith.constant 0 : i32
    %c0_i32_2 = arith.constant 0 : i32
    return %c0_i32, %c0_i32_0, %c0_i32_1 : i32, i32, i32
  }
  func.func @transform_6(%arg0: i32) -> (i32, i32, i32) {
    %c0_i32 = arith.constant 0 : i32
    %c0_i32_0 = arith.constant 0 : i32
    %c0_i32_1 = arith.constant 0 : i32
    %c0_i32_2 = arith.constant 0 : i32
    return %c0_i32, %c0_i32_0, %c0_i32_1 : i32, i32, i32
  }
  func.func @transform_7(%arg0: i32) -> (i32, i32, i32) {
    %c0_i32 = arith.constant 0 : i32
    %c0_i32_0 = arith.constant 0 : i32
    %c0_i32_1 = arith.constant 0 : i32
    %c0_i32_2 = arith.constant 0 : i32
    return %c0_i32, %c0_i32_0, %c0_i32_1 : i32, i32, i32
  }
  func.func @transform_8(%arg0: i32) -> (i32, i32, i32) {
    %c0_i32 = arith.constant 0 : i32
    %c0_i32_0 = arith.constant 0 : i32
    %c0_i32_1 = arith.constant 0 : i32
    %c0_i32_2 = arith.constant 0 : i32
    return %c0_i32, %c0_i32_0, %c0_i32_1 : i32, i32, i32
  }
  func.func @transform_9(%arg0: i32) -> (i32, i32) {
    %c0_i32 = arith.constant 0 : i32
    %c0_i32_0 = arith.constant 0 : i32
    %c0_i32_1 = arith.constant 0 : i32
    return %c0_i32, %c0_i32_0 : i32, i32
  }
  func.func @transform_10(%arg0: i32) -> (i32, i32) {
    %c0_i32 = arith.constant 0 : i32
    %c0_i32_0 = arith.constant 0 : i32
    %c0_i32_1 = arith.constant 0 : i32
    return %c0_i32, %c0_i32_0 : i32, i32
  }
  func.func @transform_11(%arg0: i32) -> (i32, i32) {
    %c0_i32 = arith.constant 0 : i32
    %c0_i32_0 = arith.constant 0 : i32
    return %arg0, %c0_i32 : i32, i32
  }
}

</mosaic_0001>

<llo_original>
// kernel: forward.1
$region0: #{forward.1}
  #allocation0 [shape = 'u32[]', space=smem, size = 0x4, offset = 0x4, fixed_abs, tag = 'smem constant byte address 0x4 - core index']
  #allocation1 [shape = 'u32[144,128]{1,0:T(1,128)}', space=vmem, size = 0x12000, scoped, tag = 'internal scratch']
  %s0 = inlined_call_operand.vmem [shape: s32[16,1], index: 0, kind: input, shape index: {}]
  %s1 = inlined_call_operand.vmem [shape: s32[2,8], index: 1, kind: input, shape index: {}]
  %s2 = inlined_call_operand.vmem [shape: f32[8,64], index: 2, kind: input, shape index: {}]
  %s3 = inlined_call_operand.vmem [shape: bf16[128,64], index: 3, kind: input, shape index: {}]
  %s4 = inlined_call_operand.vmem [shape: bf16[2,64,192], index: 4, kind: input, shape index: {}]
  %s5 = inlined_call_operand.vmem [shape: bf16[2,64,64], index: 5, kind: input, shape index: {}]
  %s6 = inlined_call_operand.vmem [shape: bf16[2,64,256], index: 6, kind: input, shape index: {}]
  %s7 = inlined_call_operand.vmem [shape: bf16[2,256,64], index: 7, kind: input, shape index: {}]
  %s8 = inlined_call_operand.vmem [shape: f32[2,8,256], index: 8, kind: input, shape index: {}]
  %s9 = inlined_call_operand.vmem [shape: bf16[64,6], index: 9, kind: input, shape index: {}]
  %s10 = inlined_call_operand.vmem [shape: f32[1,6], index: 10, kind: input, shape index: {}]
  %s11 = inlined_call_operand.hbm [shape: f32[2,6], index: 11, kind: output, shape index: {}]
  %s12 = sld [smem:[#allocation0]]
  $region54: #{forward.1} parent=0
    _
  %s14 = ssub.s32 1, %s12
  %s15 = scalar_select 0, %s14, %s12
  $region1: #{forward.1} parent=0
    #allocation2 [shape = 'u8[1024]{0}', space=vmem, size = 0x400, scoped, tag = 'output window, operand 0, single buffered']
    #allocation3 [shape = 's32[1]{0}', space=sflag, size = 0x4, scoped, tag = 'scoped memory for forward.1']
    %16 = vsyncpa [#allocation3], 0
    // Predicated region
    $region2: #{forward.1} parent=1 // pred_check
      _
    $region3: #{forward.1} parent=1 // pred_check_branch
      %18 = sbr.rel (0) target = $region5
    $region4: #{forward.1} parent=1 // pred_region
      _
    $region5: #{forward.1} parent=1 // pred_fallthru
      _
    // Predicated region
    $region6: #{forward.1} parent=1 // pred_check
      _
    $region7: #{forward.1} parent=1 // pred_check_branch
      %20 = sbr.rel (0) target = $region9
    $region8: #{forward.1} parent=1 // pred_region
      _
    $region9: #{forward.1} parent=1 // pred_fallthru
      _
    // Predicated region
    $region10: #{forward.1} parent=1 // pred_check
      _
    $region11: #{forward.1} parent=1 // pred_check_branch
      %22 = sbr.rel (0) target = $region13
    $region12: #{forward.1} parent=1 // pred_region
      _
    $region13: #{forward.1} parent=1 // pred_fallthru
      _
    // Predicated region
    $region14: #{forward.1} parent=1 // pred_check
      _
    $region15: #{forward.1} parent=1 // pred_check_branch
      %24 = sbr.rel (0) target = $region17
    $region16: #{forward.1} parent=1 // pred_region
      _
    $region17: #{forward.1} parent=1 // pred_fallthru
      _
    // Predicated region
    $region18: #{forward.1} parent=1 // pred_check
      _
    $region19: #{forward.1} parent=1 // pred_check_branch
      %26 = sbr.rel (0) target = $region21
    $region20: #{forward.1} parent=1 // pred_region
      _
    $region21: #{forward.1} parent=1 // pred_fallthru
      _
    // Predicated region
    $region22: #{forward.1} parent=1 // pred_check
      _
    $region23: #{forward.1} parent=1 // pred_check_branch
      %28 = sbr.rel (0) target = $region25
    $region24: #{forward.1} parent=1 // pred_region
      _
    $region25: #{forward.1} parent=1 // pred_fallthru
      _
    // Predicated region
    $region26: #{forward.1} parent=1 // pred_check
      _
    $region27: #{forward.1} parent=1 // pred_check_branch
      %30 = sbr.rel (0) target = $region29
    $region28: #{forward.1} parent=1 // pred_region
      _
    $region29: #{forward.1} parent=1 // pred_fallthru
      _
    // Predicated region
    $region30: #{forward.1} parent=1 // pred_check
      _
    $region31: #{forward.1} parent=1 // pred_check_branch
      %32 = sbr.rel (0) target = $region33
    $region32: #{forward.1} parent=1 // pred_region
      _
    $region33: #{forward.1} parent=1 // pred_fallthru
      _
    // Predicated region
    $region34: #{forward.1} parent=1 // pred_check
      _
    $region35: #{forward.1} parent=1 // pred_check_branch
      %34 = sbr.rel (0) target = $region37
    $region36: #{forward.1} parent=1 // pred_region
      _
    $region37: #{forward.1} parent=1 // pred_fallthru
      _
    // Predicated region
    $region38: #{forward.1} parent=1 // pred_check
      _
    $region39: #{forward.1} parent=1 // pred_check_branch
      %36 = sbr.rel (0) target = $region41
    $region40: #{forward.1} parent=1 // pred_region
      _
    $region41: #{forward.1} parent=1 // pred_fallthru
      _
    // Predicated region
    $region42: #{forward.1} parent=1 // pred_check
      _
    $region43: #{forward.1} parent=1 // pred_check_branch
      %38 = sbr.rel (0) target = $region45
    $region44: #{forward.1} parent=1 // pred_region
      _
    $region45: #{forward.1} parent=1 // pred_fallthru
      _
    %v40 = vld [vmem:[%s0] sm:$0xff]
    %v41 = vld [vmem:[%s0 + $0x8] sm:$0xff]
    %v42 = vlaneseq
    %v43 = vand.u32 %v42, 127
    %44 = vset.pattern.permute.xlu0 0
    %45 = vperm.xlu0 %44, %v40
    %v46 = vpop.permute.xlu0 %45
    %47 = vset.pattern.permute.xlu0 0
    %48 = vperm.xlu0 %47, %v41
    %v49 = vpop.permute.xlu0 %48
    %vm50 = vcmp.eq.s32.totalorder %v43, %v46
    %vm51 = vcmp.eq.s32.totalorder %v43, %v49
    %v52 = vsel %vm50, 1.0, 0.0
    %v53 = vsel %vm51, 1.0, 0.0
    %v54 = vpack.c.bf16 %v53, %v52
    %v55 = vld [vmem:[%s3] sm:$0xf]
    %v56 = vld [vmem:[%s3 + $0x4] sm:$0xf]
    %v57 = vld [vmem:[%s3 + $0x8] sm:$0xf]
    %v58 = vld [vmem:[%s3 + $0xc] sm:$0xf]
    %v59 = vld [vmem:[%s3 + $0x10] sm:$0xf]
    %v60 = vld [vmem:[%s3 + $0x14] sm:$0xf]
    %v61 = vld [vmem:[%s3 + $0x18] sm:$0xf]
    %v62 = vld [vmem:[%s3 + $0x1c] sm:$0xf]
    %v63 = vld [vmem:[%s3 + $0x20] sm:$0xf]
    %v64 = vld [vmem:[%s3 + $0x24] sm:$0xf]
    %v65 = vld [vmem:[%s3 + $0x28] sm:$0xf]
    %v66 = vld [vmem:[%s3 + $0x2c] sm:$0xf]
    %v67 = vld [vmem:[%s3 + $0x30] sm:$0xf]
    %v68 = vld [vmem:[%s3 + $0x34] sm:$0xf]
    %v69 = vld [vmem:[%s3 + $0x38] sm:$0xf]
    %v70 = vld [vmem:[%s3 + $0x3c] sm:$0xf]
    %v87 = vunpack.c.l.b16 %v55
    %v88 = vunpack.c.l.b16 %v56
    %v89 = vunpack.c.l.b16 %v57
    %v90 = vunpack.c.l.b16 %v58
    %v91 = vunpack.c.l.b16 %v59
    %v92 = vunpack.c.l.b16 %v60
    %v93 = vunpack.c.l.b16 %v61
    %v94 = vunpack.c.l.b16 %v62
    %v95 = vunpack.c.l.b16 %v63
    %v96 = vunpack.c.l.b16 %v64
    %v97 = vunpack.c.l.b16 %v65
    %v98 = vunpack.c.l.b16 %v66
    %v99 = vunpack.c.l.b16 %v67
    %v100 = vunpack.c.l.b16 %v68
    %v101 = vunpack.c.l.b16 %v69
    %v102 = vunpack.c.l.b16 %v70
    %v103 = vpack.c.b16 %v88, %v87
    %v104 = vpack.c.b16 %v90, %v89
    %v105 = vpack.c.b16 %v92, %v91
    %v106 = vpack.c.b16 %v94, %v93
    %v107 = vpack.c.b16 %v96, %v95
    %v108 = vpack.c.b16 %v98, %v97
    %v109 = vpack.c.b16 %v100, %v99
    %v110 = vpack.c.b16 %v102, %v101
    %119 = vmatprep.subr.bf16.mxu0 0
    %120 = vmatpush1.bf16.msra.mxu0 %v103
    %121 = vmatprep.subr.bf16.mxu0 0
    %122 = vmatpush1.bf16.msra.mxu0 %v104
    %123 = vmatprep.subr.bf16.mxu0 0
    %124 = vmatpush1.bf16.msra.mxu0 %v105
    %125 = vmatprep.subr.bf16.mxu0 0
    %126 = vmatpush1.bf16.msra.mxu0 %v106
    %127 = vmatprep.subr.bf16.mxu0 0
    %128 = vmatpush1.bf16.msra.mxu0 %v107
    %129 = vmatprep.subr.bf16.mxu0 0
    %130 = vmatpush1.bf16.msra.mxu0 %v108
    %131 = vmatprep.subr.bf16.mxu0 0
    %132 = vmatpush1.bf16.msra.mxu0 %v109
    %133 = vmatprep.subr.bf16.mxu0 0
    %134 = vmatpush1.bf16.msra.mxu0 %v110
    %135 = vmatprep.subr.bf16.mxu0 0
    %136 = vmatpush1.bf16.msra.mxu0 0
    %137 = vmatprep.subr.bf16.mxu0 0
    %138 = vmatpush1.bf16.msra.mxu0 0
    %139 = vmatprep.subr.bf16.mxu0 0
    %140 = vmatpush1.bf16.msra.mxu0 0
    %141 = vmatprep.subr.bf16.mxu0 0
    %142 = vmatpush1.bf16.msra.mxu0 0
    %143 = vmatprep.subr.bf16.mxu0 0
    %144 = vmatpush1.bf16.msra.mxu0 0
    %145 = vmatprep.subr.bf16.mxu0 0
    %146 = vmatpush1.bf16.msra.mxu0 0
    %147 = vmatprep.subr.bf16.mxu0 0
    %148 = vmatpush1.bf16.msra.mxu0 0
    %149 = vmatprep.subr.bf16.mxu0 0
    %150 = vmatpush1.bf16.msra.mxu0 0
    %151 = vmatprep.mubr.bf16.mxu0 0
    %152 = vmatmul.mubr.bf16.gmra.mrb[0].mxu0 %v54
    %v153 = vpop.f32.mrb[0].mxu0
    %v154 = vadd.f32 0.0, %v153
    %v155 = vpop.f32.mrb[0].mxu0
    %v156 = vpop.f32.mrb[0].mxu0
    %v157 = vadd.f32 0.0, %v156
    %v158 = vpop.f32.mrb[0].mxu0
    %159 = vdwg.mxu0
    %v160 = vmul.f32 %v154, 8.0
    %v161 = vmul.f32 %v157, 8.0
    %v162 = vld [vmem:[%s2] sm:$0xff]
    %v163 = vadd.f32 %v160, %v162
    %v164 = vadd.f32 %v161, %v162
    %v165 = vld [vmem:[%s1] sm:$0x3]
    %vm166 = vcmp.ne.s32.totalorder %v165, 0
    %v167 = vsel %vm166, 0.0, -1e+09
    %v170 = vunpack.c.l.s4 1966171168
    %v171 = vunpack.c.0.s8 %v170
    %v172 = vlaneseq
    %v173 = vshrl.u32 %v172, 7
    %v174 = vsub.s32 %v171, %v173
    %v175 = vrot.slane %v167, %v174
    %v176 = vcombine.high %v175, %v175
    %v178 = vunpack.c.l.s4 1966171168
    %v179 = vunpack.c.0.s8 %v178
    %v180 = vlaneseq
    %v181 = vshrl.u32 %v180, 7
    %v182 = vsub.s32 %v179, %v181
    %v183 = vrot.slane %v175, %v182
    %v185 = vunpack.c.l.s4 1966171168
    %v186 = vunpack.c.0.s8 %v185
    %v187 = vlaneseq
    %v188 = vshrl.u32 %v187, 7
    %v189 = vsub.s32 %v186, %v188
    %v190 = vrot.slane %v176, %v189
    %v191 = vlaneseq
    %v192 = vshrl.u32 %v191, 7
    %v193 = vsub.s32 0, %v192
    %v194 = vrot.slane %v183, %v193
    %v195 = vlaneseq
    %v196 = vshrl.u32 %v195, 7
    %v197 = vsub.s32 0, %v196
    %v198 = vrot.slane %v190, %v197
    %v201 = vld [vmem:[%s8] sm:$0xff]
    %v202 = vld [vmem:[%s8 + $0x8] sm:$0xff]
    %v203 = vld [vmem:[%s5] sm:$0xf]
    %v204 = vld [vmem:[%s5 + $0x4] sm:$0xf]
    %v205 = vld [vmem:[%s5 + $0x8] sm:$0xf]
    %v206 = vld [vmem:[%s5 + $0xc] sm:$0xf]
    %v207 = vld [vmem:[%s5 + $0x10] sm:$0xf]
    %v208 = vld [vmem:[%s5 + $0x14] sm:$0xf]
    %v209 = vld [vmem:[%s5 + $0x18] sm:$0xf]
    %v210 = vld [vmem:[%s5 + $0x1c] sm:$0xf]
    %v211 = vpack.c.bf16 %v164, %v163
    %v212 = vld [vmem:[%s4] sm:$0xff]
    %v213 = vld [vmem:[%s4 + $0x8] sm:$0xff]
    %v214 = vld [vmem:[%s4 + $0x10] sm:$0xff]
    %v215 = vld [vmem:[%s4 + $0x18] sm:$0xff]
    %v216 = vld [vmem:[%s4 + $0x20] sm:$0xff]
    %v217 = vld [vmem:[%s4 + $0x28] sm:$0xff]
    %v218 = vld [vmem:[%s4 + $0x30] sm:$0xff]
    %v219 = vld [vmem:[%s4 + $0x38] sm:$0xff]
    %v220 = vlaneseq
    %v221 = vshrl.u32 %v220, 7
    %v222 = vsub.s32 0, %v221
    %v223 = vrot.slane %v201, %v222
    %v224 = vlaneseq
    %v225 = vshrl.u32 %v224, 7
    %v226 = vsub.s32 0, %v225
    %v227 = vrot.slane %v202, %v226
    %v236 = vunpack.c.l.b16 %v212
    %v237 = vunpack.c.h.b16 %v212
    %v238 = vunpack.c.l.b16 %v213
    %v239 = vunpack.c.h.b16 %v213
    %v240 = vunpack.c.l.b16 %v214
    %v241 = vunpack.c.h.b16 %v214
    %v242 = vunpack.c.l.b16 %v215
    %v243 = vunpack.c.h.b16 %v215
    %v244 = vunpack.c.l.b16 %v216
    %v245 = vunpack.c.h.b16 %v216
    %v246 = vunpack.c.l.b16 %v217
    %v247 = vunpack.c.h.b16 %v217
    %v248 = vunpack.c.l.b16 %v218
    %v249 = vunpack.c.h.b16 %v218
    %v250 = vunpack.c.l.b16 %v219
    %v251 = vunpack.c.h.b16 %v219
    %v252 = vpack.c.b16 %v238, %v236
    %v253 = vpack.c.b16 %v239, %v237
    %v254 = vpack.c.b16 %v242, %v240
    %v255 = vpack.c.b16 %v243, %v241
    %v256 = vpack.c.b16 %v246, %v244
    %v257 = vpack.c.b16 %v247, %v245
    %v258 = vpack.c.b16 %v250, %v248
    %v259 = vpack.c.b16 %v251, %v249
    %vm268 = vcmask 523264
    %v270 = vsel %vm268, %v211, 0
    %272 = vmatprep.subr.bf16.mxu0 %v253
    %273 = vmatpush1.bf16.msra.mxu0 %v252
    %274 = vmatprep.subr.bf16.mxu0 %v255
    %275 = vmatpush1.bf16.msra.mxu0 %v254
    %276 = vmatprep.subr.bf16.mxu0 %v257
    %277 = vmatpush1.bf16.msra.mxu0 %v256
    %278 = vmatprep.subr.bf16.mxu0 %v259
    %279 = vmatpush1.bf16.msra.mxu0 %v258
    %280 = vmatprep.subr.bf16.mxu0 0
    %281 = vmatpush1.bf16.msra.mxu0 0
    %282 = vmatprep.subr.bf16.mxu0 0
    %283 = vmatpush1.bf16.msra.mxu0 0
    %284 = vmatprep.subr.bf16.mxu0 0
    %285 = vmatpush1.bf16.msra.mxu0 0
    %286 = vmatprep.subr.bf16.mxu0 0
    %287 = vmatpush1.bf16.msra.mxu0 0
    %288 = vmatprep.subr.bf16.mxu0 0
    %289 = vmatpush1.bf16.msra.mxu0 0
    %290 = vmatprep.subr.bf16.mxu0 0
    %291 = vmatpush1.bf16.msra.mxu0 0
    %292 = vmatprep.subr.bf16.mxu0 0
    %293 = vmatpush1.bf16.msra.mxu0 0
    %294 = vmatprep.subr.bf16.mxu0 0
    %295 = vmatpush1.bf16.msra.mxu0 0
    %296 = vmatprep.subr.bf16.mxu0 0
    %297 = vmatpush1.bf16.msra.mxu0 0
    %298 = vmatprep.subr.bf16.mxu0 0
    %299 = vmatpush1.bf16.msra.mxu0 0
    %300 = vmatprep.subr.bf16.mxu0 0
    %301 = vmatpush1.bf16.msra.mxu0 0
    %302 = vmatprep.subr.bf16.mxu0 0
    %303 = vmatpush1.bf16.msra.mxu0 0
    %304 = vmatprep.mubr.bf16.mxu0 0
    %305 = vmatmul.mubr.bf16.gmra.mrb[0].mxu0 %v270
    %v306 = vpop.f32.mrb[0].mxu0
    %v307 = vadd.f32 %v223, %v306
    %v308 = vpop.f32.mrb[0].mxu0
    %v309 = vadd.f32 %v227, %v308
    %v310 = vpop.f32.mrb[0].mxu0
    %v311 = vadd.f32 %v223, %v310
    %v312 = vpop.f32.mrb[0].mxu0
    %v313 = vadd.f32 %v227, %v312
    %314 = vdwg.mxu0
    %v315 = vmul.f32 %v307, 0.25
    %v316 = vmul.f32 %v311, 0.25
    %v317 = vpack.c.bf16 %v315, %v315
    %v318 = vpack.c.bf16 %v316, %v316
    %v319 = vpack.c.bf16 %v307, %v307
    %v320 = vpack.c.bf16 %v311, %v311
    %v321 = vpack.c.bf16 %v309, %v309
    %v322 = vpack.c.bf16 %v313, %v313
    %324 = vrot.lane.b32.xlu0 %v319, 64
    %v325 = vpop.permute.xlu0 %324
    %vm326 = vcmask 130048
    %v328 = vsel %vm326, %v317, 0
    %v331 = vsel %vm326, %v325, 0
    %333 = vmatprep.subr.bf16.mxu0 0
    %334 = vmatpush1.bf16.xpose.msra.mxu0 %v331
    %335 = vmatprep.subr.bf16.mxu0 0
    %336 = vmatpush1.bf16.xpose.msra.mxu0 0
    %337 = vmatprep.subr.bf16.mxu0 0
    %338 = vmatpush1.bf16.xpose.msra.mxu0 0
    %339 = vmatprep.subr.bf16.mxu0 0
    %340 = vmatpush1.bf16.xpose.msra.mxu0 0
    %341 = vmatprep.subr.bf16.mxu0 0
    %342 = vmatpush1.bf16.xpose.msra.mxu0 0
    %343 = vmatprep.subr.bf16.mxu0 0
    %344 = vmatpush1.bf16.xpose.msra.mxu0 0
    %345 = vmatprep.subr.bf16.mxu0 0
    %346 = vmatpush1.bf16.xpose.msra.mxu0 0
    %347 = vmatprep.subr.bf16.mxu0 0
    %348 = vmatpush1.bf16.xpose.msra.mxu0 0
    %349 = vmatprep.subr.bf16.mxu0 0
    %350 = vmatpush1.bf16.xpose.msra.mxu0 0
    %351 = vmatprep.subr.bf16.mxu0 0
    %352 = vmatpush1.bf16.xpose.msra.mxu0 0
    %353 = vmatprep.subr.bf16.mxu0 0
    %354 = vmatpush1.bf16.xpose.msra.mxu0 0
    %355 = vmatprep.subr.bf16.mxu0 0
    %356 = vmatpush1.bf16.xpose.msra.mxu0 0
    %357 = vmatprep.subr.bf16.mxu0 0
    %358 = vmatpush1.bf16.xpose.msra.mxu0 0
    %359 = vmatprep.subr.bf16.mxu0 0
    %360 = vmatpush1.bf16.xpose.msra.mxu0 0
    %361 = vmatprep.subr.bf16.mxu0 0
    %362 = vmatpush1.bf16.xpose.msra.mxu0 0
    %363 = vmatprep.subr.bf16.mxu0 0
    %364 = vmatpush1.bf16.xpose.msra.mxu0 0
    %365 = vmatprep.mubr.bf16.mxu0 0
    %366 = vmatmul.mubr.bf16.gmra.mrb[0].mxu0 %v328
    %v367 = vpop.f32.mrb[0].mxu0
    %v368 = vadd.f32 %v194, %v367
    %v369 = vpop.f32.mrb[0].mxu0
    %v370 = vpop.f32.mrb[0].mxu0
    %v371 = vpop.f32.mrb[0].mxu0
    %372 = vdwg.mxu0
    %374 = vrot.lane.b32.xlu0 %v320, 64
    %v375 = vpop.permute.xlu0 %374
    %v377 = vsel %vm326, %v318, 0
    %v380 = vsel %vm326, %v375, 0
    %382 = vmatprep.subr.bf16.mxu0 0
    %383 = vmatpush1.bf16.xpose.msra.mxu0 %v380
    %384 = vmatprep.subr.bf16.mxu0 0
    %385 = vmatpush1.bf16.xpose.msra.mxu0 0
    %386 = vmatprep.subr.bf16.mxu0 0
    %387 = vmatpush1.bf16.xpose.msra.mxu0 0
    %388 = vmatprep.subr.bf16.mxu0 0
    %389 = vmatpush1.bf16.xpose.msra.mxu0 0
    %390 = vmatprep.subr.bf16.mxu0 0
    %391 = vmatpush1.bf16.xpose.msra.mxu0 0
    %392 = vmatprep.subr.bf16.mxu0 0
    %393 = vmatpush1.bf16.xpose.msra.mxu0 0
    %394 = vmatprep.subr.bf16.mxu0 0
    %395 = vmatpush1.bf16.xpose.msra.mxu0 0
    %396 = vmatprep.subr.bf16.mxu0 0
    %397 = vmatpush1.bf16.xpose.msra.mxu0 0
    %398 = vmatprep.subr.bf16.mxu0 0
    %399 = vmatpush1.bf16.xpose.msra.mxu0 0
    %400 = vmatprep.subr.bf16.mxu0 0
    %401 = vmatpush1.bf16.xpose.msra.mxu0 0
    %402 = vmatprep.subr.bf16.mxu0 0
    %403 = vmatpush1.bf16.xpose.msra.mxu0 0
    %404 = vmatprep.subr.bf16.mxu0 0
    %405 = vmatpush1.bf16.xpose.msra.mxu0 0
    %406 = vmatprep.subr.bf16.mxu0 0
    %407 = vmatpush1.bf16.xpose.msra.mxu0 0
    %408 = vmatprep.subr.bf16.mxu0 0
    %409 = vmatpush1.bf16.xpose.msra.mxu0 0
    %410 = vmatprep.subr.bf16.mxu0 0
    %411 = vmatpush1.bf16.xpose.msra.mxu0 0
    %412 = vmatprep.subr.bf16.mxu0 0
    %413 = vmatpush1.bf16.xpose.msra.mxu0 0
    %414 = vmatprep.mubr.bf16.mxu0 0
    %415 = vmatmul.mubr.bf16.gmra.mrb[0].mxu0 %v377
    %v416 = vpop.f32.mrb[0].mxu0
    %v417 = vadd.f32 %v198, %v416
    %v418 = vpop.f32.mrb[0].mxu0
    %v419 = vpop.f32.mrb[0].mxu0
    %v420 = vpop.f32.mrb[0].mxu0
    %421 = vdwg.mxu0
    %vm422 = vcmask 64512
    %v423 = vsel %vm422, %v368, -inf
    %424 = vmax.xlane.f32.xlu0 %v423
    %v425 = vpop.xlane.xlu0 %424
    %v426 = vsel %vm422, %v417, -inf
    %427 = vmax.xlane.f32.xlu0 %v426
    %v428 = vpop.xlane.xlu0 %427
    %v429 = vsub.f32 %v368, %v425
    %v430 = vsub.f32 %v417, %v428
    %v431 = vmul.f32 %v429, 1.442695
    %v432 = vpow.pop %v431
    %v433 = vmul.f32 %v430, 1.442695
    %v434 = vpow.pop %v433
    %v435 = vsel %vm422, %v432, 0.0
    %436 = vadd.xlane.f32.xlu0 %v435
    %v437 = vpop.xlane.xlu0 %436
    %v438 = vsel %vm422, %v434, 0.0
    %439 = vadd.xlane.f32.xlu0 %v438
    %v440 = vpop.xlane.xlu0 %439
    %v441 = vrcp.pop %v437
    %v442 = vrcp.pop %v440
    %v443 = vmul.f32 %v432, %v441
    %v444 = vmul.f32 %v434, %v442
    %v445 = vpack.c.bf16 %v443, %v443
    %v446 = vpack.c.bf16 %v444, %v444
    %v448 = vsel %vm422, %v445, 0
    %vm450 = vcmask 1043456
    %v452 = vsel %vm450, %v321, 0
    %454 = vmatprep.subr.bf16.mxu0 0
    %455 = vmatpush1.bf16.msra.mxu0 %v452
    %456 = vmatprep.subr.bf16.mxu0 0
    %457 = vmatpush1.bf16.msra.mxu0 0
    %458 = vmatprep.subr.bf16.mxu0 0
    %459 = vmatpush1.bf16.msra.mxu0 0
    %460 = vmatprep.subr.bf16.mxu0 0
    %461 = vmatpush1.bf16.msra.mxu0 0
    %462 = vmatprep.subr.bf16.mxu0 0
    %463 = vmatpush1.bf16.msra.mxu0 0
    %464 = vmatprep.subr.bf16.mxu0 0
    %465 = vmatpush1.bf16.msra.mxu0 0
    %466 = vmatprep.subr.bf16.mxu0 0
    %467 = vmatpush1.bf16.msra.mxu0 0
    %468 = vmatprep.subr.bf16.mxu0 0
    %469 = vmatpush1.bf16.msra.mxu0 0
    %470 = vmatprep.subr.bf16.mxu0 0
    %471 = vmatpush1.bf16.msra.mxu0 0
    %472 = vmatprep.subr.bf16.mxu0 0
    %473 = vmatpush1.bf16.msra.mxu0 0
    %474 = vmatprep.subr.bf16.mxu0 0
    %475 = vmatpush1.bf16.msra.mxu0 0
    %476 = vmatprep.subr.bf16.mxu0 0
    %477 = vmatpush1.bf16.msra.mxu0 0
    %478 = vmatprep.subr.bf16.mxu0 0
    %479 = vmatpush1.bf16.msra.mxu0 0
    %480 = vmatprep.subr.bf16.mxu0 0
    %481 = vmatpush1.bf16.msra.mxu0 0
    %482 = vmatprep.subr.bf16.mxu0 0
    %483 = vmatpush1.bf16.msra.mxu0 0
    %484 = vmatprep.subr.bf16.mxu0 0
    %485 = vmatpush1.bf16.msra.mxu0 0
    %486 = vmatprep.mubr.bf16.mxu0 0
    %487 = vmatmul.mubr.bf16.gmra.mrb[0].mxu0 %v448
    %v488 = vpop.f32.mrb[0].mxu0
    %v489 = vadd.f32 0.0, %v488
    %v490 = vpop.f32.mrb[0].mxu0
    %v491 = vpop.f32.mrb[0].mxu0
    %v492 = vpop.f32.mrb[0].mxu0
    %493 = vdwg.mxu0
    %v495 = vsel %vm422, %v446, 0
    %v498 = vsel %vm450, %v322, 0
    %500 = vmatprep.subr.bf16.mxu0 0
    %501 = vmatpush1.bf16.msra.mxu0 %v498
    %502 = vmatprep.subr.bf16.mxu0 0
    %503 = vmatpush1.bf16.msra.mxu0 0
    %504 = vmatprep.subr.bf16.mxu0 0
    %505 = vmatpush1.bf16.msra.mxu0 0
    %506 = vmatprep.subr.bf16.mxu0 0
    %507 = vmatpush1.bf16.msra.mxu0 0
    %508 = vmatprep.subr.bf16.mxu0 0
    %509 = vmatpush1.bf16.msra.mxu0 0
    %510 = vmatprep.subr.bf16.mxu0 0
    %511 = vmatpush1.bf16.msra.mxu0 0
    %512 = vmatprep.subr.bf16.mxu0 0
    %513 = vmatpush1.bf16.msra.mxu0 0
    %514 = vmatprep.subr.bf16.mxu0 0
    %515 = vmatpush1.bf16.msra.mxu0 0
    %516 = vmatprep.subr.bf16.mxu0 0
    %517 = vmatpush1.bf16.msra.mxu0 0
    %518 = vmatprep.subr.bf16.mxu0 0
    %519 = vmatpush1.bf16.msra.mxu0 0
    %520 = vmatprep.subr.bf16.mxu0 0
    %521 = vmatpush1.bf16.msra.mxu0 0
    %522 = vmatprep.subr.bf16.mxu0 0
    %523 = vmatpush1.bf16.msra.mxu0 0
    %524 = vmatprep.subr.bf16.mxu0 0
    %525 = vmatpush1.bf16.msra.mxu0 0
    %526 = vmatprep.subr.bf16.mxu0 0
    %527 = vmatpush1.bf16.msra.mxu0 0
    %528 = vmatprep.subr.bf16.mxu0 0
    %529 = vmatpush1.bf16.msra.mxu0 0
    %530 = vmatprep.subr.bf16.mxu0 0
    %531 = vmatpush1.bf16.msra.mxu0 0
    %532 = vmatprep.mubr.bf16.mxu0 0
    %533 = vmatmul.mubr.bf16.gmra.mrb[0].mxu0 %v495
    %v534 = vpop.f32.mrb[0].mxu0
    %v535 = vadd.f32 0.0, %v534
    %v536 = vpop.f32.mrb[0].mxu0
    %v537 = vpop.f32.mrb[0].mxu0
    %v538 = vpop.f32.mrb[0].mxu0
    %539 = vdwg.mxu0
    %v540 = vpack.c.bf16 %v535, %v489
    %542 = vrot.lane.b32.xlu0 %v317, 112
    %v543 = vpop.permute.xlu0 %542
    %544 = vrot.lane.b32.xlu0 %v319, 48
    %v545 = vpop.permute.xlu0 %544
    %v547 = vsel %vm326, %v543, 0
    %v550 = vsel %vm326, %v545, 0
    %552 = vmatprep.subr.bf16.mxu0 0
    %553 = vmatpush1.bf16.xpose.msra.mxu0 %v550
    %554 = vmatprep.subr.bf16.mxu0 0
    %555 = vmatpush1.bf16.xpose.msra.mxu0 0
    %556 = vmatprep.subr.bf16.mxu0 0
    %557 = vmatpush1.bf16.xpose.msra.mxu0 0
    %558 = vmatprep.subr.bf16.mxu0 0
    %559 = vmatpush1.bf16.xpose.msra.mxu0 0
    %560 = vmatprep.subr.bf16.mxu0 0
    %561 = vmatpush1.bf16.xpose.msra.mxu0 0
    %562 = vmatprep.subr.bf16.mxu0 0
    %563 = vmatpush1.bf16.xpose.msra.mxu0 0
    %564 = vmatprep.subr.bf16.mxu0 0
    %565 = vmatpush1.bf16.xpose.msra.mxu0 0
    %566 = vmatprep.subr.bf16.mxu0 0
    %567 = vmatpush1.bf16.xpose.msra.mxu0 0
    %568 = vmatprep.subr.bf16.mxu0 0
    %569 = vmatpush1.bf16.xpose.msra.mxu0 0
    %570 = vmatprep.subr.bf16.mxu0 0
    %571 = vmatpush1.bf16.xpose.msra.mxu0 0
    %572 = vmatprep.subr.bf16.mxu0 0
    %573 = vmatpush1.bf16.xpose.msra.mxu0 0
    %574 = vmatprep.subr.bf16.mxu0 0
    %575 = vmatpush1.bf16.xpose.msra.mxu0 0
    %576 = vmatprep.subr.bf16.mxu0 0
    %577 = vmatpush1.bf16.xpose.msra.mxu0 0
    %578 = vmatprep.subr.bf16.mxu0 0
    %579 = vmatpush1.bf16.xpose.msra.mxu0 0
    %580 = vmatprep.subr.bf16.mxu0 0
    %581 = vmatpush1.bf16.xpose.msra.mxu0 0
    %582 = vmatprep.subr.bf16.mxu0 0
    %583 = vmatpush1.bf16.xpose.msra.mxu0 0
    %584 = vmatprep.mubr.bf16.mxu0 0
    %585 = vmatmul.mubr.bf16.gmra.mrb[0].mxu0 %v547
    %v586 = vpop.f32.mrb[0].mxu0
    %v587 = vadd.f32 %v194, %v586
    %v588 = vpop.f32.mrb[0].mxu0
    %v589 = vpop.f32.mrb[0].mxu0
    %v590 = vpop.f32.mrb[0].mxu0
    %591 = vdwg.mxu0
    %593 = vrot.lane.b32.xlu0 %v318, 112
    %v594 = vpop.permute.xlu0 %593
    %595 = vrot.lane.b32.xlu0 %v320, 48
    %v596 = vpop.permute.xlu0 %595
    %v598 = vsel %vm326, %v594, 0
    %v601 = vsel %vm326, %v596, 0
    %603 = vmatprep.subr.bf16.mxu0 0
    %604 = vmatpush1.bf16.xpose.msra.mxu0 %v601
    %605 = vmatprep.subr.bf16.mxu0 0
    %606 = vmatpush1.bf16.xpose.msra.mxu0 0
    %607 = vmatprep.subr.bf16.mxu0 0
    %608 = vmatpush1.bf16.xpose.msra.mxu0 0
    %609 = vmatprep.subr.bf16.mxu0 0
    %610 = vmatpush1.bf16.xpose.msra.mxu0 0
    %611 = vmatprep.subr.bf16.mxu0 0
    %612 = vmatpush1.bf16.xpose.msra.mxu0 0
    %613 = vmatprep.subr.bf16.mxu0 0
    %614 = vmatpush1.bf16.xpose.msra.mxu0 0
    %615 = vmatprep.subr.bf16.mxu0 0
    %616 = vmatpush1.bf16.xpose.msra.mxu0 0
    %617 = vmatprep.subr.bf16.mxu0 0
    %618 = vmatpush1.bf16.xpose.msra.mxu0 0
    %619 = vmatprep.subr.bf16.mxu0 0
    %620 = vmatpush1.bf16.xpose.msra.mxu0 0
    %621 = vmatprep.subr.bf16.mxu0 0
    %622 = vmatpush1.bf16.xpose.msra.mxu0 0
    %623 = vmatprep.subr.bf16.mxu0 0
    %624 = vmatpush1.bf16.xpose.msra.mxu0 0
    %625 = vmatprep.subr.bf16.mxu0 0
    %626 = vmatpush1.bf16.xpose.msra.mxu0 0
    %627 = vmatprep.subr.bf16.mxu0 0
    %628 = vmatpush1.bf16.xpose.msra.mxu0 0
    %629 = vmatprep.subr.bf16.mxu0 0
    %630 = vmatpush1.bf16.xpose.msra.mxu0 0
    %631 = vmatprep.subr.bf16.mxu0 0
    %632 = vmatpush1.bf16.xpose.msra.mxu0 0
    %633 = vmatprep.subr.bf16.mxu0 0
    %634 = vmatpush1.bf16.xpose.msra.mxu0 0
    %635 = vmatprep.mubr.bf16.mxu0 0
    %636 = vmatmul.mubr.bf16.gmra.mrb[0].mxu0 %v598
    %v637 = vpop.f32.mrb[0].mxu0
    %v638 = vadd.f32 %v198, %v637
    %v639 = vpop.f32.mrb[0].mxu0
    %v640 = vpop.f32.mrb[0].mxu0
    %v641 = vpop.f32.mrb[0].mxu0
    %642 = vdwg.mxu0
    %v643 = vsel %vm422, %v587, -inf
    %644 = vmax.xlane.f32.xlu0 %v643
    %v645 = vpop.xlane.xlu0 %644
    %v646 = vsel %vm422, %v638, -inf
    %647 = vmax.xlane.f32.xlu0 %v646
    %v648 = vpop.xlane.xlu0 %647
    %v649 = vsub.f32 %v587, %v645
    %v650 = vsub.f32 %v638, %v648
    %v651 = vmul.f32 %v649, 1.442695
    %v652 = vpow.pop %v651
    %v653 = vmul.f32 %v650, 1.442695
    %v654 = vpow.pop %v653
    %v655 = vsel %vm422, %v652, 0.0
    %656 = vadd.xlane.f32.xlu0 %v655
    %v657 = vpop.xlane.xlu0 %656
    %v658 = vsel %vm422, %v654, 0.0
    %659 = vadd.xlane.f32.xlu0 %v658
    %v660 = vpop.xlane.xlu0 %659
    %v661 = vrcp.pop %v657
    %v662 = vrcp.pop %v660
    %v663 = vmul.f32 %v652, %v661
    %v664 = vmul.f32 %v654, %v662
    %v665 = vpack.c.bf16 %v663, %v663
    %v666 = vpack.c.bf16 %v664, %v664
    %668 = vrot.lane.b32.xlu0 %v321, 112
    %v669 = vpop.permute.xlu0 %668
    %v671 = vsel %vm422, %v665, 0
    %v674 = vsel %vm450, %v669, 0
    %676 = vmatprep.subr.bf16.mxu0 0
    %677 = vmatpush1.bf16.msra.mxu0 %v674
    %678 = vmatprep.subr.bf16.mxu0 0
    %679 = vmatpush1.bf16.msra.mxu0 0
    %680 = vmatprep.subr.bf16.mxu0 0
    %681 = vmatpush1.bf16.msra.mxu0 0
    %682 = vmatprep.subr.bf16.mxu0 0
    %683 = vmatpush1.bf16.msra.mxu0 0
    %684 = vmatprep.subr.bf16.mxu0 0
    %685 = vmatpush1.bf16.msra.mxu0 0
    %686 = vmatprep.subr.bf16.mxu0 0
    %687 = vmatpush1.bf16.msra.mxu0 0
    %688 = vmatprep.subr.bf16.mxu0 0
    %689 = vmatpush1.bf16.msra.mxu0 0
    %690 = vmatprep.subr.bf16.mxu0 0
    %691 = vmatpush1.bf16.msra.mxu0 0
    %692 = vmatprep.subr.bf16.mxu0 0
    %693 = vmatpush1.bf16.msra.mxu0 0
    %694 = vmatprep.subr.bf16.mxu0 0
    %695 = vmatpush1.bf16.msra.mxu0 0
    %696 = vmatprep.subr.bf16.mxu0 0
    %697 = vmatpush1.bf16.msra.mxu0 0
    %698 = vmatprep.subr.bf16.mxu0 0
    %699 = vmatpush1.bf16.msra.mxu0 0
    %700 = vmatprep.subr.bf16.mxu0 0
    %701 = vmatpush1.bf16.msra.mxu0 0
    %702 = vmatprep.subr.bf16.mxu0 0
    %703 = vmatpush1.bf16.msra.mxu0 0
    %704 = vmatprep.subr.bf16.mxu0 0
    %705 = vmatpush1.bf16.msra.mxu0 0
    %706 = vmatprep.subr.bf16.mxu0 0
    %707 = vmatpush1.bf16.msra.mxu0 0
    %708 = vmatprep.mubr.bf16.mxu0 0
    %709 = vmatmul.mubr.bf16.gmra.mrb[0].mxu0 %v671
    %v710 = vpop.f32.mrb[0].mxu0
    %v711 = vadd.f32 0.0, %v710
    %v712 = vpop.f32.mrb[0].mxu0
    %v713 = vpop.f32.mrb[0].mxu0
    %v714 = vpop.f32.mrb[0].mxu0
    %715 = vdwg.mxu0
    %717 = vrot.lane.b32.xlu0 %v322, 112
    %v718 = vpop.permute.xlu0 %717
    %v720 = vsel %vm422, %v666, 0
    %v723 = vsel %vm450, %v718, 0
    %725 = vmatprep.subr.bf16.mxu0 0
    %726 = vmatpush1.bf16.msra.mxu0 %v723
    %727 = vmatprep.subr.bf16.mxu0 0
    %728 = vmatpush1.bf16.msra.mxu0 0
    %729 = vmatprep.subr.bf16.mxu0 0
    %730 = vmatpush1.bf16.msra.mxu0 0
    %731 = vmatprep.subr.bf16.mxu0 0
    %732 = vmatpush1.bf16.msra.mxu0 0
    %733 = vmatprep.subr.bf16.mxu0 0
    %734 = vmatpush1.bf16.msra.mxu0 0
    %735 = vmatprep.subr.bf16.mxu0 0
    %736 = vmatpush1.bf16.msra.mxu0 0
    %737 = vmatprep.subr.bf16.mxu0 0
    %738 = vmatpush1.bf16.msra.mxu0 0
    %739 = vmatprep.subr.bf16.mxu0 0
    %740 = vmatpush1.bf16.msra.mxu0 0
    %741 = vmatprep.subr.bf16.mxu0 0
    %742 = vmatpush1.bf16.msra.mxu0 0
    %743 = vmatprep.subr.bf16.mxu0 0
    %744 = vmatpush1.bf16.msra.mxu0 0
    %745 = vmatprep.subr.bf16.mxu0 0
    %746 = vmatpush1.bf16.msra.mxu0 0
    %747 = vmatprep.subr.bf16.mxu0 0
    %748 = vmatpush1.bf16.msra.mxu0 0
    %749 = vmatprep.subr.bf16.mxu0 0
    %750 = vmatpush1.bf16.msra.mxu0 0
    %751 = vmatprep.subr.bf16.mxu0 0
    %752 = vmatpush1.bf16.msra.mxu0 0
    %753 = vmatprep.subr.bf16.mxu0 0
    %754 = vmatpush1.bf16.msra.mxu0 0
    %755 = vmatprep.subr.bf16.mxu0 0
    %756 = vmatpush1.bf16.msra.mxu0 0
    %757 = vmatprep.mubr.bf16.mxu0 0
    %758 = vmatmul.mubr.bf16.gmra.mrb[0].mxu0 %v720
    %v759 = vpop.f32.mrb[0].mxu0
    %v760 = vadd.f32 0.0, %v759
    %v761 = vpop.f32.mrb[0].mxu0
    %v762 = vpop.f32.mrb[0].mxu0
    %v763 = vpop.f32.mrb[0].mxu0
    %764 = vdwg.mxu0
    %v765 = vpack.c.bf16 %v760, %v711
    %v768 = vunpack.c.l.b16 %v205
    %v769 = vunpack.c.l.b16 %v206
    %v770 = vpack.c.b16 %v769, %v768
    %v773 = vsel %vm326, %v765, 0
    %775 = vmatprep.subr.bf16.mxu0 0
    %776 = vmatpush1.bf16.msra.mxu0 %v770
    %777 = vmatprep.subr.bf16.mxu0 0
    %778 = vmatpush1.bf16.msra.mxu0 0
    %779 = vmatprep.subr.bf16.mxu0 0
    %780 = vmatpush1.bf16.msra.mxu0 0
    %781 = vmatprep.subr.bf16.mxu0 0
    %782 = vmatpush1.bf16.msra.mxu0 0
    %783 = vmatprep.subr.bf16.mxu0 0
    %784 = vmatpush1.bf16.msra.mxu0 0
    %785 = vmatprep.subr.bf16.mxu0 0
    %786 = vmatpush1.bf16.msra.mxu0 0
    %787 = vmatprep.subr.bf16.mxu0 0
    %788 = vmatpush1.bf16.msra.mxu0 0
    %789 = vmatprep.subr.bf16.mxu0 0
    %790 = vmatpush1.bf16.msra.mxu0 0
    %791 = vmatprep.subr.bf16.mxu0 0
    %792 = vmatpush1.bf16.msra.mxu0 0
    %793 = vmatprep.subr.bf16.mxu0 0
    %794 = vmatpush1.bf16.msra.mxu0 0
    %795 = vmatprep.subr.bf16.mxu0 0
    %796 = vmatpush1.bf16.msra.mxu0 0
    %797 = vmatprep.subr.bf16.mxu0 0
    %798 = vmatpush1.bf16.msra.mxu0 0
    %799 = vmatprep.subr.bf16.mxu0 0
    %800 = vmatpush1.bf16.msra.mxu0 0
    %801 = vmatprep.subr.bf16.mxu0 0
    %802 = vmatpush1.bf16.msra.mxu0 0
    %803 = vmatprep.subr.bf16.mxu0 0
    %804 = vmatpush1.bf16.msra.mxu0 0
    %805 = vmatprep.subr.bf16.mxu0 0
    %806 = vmatpush1.bf16.msra.mxu0 0
    %807 = vmatprep.mubr.bf16.mxu0 0
    %808 = vmatmul.mubr.bf16.gmra.mrb[0].mxu0 %v773
    %v809 = vpop.f32.mrb[0].mxu0
    %v810 = vadd.f32 0.0, %v809
    %v811 = vpop.f32.mrb[0].mxu0
    %v812 = vpop.f32.mrb[0].mxu0
    %v813 = vadd.f32 0.0, %v812
    %v814 = vpop.f32.mrb[0].mxu0
    %815 = vdwg.mxu0
    %v818 = vunpack.c.l.b16 %v203
    %v819 = vunpack.c.l.b16 %v204
    %v820 = vpack.c.b16 %v819, %v818
    %v823 = vsel %vm326, %v540, 0
    %825 = vmatprep.subr.bf16.mxu0 0
    %826 = vmatpush1.bf16.msra.mxu0 %v820
    %827 = vmatprep.subr.bf16.mxu0 0
    %828 = vmatpush1.bf16.msra.mxu0 0
    %829 = vmatprep.subr.bf16.mxu0 0
    %830 = vmatpush1.bf16.msra.mxu0 0
    %831 = vmatprep.subr.bf16.mxu0 0
    %832 = vmatpush1.bf16.msra.mxu0 0
    %833 = vmatprep.subr.bf16.mxu0 0
    %834 = vmatpush1.bf16.msra.mxu0 0
    %835 = vmatprep.subr.bf16.mxu0 0
    %836 = vmatpush1.bf16.msra.mxu0 0
    %837 = vmatprep.subr.bf16.mxu0 0
    %838 = vmatpush1.bf16.msra.mxu0 0
    %839 = vmatprep.subr.bf16.mxu0 0
    %840 = vmatpush1.bf16.msra.mxu0 0
    %841 = vmatprep.subr.bf16.mxu0 0
    %842 = vmatpush1.bf16.msra.mxu0 0
    %843 = vmatprep.subr.bf16.mxu0 0
    %844 = vmatpush1.bf16.msra.mxu0 0
    %845 = vmatprep.subr.bf16.mxu0 0
    %846 = vmatpush1.bf16.msra.mxu0 0
    %847 = vmatprep.subr.bf16.mxu0 0
    %848 = vmatpush1.bf16.msra.mxu0 0
    %849 = vmatprep.subr.bf16.mxu0 0
    %850 = vmatpush1.bf16.msra.mxu0 0
    %851 = vmatprep.subr.bf16.mxu0 0
    %852 = vmatpush1.bf16.msra.mxu0 0
    %853 = vmatprep.subr.bf16.mxu0 0
    %854 = vmatpush1.bf16.msra.mxu0 0
    %855 = vmatprep.subr.bf16.mxu0 0
    %856 = vmatpush1.bf16.msra.mxu0 0
    %857 = vmatprep.mubr.bf16.mxu0 0
    %858 = vmatmul.mubr.bf16.gmra.mrb[0].mxu0 %v823
    %v859 = vpop.f32.mrb[0].mxu0
    %v860 = vadd.f32 %v810, %v859
    %v861 = vpop.f32.mrb[0].mxu0
    %v862 = vpop.f32.mrb[0].mxu0
    %v863 = vadd.f32 %v813, %v862
    %v864 = vpop.f32.mrb[0].mxu0
    %865 = vdwg.mxu0
    %866 = vrot.lane.b32.xlu0 %v317, 96
    %v867 = vpop.permute.xlu0 %866
    %868 = vrot.lane.b32.xlu0 %v319, 32
    %v869 = vpop.permute.xlu0 %868
    %v871 = vsel %vm326, %v867, 0
    %v874 = vsel %vm326, %v869, 0
    %876 = vmatprep.subr.bf16.mxu0 0
    %877 = vmatpush1.bf16.xpose.msra.mxu0 %v874
    %878 = vmatprep.subr.bf16.mxu0 0
    %879 = vmatpush1.bf16.xpose.msra.mxu0 0
    %880 = vmatprep.subr.bf16.mxu0 0
    %881 = vmatpush1.bf16.xpose.msra.mxu0 0
    %882 = vmatprep.subr.bf16.mxu0 0
    %883 = vmatpush1.bf16.xpose.msra.mxu0 0
    %884 = vmatprep.subr.bf16.mxu0 0
    %885 = vmatpush1.bf16.xpose.msra.mxu0 0
    %886 = vmatprep.subr.bf16.mxu0 0
    %887 = vmatpush1.bf16.xpose.msra.mxu0 0
    %888 = vmatprep.subr.bf16.mxu0 0
    %889 = vmatpush1.bf16.xpose.msra.mxu0 0
    %890 = vmatprep.subr.bf16.mxu0 0
    %891 = vmatpush1.bf16.xpose.msra.mxu0 0
    %892 = vmatprep.subr.bf16.mxu0 0
    %893 = vmatpush1.bf16.xpose.msra.mxu0 0
    %894 = vmatprep.subr.bf16.mxu0 0
    %895 = vmatpush1.bf16.xpose.msra.mxu0 0
    %896 = vmatprep.subr.bf16.mxu0 0
    %897 = vmatpush1.bf16.xpose.msra.mxu0 0
    %898 = vmatprep.subr.bf16.mxu0 0
    %899 = vmatpush1.bf16.xpose.msra.mxu0 0
    %900 = vmatprep.subr.bf16.mxu0 0
    %901 = vmatpush1.bf16.xpose.msra.mxu0 0
    %902 = vmatprep.subr.bf16.mxu0 0
    %903 = vmatpush1.bf16.xpose.msra.mxu0 0
    %904 = vmatprep.subr.bf16.mxu0 0
    %905 = vmatpush1.bf16.xpose.msra.mxu0 0
    %906 = vmatprep.subr.bf16.mxu0 0
    %907 = vmatpush1.bf16.xpose.msra.mxu0 0
    %908 = vmatprep.mubr.bf16.mxu0 0
    %909 = vmatmul.mubr.bf16.gmra.mrb[0].mxu0 %v871
    %v910 = vpop.f32.mrb[0].mxu0
    %v911 = vadd.f32 %v194, %v910
    %v912 = vpop.f32.mrb[0].mxu0
    %v913 = vpop.f32.mrb[0].mxu0
    %v914 = vpop.f32.mrb[0].mxu0
    %915 = vdwg.mxu0
    %916 = vrot.lane.b32.xlu0 %v318, 96
    %v917 = vpop.permute.xlu0 %916
    %918 = vrot.lane.b32.xlu0 %v320, 32
    %v919 = vpop.permute.xlu0 %918
    %v921 = vsel %vm326, %v917, 0
    %v924 = vsel %vm326, %v919, 0
    %926 = vmatprep.subr.bf16.mxu0 0
    %927 = vmatpush1.bf16.xpose.msra.mxu0 %v924
    %928 = vmatprep.subr.bf16.mxu0 0
    %929 = vmatpush1.bf16.xpose.msra.mxu0 0
    %930 = vmatprep.subr.bf16.mxu0 0
    %931 = vmatpush1.bf16.xpose.msra.mxu0 0
    %932 = vmatprep.subr.bf16.mxu0 0
    %933 = vmatpush1.bf16.xpose.msra.mxu0 0
    %934 = vmatprep.subr.bf16.mxu0 0
    %935 = vmatpush1.bf16.xpose.msra.mxu0 0
    %936 = vmatprep.subr.bf16.mxu0 0
    %937 = vmatpush1.bf16.xpose.msra.mxu0 0
    %938 = vmatprep.subr.bf16.mxu0 0
    %939 = vmatpush1.bf16.xpose.msra.mxu0 0
    %940 = vmatprep.subr.bf16.mxu0 0
    %941 = vmatpush1.bf16.xpose.msra.mxu0 0
    %942 = vmatprep.subr.bf16.mxu0 0
    %943 = vmatpush1.bf16.xpose.msra.mxu0 0
    %944 = vmatprep.subr.bf16.mxu0 0
    %945 = vmatpush1.bf16.xpose.msra.mxu0 0
    %946 = vmatprep.subr.bf16.mxu0 0
    %947 = vmatpush1.bf16.xpose.msra.mxu0 0
    %948 = vmatprep.subr.bf16.mxu0 0
    %949 = vmatpush1.bf16.xpose.msra.mxu0 0
    %950 = vmatprep.subr.bf16.mxu0 0
    %951 = vmatpush1.bf16.xpose.msra.mxu0 0
    %952 = vmatprep.subr.bf16.mxu0 0
    %953 = vmatpush1.bf16.xpose.msra.mxu0 0
    %954 = vmatprep.subr.bf16.mxu0 0
    %955 = vmatpush1.bf16.xpose.msra.mxu0 0
    %956 = vmatprep.subr.bf16.mxu0 0
    %957 = vmatpush1.bf16.xpose.msra.mxu0 0
    %958 = vmatprep.mubr.bf16.mxu0 0
    %959 = vmatmul.mubr.bf16.gmra.mrb[0].mxu0 %v921
    %v960 = vpop.f32.mrb[0].mxu0
    %v961 = vadd.f32 %v198, %v960
    %v962 = vpop.f32.mrb[0].mxu0
    %v963 = vpop.f32.mrb[0].mxu0
    %v964 = vpop.f32.mrb[0].mxu0
    %965 = vdwg.mxu0
    %v966 = vsel %vm422, %v911, -inf
    %967 = vmax.xlane.f32.xlu0 %v966
    %v968 = vpop.xlane.xlu0 %967
    %v969 = vsel %vm422, %v961, -inf
    %970 = vmax.xlane.f32.xlu0 %v969
    %v971 = vpop.xlane.xlu0 %970
    %v972 = vsub.f32 %v911, %v968
    %v973 = vsub.f32 %v961, %v971
    %v974 = vmul.f32 %v972, 1.442695
    %v975 = vpow.pop %v974
    %v976 = vmul.f32 %v973, 1.442695
    %v977 = vpow.pop %v976
    %v978 = vsel %vm422, %v975, 0.0
    %979 = vadd.xlane.f32.xlu0 %v978
    %v980 = vpop.xlane.xlu0 %979
    %v981 = vsel %vm422, %v977, 0.0
    %982 = vadd.xlane.f32.xlu0 %v981
    %v983 = vpop.xlane.xlu0 %982
    %v984 = vrcp.pop %v980
    %v985 = vrcp.pop %v983
    %v986 = vmul.f32 %v975, %v984
    %v987 = vmul.f32 %v977, %v985
    %v988 = vpack.c.bf16 %v986, %v986
    %v989 = vpack.c.bf16 %v987, %v987
    %990 = vrot.lane.b32.xlu0 %v321, 96
    %v991 = vpop.permute.xlu0 %990
    %v993 = vsel %vm422, %v988, 0
    %v996 = vsel %vm450, %v991, 0
    %998 = vmatprep.subr.bf16.mxu0 0
    %999 = vmatpush1.bf16.msra.mxu0 %v996
    %1000 = vmatprep.subr.bf16.mxu0 0
    %1001 = vmatpush1.bf16.msra.mxu0 0
    %1002 = vmatprep.subr.bf16.mxu0 0
    %1003 = vmatpush1.bf16.msra.mxu0 0
    %1004 = vmatprep.subr.bf16.mxu0 0
    %1005 = vmatpush1.bf16.msra.mxu0 0
    %1006 = vmatprep.subr.bf16.mxu0 0
    %1007 = vmatpush1.bf16.msra.mxu0 0
    %1008 = vmatprep.subr.bf16.mxu0 0
    %1009 = vmatpush1.bf16.msra.mxu0 0
    %1010 = vmatprep.subr.bf16.mxu0 0
    %1011 = vmatpush1.bf16.msra.mxu0 0
    %1012 = vmatprep.subr.bf16.mxu0 0
    %1013 = vmatpush1.bf16.msra.mxu0 0
    %1014 = vmatprep.subr.bf16.mxu0 0
    %1015 = vmatpush1.bf16.msra.mxu0 0
    %1016 = vmatprep.subr.bf16.mxu0 0
    %1017 = vmatpush1.bf16.msra.mxu0 0
    %1018 = vmatprep.subr.bf16.mxu0 0
    %1019 = vmatpush1.bf16.msra.mxu0 0
    %1020 = vmatprep.subr.bf16.mxu0 0
    %1021 = vmatpush1.bf16.msra.mxu0 0
    %1022 = vmatprep.subr.bf16.mxu0 0
    %1023 = vmatpush1.bf16.msra.mxu0 0
    %1024 = vmatprep.subr.bf16.mxu0 0
    %1025 = vmatpush1.bf16.msra.mxu0 0
    %1026 = vmatprep.subr.bf16.mxu0 0
    %1027 = vmatpush1.bf16.msra.mxu0 0
    %1028 = vmatprep.subr.bf16.mxu0 0
    %1029 = vmatpush1.bf16.msra.mxu0 0
    %1030 = vmatprep.mubr.bf16.mxu0 0
    %1031 = vmatmul.mubr.bf16.gmra.mrb[0].mxu0 %v993
    %v1032 = vpop.f32.mrb[0].mxu0
    %v1033 = vadd.f32 0.0, %v1032
    %v1034 = vpop.f32.mrb[0].mxu0
    %v1035 = vpop.f32.mrb[0].mxu0
    %v1036 = vpop.f32.mrb[0].mxu0
    %1037 = vdwg.mxu0
    %1038 = vrot.lane.b32.xlu0 %v322, 96
    %v1039 = vpop.permute.xlu0 %1038
    %v1041 = vsel %vm422, %v989, 0
    %v1044 = vsel %vm450, %v1039, 0
    %1046 = vmatprep.subr.bf16.mxu0 0
    %1047 = vmatpush1.bf16.msra.mxu0 %v1044
    %1048 = vmatprep.subr.bf16.mxu0 0
    %1049 = vmatpush1.bf16.msra.mxu0 0
    %1050 = vmatprep.subr.bf16.mxu0 0
    %1051 = vmatpush1.bf16.msra.mxu0 0
    %1052 = vmatprep.subr.bf16.mxu0 0
    %1053 = vmatpush1.bf16.msra.mxu0 0
    %1054 = vmatprep.subr.bf16.mxu0 0
    %1055 = vmatpush1.bf16.msra.mxu0 0
    %1056 = vmatprep.subr.bf16.mxu0 0
    %1057 = vmatpush1.bf16.msra.mxu0 0
    %1058 = vmatprep.subr.bf16.mxu0 0
    %1059 = vmatpush1.bf16.msra.mxu0 0
    %1060 = vmatprep.subr.bf16.mxu0 0
    %1061 = vmatpush1.bf16.msra.mxu0 0
    %1062 = vmatprep.subr.bf16.mxu0 0
    %1063 = vmatpush1.bf16.msra.mxu0 0
    %1064 = vmatprep.subr.bf16.mxu0 0
    %1065 = vmatpush1.bf16.msra.mxu0 0
    %1066 = vmatprep.subr.bf16.mxu0 0
    %1067 = vmatpush1.bf16.msra.mxu0 0
    %1068 = vmatprep.subr.bf16.mxu0 0
    %1069 = vmatpush1.bf16.msra.mxu0 0
    %1070 = vmatprep.subr.bf16.mxu0 0
    %1071 = vmatpush1.bf16.msra.mxu0 0
    %1072 = vmatprep.subr.bf16.mxu0 0
    %1073 = vmatpush1.bf16.msra.mxu0 0
    %1074 = vmatprep.subr.bf16.mxu0 0
    %1075 = vmatpush1.bf16.msra.mxu0 0
    %1076 = vmatprep.subr.bf16.mxu0 0
    %1077 = vmatpush1.bf16.msra.mxu0 0
    %1078 = vmatprep.mubr.bf16.mxu0 0
    %1079 = vmatmul.mubr.bf16.gmra.mrb[0].mxu0 %v1041
    %v1080 = vpop.f32.mrb[0].mxu0
    %v1081 = vadd.f32 0.0, %v1080
    %v1082 = vpop.f32.mrb[0].mxu0
    %v1083 = vpop.f32.mrb[0].mxu0
    %v1084 = vpop.f32.mrb[0].mxu0
    %1085 = vdwg.mxu0
    %v1086 = vpack.c.bf16 %v1081, %v1033
    %v1089 = vunpack.c.l.b16 %v207
    %v1090 = vunpack.c.l.b16 %v208
    %v1091 = vpack.c.b16 %v1090, %v1089
    %v1094 = vsel %vm326, %v1086, 0
    %1096 = vmatprep.subr.bf16.mxu0 0
    %1097 = vmatpush1.bf16.msra.mxu0 %v1091
    %1098 = vmatprep.subr.bf16.mxu0 0
    %1099 = vmatpush1.bf16.msra.mxu0 0
    %1100 = vmatprep.subr.bf16.mxu0 0
    %1101 = vmatpush1.bf16.msra.mxu0 0
    %1102 = vmatprep.subr.bf16.mxu0 0
    %1103 = vmatpush1.bf16.msra.mxu0 0
    %1104 = vmatprep.subr.bf16.mxu0 0
    %1105 = vmatpush1.bf16.msra.mxu0 0
    %1106 = vmatprep.subr.bf16.mxu0 0
    %1107 = vmatpush1.bf16.msra.mxu0 0
    %1108 = vmatprep.subr.bf16.mxu0 0
    %1109 = vmatpush1.bf16.msra.mxu0 0
    %1110 = vmatprep.subr.bf16.mxu0 0
    %1111 = vmatpush1.bf16.msra.mxu0 0
    %1112 = vmatprep.subr.bf16.mxu0 0
    %1113 = vmatpush1.bf16.msra.mxu0 0
    %1114 = vmatprep.subr.bf16.mxu0 0
    %1115 = vmatpush1.bf16.msra.mxu0 0
    %1116 = vmatprep.subr.bf16.mxu0 0
    %1117 = vmatpush1.bf16.msra.mxu0 0
    %1118 = vmatprep.subr.bf16.mxu0 0
    %1119 = vmatpush1.bf16.msra.mxu0 0
    %1120 = vmatprep.subr.bf16.mxu0 0
    %1121 = vmatpush1.bf16.msra.mxu0 0
    %1122 = vmatprep.subr.bf16.mxu0 0
    %1123 = vmatpush1.bf16.msra.mxu0 0
    %1124 = vmatprep.subr.bf16.mxu0 0
    %1125 = vmatpush1.bf16.msra.mxu0 0
    %1126 = vmatprep.subr.bf16.mxu0 0
    %1127 = vmatpush1.bf16.msra.mxu0 0
    %1128 = vmatprep.mubr.bf16.mxu0 0
    %1129 = vmatmul.mubr.bf16.gmra.mrb[0].mxu0 %v1094
    %v1130 = vpop.f32.mrb[0].mxu0
    %v1131 = vadd.f32 0.0, %v1130
    %v1132 = vpop.f32.mrb[0].mxu0
    %v1133 = vpop.f32.mrb[0].mxu0
    %v1134 = vadd.f32 0.0, %v1133
    %v1135 = vpop.f32.mrb[0].mxu0
    %1136 = vdwg.mxu0
    %v1137 = vadd.f32 %v860, %v1131
    %v1138 = vadd.f32 %v863, %v1134
    %1139 = vrot.lane.b32.xlu0 %v317, 80
    %v1140 = vpop.permute.xlu0 %1139
    %1141 = vrot.lane.b32.xlu0 %v319, 16
    %v1142 = vpop.permute.xlu0 %1141
    %v1144 = vsel %vm326, %v1140, 0
    %v1147 = vsel %vm326, %v1142, 0
    %1149 = vmatprep.subr.bf16.mxu0 0
    %1150 = vmatpush1.bf16.xpose.msra.mxu0 %v1147
    %1151 = vmatprep.subr.bf16.mxu0 0
    %1152 = vmatpush1.bf16.xpose.msra.mxu0 0
    %1153 = vmatprep.subr.bf16.mxu0 0
    %1154 = vmatpush1.bf16.xpose.msra.mxu0 0
    %1155 = vmatprep.subr.bf16.mxu0 0
    %1156 = vmatpush1.bf16.xpose.msra.mxu0 0
    %1157 = vmatprep.subr.bf16.mxu0 0
    %1158 = vmatpush1.bf16.xpose.msra.mxu0 0
    %1159 = vmatprep.subr.bf16.mxu0 0
    %1160 = vmatpush1.bf16.xpose.msra.mxu0 0
    %1161 = vmatprep.subr.bf16.mxu0 0
    %1162 = vmatpush1.bf16.xpose.msra.mxu0 0
    %1163 = vmatprep.subr.bf16.mxu0 0
    %1164 = vmatpush1.bf16.xpose.msra.mxu0 0
    %1165 = vmatprep.subr.bf16.mxu0 0
    %1166 = vmatpush1.bf16.xpose.msra.mxu0 0
    %1167 = vmatprep.subr.bf16.mxu0 0
    %1168 = vmatpush1.bf16.xpose.msra.mxu0 0
    %1169 = vmatprep.subr.bf16.mxu0 0
    %1170 = vmatpush1.bf16.xpose.msra.mxu0 0
    %1171 = vmatprep.subr.bf16.mxu0 0
    %1172 = vmatpush1.bf16.xpose.msra.mxu0 0
    %1173 = vmatprep.subr.bf16.mxu0 0
    %1174 = vmatpush1.bf16.xpose.msra.mxu0 0
    %1175 = vmatprep.subr.bf16.mxu0 0
    %1176 = vmatpush1.bf16.xpose.msra.mxu0 0
    %1177 = vmatprep.subr.bf16.mxu0 0
    %1178 = vmatpush1.bf16.xpose.msra.mxu0 0
    %1179 = vmatprep.subr.bf16.mxu0 0
    %1180 = vmatpush1.bf16.xpose.msra.mxu0 0
    %1181 = vmatprep.mubr.bf16.mxu0 0
    %1182 = vmatmul.mubr.bf16.gmra.mrb[0].mxu0 %v1144
    %v1183 = vpop.f32.mrb[0].mxu0
    %v1184 = vadd.f32 %v194, %v1183
    %v1185 = vpop.f32.mrb[0].mxu0
    %v1186 = vpop.f32.mrb[0].mxu0
    %v1187 = vpop.f32.mrb[0].mxu0
    %1188 = vdwg.mxu0
    %1189 = vrot.lane.b32.xlu0 %v318, 80
    %v1190 = vpop.permute.xlu0 %1189
    %1191 = vrot.lane.b32.xlu0 %v320, 16
    %v1192 = vpop.permute.xlu0 %1191
    %v1194 = vsel %vm326, %v1190, 0
    %v1197 = vsel %vm326, %v1192, 0
    %1199 = vmatprep.subr.bf16.mxu0 0
    %1200 = vmatpush1.bf16.xpose.msra.mxu0 %v1197
    %1201 = vmatprep.subr.bf16.mxu0 0
    %1202 = vmatpush1.bf16.xpose.msra.mxu0 0
    %1203 = vmatprep.subr.bf16.mxu0 0
    %1204 = vmatpush1.bf16.xpose.msra.mxu0 0
    %1205 = vmatprep.subr.bf16.mxu0 0
    %1206 = vmatpush1.bf16.xpose.msra.mxu0 0
    %1207 = vmatprep.subr.bf16.mxu0 0
    %1208 = vmatpush1.bf16.xpose.msra.mxu0 0
    %1209 = vmatprep.subr.bf16.mxu0 0
    %1210 = vmatpush1.bf16.xpose.msra.mxu0 0
    %1211 = vmatprep.subr.bf16.mxu0 0
    %1212 = vmatpush1.bf16.xpose.msra.mxu0 0
    %1213 = vmatprep.subr.bf16.mxu0 0
    %1214 = vmatpush1.bf16.xpose.msra.mxu0 0
    %1215 = vmatprep.subr.bf16.mxu0 0
    %1216 = vmatpush1.bf16.xpose.msra.mxu0 0
    %1217 = vmatprep.subr.bf16.mxu0 0
    %1218 = vmatpush1.bf16.xpose.msra.mxu0 0
    %1219 = vmatprep.subr.bf16.mxu0 0
    %1220 = vmatpush1.bf16.xpose.msra.mxu0 0
    %1221 = vmatprep.subr.bf16.mxu0 0
    %1222 = vmatpush1.bf16.xpose.msra.mxu0 0
    %1223 = vmatprep.subr.bf16.mxu0 0
    %1224 = vmatpush1.bf16.xpose.msra.mxu0 0
    %1225 = vmatprep.subr.bf16.mxu0 0
    %1226 = vmatpush1.bf16.xpose.msra.mxu0 0
    %1227 = vmatprep.subr.bf16.mxu0 0
    %1228 = vmatpush1.bf16.xpose.msra.mxu0 0
    %1229 = vmatprep.subr.bf16.mxu0 0
    %1230 = vmatpush1.bf16.xpose.msra.mxu0 0
    %1231 = vmatprep.mubr.bf16.mxu0 0
    %1232 = vmatmul.mubr.bf16.gmra.mrb[0].mxu0 %v1194
    %v1233 = vpop.f32.mrb[0].mxu0
    %v1234 = vadd.f32 %v198, %v1233
    %v1235 = vpop.f32.mrb[0].mxu0
    %v1236 = vpop.f32.mrb[0].mxu0
    %v1237 = vpop.f32.mrb[0].mxu0
    %1238 = vdwg.mxu0
    %v1239 = vsel %vm422, %v1184, -inf
    %1240 = vmax.xlane.f32.xlu0 %v1239
    %v1241 = vpop.xlane.xlu0 %1240
    %v1242 = vsel %vm422, %v1234, -inf
    %1243 = vmax.xlane.f32.xlu0 %v1242
    %v1244 = vpop.xlane.xlu0 %1243
    %v1245 = vsub.f32 %v1184, %v1241
    %v1246 = vsub.f32 %v1234, %v1244
    %v1247 = vmul.f32 %v1245, 1.442695
    %v1248 = vpow.pop %v1247
    %v1249 = vmul.f32 %v1246, 1.442695
    %v1250 = vpow.pop %v1249
    %v1251 = vsel %vm422, %v1248, 0.0
    %1252 = vadd.xlane.f32.xlu0 %v1251
    %v1253 = vpop.xlane.xlu0 %1252
    %v1254 = vsel %vm422, %v1250, 0.0
    %1255 = vadd.xlane.f32.xlu0 %v1254
    %v1256 = vpop.xlane.xlu0 %1255
    %v1257 = vrcp.pop %v1253
    %v1258 = vrcp.pop %v1256
    %v1259 = vmul.f32 %v1248, %v1257
    %v1260 = vmul.f32 %v1250, %v1258
    %v1261 = vpack.c.bf16 %v1259, %v1259
    %v1262 = vpack.c.bf16 %v1260, %v1260
    %1263 = vrot.lane.b32.xlu0 %v321, 80
    %v1264 = vpop.permute.xlu0 %1263
    %v1266 = vsel %vm422, %v1261, 0
    %v1269 = vsel %vm450, %v1264, 0
    %1271 = vmatprep.subr.bf16.mxu0 0
    %1272 = vmatpush1.bf16.msra.mxu0 %v1269
    %1273 = vmatprep.subr.bf16.mxu0 0
    %1274 = vmatpush1.bf16.msra.mxu0 0
    %1275 = vmatprep.subr.bf16.mxu0 0
    %1276 = vmatpush1.bf16.msra.mxu0 0
    %1277 = vmatprep.subr.bf16.mxu0 0
    %1278 = vmatpush1.bf16.msra.mxu0 0
    %1279 = vmatprep.subr.bf16.mxu0 0
    %1280 = vmatpush1.bf16.msra.mxu0 0
    %1281 = vmatprep.subr.bf16.mxu0 0
    %1282 = vmatpush1.bf16.msra.mxu0 0
    %1283 = vmatprep.subr.bf16.mxu0 0
    %1284 = vmatpush1.bf16.msra.mxu0 0
    %1285 = vmatprep.subr.bf16.mxu0 0
    %1286 = vmatpush1.bf16.msra.mxu0 0
    %1287 = vmatprep.subr.bf16.mxu0 0
    %1288 = vmatpush1.bf16.msra.mxu0 0
    %1289 = vmatprep.subr.bf16.mxu0 0
    %1290 = vmatpush1.bf16.msra.mxu0 0
    %1291 = vmatprep.subr.bf16.mxu0 0
    %1292 = vmatpush1.bf16.msra.mxu0 0
    %1293 = vmatprep.subr.bf16.mxu0 0
    %1294 = vmatpush1.bf16.msra.mxu0 0
    %1295 = vmatprep.subr.bf16.mxu0 0
    %1296 = vmatpush1.bf16.msra.mxu0 0
    %1297 = vmatprep.subr.bf16.mxu0 0
    %1298 = vmatpush1.bf16.msra.mxu0 0
    %1299 = vmatprep.subr.bf16.mxu0 0
    %1300 = vmatpush1.bf16.msra.mxu0 0
    %1301 = vmatprep.subr.bf16.mxu0 0
    %1302 = vmatpush1.bf16.msra.mxu0 0
    %1303 = vmatprep.mubr.bf16.mxu0 0
    %1304 = vmatmul.mubr.bf16.gmra.mrb[0].mxu0 %v1266
    %v1305 = vpop.f32.mrb[0].mxu0
    %v1306 = vadd.f32 0.0, %v1305
    %v1307 = vpop.f32.mrb[0].mxu0
    %v1308 = vpop.f32.mrb[0].mxu0
    %v1309 = vpop.f32.mrb[0].mxu0
    %1310 = vdwg.mxu0
    %1311 = vrot.lane.b32.xlu0 %v322, 80
    %v1312 = vpop.permute.xlu0 %1311
    %v1314 = vsel %vm422, %v1262, 0
    %v1317 = vsel %vm450, %v1312, 0
    %1319 = vmatprep.subr.bf16.mxu0 0
    %1320 = vmatpush1.bf16.msra.mxu0 %v1317
    %1321 = vmatprep.subr.bf16.mxu0 0
    %1322 = vmatpush1.bf16.msra.mxu0 0
    %1323 = vmatprep.subr.bf16.mxu0 0
    %1324 = vmatpush1.bf16.msra.mxu0 0
    %1325 = vmatprep.subr.bf16.mxu0 0
    %1326 = vmatpush1.bf16.msra.mxu0 0
    %1327 = vmatprep.subr.bf16.mxu0 0
    %1328 = vmatpush1.bf16.msra.mxu0 0
    %1329 = vmatprep.subr.bf16.mxu0 0
    %1330 = vmatpush1.bf16.msra.mxu0 0
    %1331 = vmatprep.subr.bf16.mxu0 0
    %1332 = vmatpush1.bf16.msra.mxu0 0
    %1333 = vmatprep.subr.bf16.mxu0 0
    %1334 = vmatpush1.bf16.msra.mxu0 0
    %1335 = vmatprep.subr.bf16.mxu0 0
    %1336 = vmatpush1.bf16.msra.mxu0 0
    %1337 = vmatprep.subr.bf16.mxu0 0
    %1338 = vmatpush1.bf16.msra.mxu0 0
    %1339 = vmatprep.subr.bf16.mxu0 0
    %1340 = vmatpush1.bf16.msra.mxu0 0
    %1341 = vmatprep.subr.bf16.mxu0 0
    %1342 = vmatpush1.bf16.msra.mxu0 0
    %1343 = vmatprep.subr.bf16.mxu0 0
    %1344 = vmatpush1.bf16.msra.mxu0 0
    %1345 = vmatprep.subr.bf16.mxu0 0
    %1346 = vmatpush1.bf16.msra.mxu0 0
    %1347 = vmatprep.subr.bf16.mxu0 0
    %1348 = vmatpush1.bf16.msra.mxu0 0
    %1349 = vmatprep.subr.bf16.mxu0 0
    %1350 = vmatpush1.bf16.msra.mxu0 0
    %1351 = vmatprep.mubr.bf16.mxu0 0
    %1352 = vmatmul.mubr.bf16.gmra.mrb[0].mxu0 %v1314
    %v1353 = vpop.f32.mrb[0].mxu0
    %v1354 = vadd.f32 0.0, %v1353
    %v1355 = vpop.f32.mrb[0].mxu0
    %v1356 = vpop.f32.mrb[0].mxu0
    %v1357 = vpop.f32.mrb[0].mxu0
    %1358 = vdwg.mxu0
    %v1359 = vpack.c.bf16 %v1354, %v1306
    %v1362 = vunpack.c.l.b16 %v209
    %v1363 = vunpack.c.l.b16 %v210
    %v1364 = vpack.c.b16 %v1363, %v1362
    %v1367 = vsel %vm326, %v1359, 0
    %1369 = vmatprep.subr.bf16.mxu0 0
    %1370 = vmatpush1.bf16.msra.mxu0 %v1364
    %1371 = vmatprep.subr.bf16.mxu0 0
    %1372 = vmatpush1.bf16.msra.mxu0 0
    %1373 = vmatprep.subr.bf16.mxu0 0
    %1374 = vmatpush1.bf16.msra.mxu0 0
    %1375 = vmatprep.subr.bf16.mxu0 0
    %1376 = vmatpush1.bf16.msra.mxu0 0
    %1377 = vmatprep.subr.bf16.mxu0 0
    %1378 = vmatpush1.bf16.msra.mxu0 0
    %1379 = vmatprep.subr.bf16.mxu0 0
    %1380 = vmatpush1.bf16.msra.mxu0 0
    %1381 = vmatprep.subr.bf16.mxu0 0
    %1382 = vmatpush1.bf16.msra.mxu0 0
    %1383 = vmatprep.subr.bf16.mxu0 0
    %1384 = vmatpush1.bf16.msra.mxu0 0
    %1385 = vmatprep.subr.bf16.mxu0 0
    %1386 = vmatpush1.bf16.msra.mxu0 0
    %1387 = vmatprep.subr.bf16.mxu0 0
    %1388 = vmatpush1.bf16.msra.mxu0 0
    %1389 = vmatprep.subr.bf16.mxu0 0
    %1390 = vmatpush1.bf16.msra.mxu0 0
    %1391 = vmatprep.subr.bf16.mxu0 0
    %1392 = vmatpush1.bf16.msra.mxu0 0
    %1393 = vmatprep.subr.bf16.mxu0 0
    %1394 = vmatpush1.bf16.msra.mxu0 0
    %1395 = vmatprep.subr.bf16.mxu0 0
    %1396 = vmatpush1.bf16.msra.mxu0 0
    %1397 = vmatprep.subr.bf16.mxu0 0
    %1398 = vmatpush1.bf16.msra.mxu0 0
    %1399 = vmatprep.subr.bf16.mxu0 0
    %1400 = vmatpush1.bf16.msra.mxu0 0
    %1401 = vmatprep.mubr.bf16.mxu0 0
    %1402 = vmatmul.mubr.bf16.gmra.mrb[0].mxu0 %v1367
    %v1403 = vpop.f32.mrb[0].mxu0
    %v1404 = vadd.f32 0.0, %v1403
    %v1405 = vpop.f32.mrb[0].mxu0
    %v1406 = vpop.f32.mrb[0].mxu0
    %v1407 = vadd.f32 0.0, %v1406
    %v1408 = vpop.f32.mrb[0].mxu0
    %1409 = vdwg.mxu0
    %v1410 = vadd.f32 %v1137, %v1404
    %v1411 = vadd.f32 %v1138, %v1407
    %v1412 = vlaneseq
    %v1413 = vshrl.u32 %v1412, 7
    %v1414 = vsub.s32 1, %v1413
    %v1415 = vrot.slane %v201, %v1414
    %v1416 = vadd.f32 %v1410, %v1415
    %v1417 = vadd.f32 %v1411, %v1415
    %v1418 = vadd.f32 %v163, %v1416
    %v1419 = vadd.f32 %v164, %v1417
    %v1420 = vsel %vm268, %v1418, 0.0
    %1421 = vadd.xlane.f32.xlu0 %v1420
    %v1422 = vpop.xlane.xlu0 %1421
    %v1423 = vsel %vm268, %v1419, 0.0
    %1424 = vadd.xlane.f32.xlu0 %v1423
    %v1425 = vpop.xlane.xlu0 %1424
    %v1426 = vrcp.pop 64.0
    %v1427 = vmul.f32 %v1422, %v1426
    %v1428 = vmul.f32 %v1425, %v1426
    %v1429 = vsub.f32 %v1418, %v1427
    %v1430 = vsub.f32 %v1419, %v1428
    %v1431 = vmul.f32 %v1429, %v1429
    %v1432 = vmul.f32 %v1430, %v1430
    %v1433 = vsel %vm268, %v1431, 0.0
    %1434 = vadd.xlane.f32.xlu0 %v1433
    %v1435 = vpop.xlane.xlu0 %1434
    %v1436 = vsel %vm268, %v1432, 0.0
    %1437 = vadd.xlane.f32.xlu0 %v1436
    %v1438 = vpop.xlane.xlu0 %1437
    %v1439 = vmul.f32 %v1435, %v1426
    %v1440 = vmul.f32 %v1438, %v1426
    %v1441 = vadd.f32 %v1439, 1e-05
    %v1442 = vadd.f32 %v1440, 1e-05
    %v1443 = vrsqrt.pop %v1441
    %v1444 = vrsqrt.pop %v1442
    %v1445 = vmul.f32 %v1429, %v1443
    %v1446 = vmul.f32 %v1430, %v1444
    %v1447 = vlaneseq
    %v1448 = vshrl.u32 %v1447, 7
    %v1449 = vsub.s32 4, %v1448
    %v1450 = vrot.slane %v201, %v1449
    %v1451 = vmul.f32 %v1445, %v1450
    %v1452 = vmul.f32 %v1446, %v1450
    %v1453 = vlaneseq
    %v1454 = vshrl.u32 %v1453, 7
    %v1455 = vsub.s32 5, %v1454
    %v1456 = vrot.slane %v201, %v1455
    %v1457 = vadd.f32 %v1451, %v1456
    %v1458 = vadd.f32 %v1452, %v1456
    %v1459 = vpack.c.bf16 %v1458, %v1457
    %v1460 = vld [vmem:[%s6] sm:$0xff]
    %v1461 = vld [vmem:[%s6 + $0x8] sm:$0xff]
    %v1462 = vld [vmem:[%s6 + $0x10] sm:$0xff]
    %v1463 = vld [vmem:[%s6 + $0x18] sm:$0xff]
    %v1464 = vld [vmem:[%s6 + $0x20] sm:$0xff]
    %v1465 = vld [vmem:[%s6 + $0x28] sm:$0xff]
    %v1466 = vld [vmem:[%s6 + $0x30] sm:$0xff]
    %v1467 = vld [vmem:[%s6 + $0x38] sm:$0xff]
    %v1468 = vlaneseq
    %v1469 = vshrl.u32 %v1468, 7
    %v1470 = vsub.s32 2, %v1469
    %v1471 = vrot.slane %v201, %v1470
    %v1472 = vlaneseq
    %v1473 = vshrl.u32 %v1472, 7
    %v1474 = vsub.s32 2, %v1473
    %v1475 = vrot.slane %v202, %v1474
    %v1484 = vunpack.c.l.b16 %v1460
    %v1485 = vunpack.c.h.b16 %v1460
    %v1486 = vunpack.c.l.b16 %v1461
    %v1487 = vunpack.c.h.b16 %v1461
    %v1488 = vunpack.c.l.b16 %v1462
    %v1489 = vunpack.c.h.b16 %v1462
    %v1490 = vunpack.c.l.b16 %v1463
    %v1491 = vunpack.c.h.b16 %v1463
    %v1492 = vunpack.c.l.b16 %v1464
    %v1493 = vunpack.c.h.b16 %v1464
    %v1494 = vunpack.c.l.b16 %v1465
    %v1495 = vunpack.c.h.b16 %v1465
    %v1496 = vunpack.c.l.b16 %v1466
    %v1497 = vunpack.c.h.b16 %v1466
    %v1498 = vunpack.c.l.b16 %v1467
    %v1499 = vunpack.c.h.b16 %v1467
    %v1500 = vpack.c.b16 %v1486, %v1484
    %v1501 = vpack.c.b16 %v1487, %v1485
    %v1502 = vpack.c.b16 %v1490, %v1488
    %v1503 = vpack.c.b16 %v1491, %v1489
    %v1504 = vpack.c.b16 %v1494, %v1492
    %v1505 = vpack.c.b16 %v1495, %v1493
    %v1506 = vpack.c.b16 %v1498, %v1496
    %v1507 = vpack.c.b16 %v1499, %v1497
    %v1517 = vsel %vm268, %v1459, 0
    %1519 = vmatprep.subr.bf16.mxu0 %v1501
    %1520 = vmatpush1.bf16.msra.mxu0 %v1500
    %1521 = vmatprep.subr.bf16.mxu0 %v1503
    %1522 = vmatpush1.bf16.msra.mxu0 %v1502
    %1523 = vmatprep.subr.bf16.mxu0 %v1505
    %1524 = vmatpush1.bf16.msra.mxu0 %v1504
    %1525 = vmatprep.subr.bf16.mxu0 %v1507
    %1526 = vmatpush1.bf16.msra.mxu0 %v1506
    %1527 = vmatprep.subr.bf16.mxu0 0
    %1528 = vmatpush1.bf16.msra.mxu0 0
    %1529 = vmatprep.subr.bf16.mxu0 0
    %1530 = vmatpush1.bf16.msra.mxu0 0
    %1531 = vmatprep.subr.bf16.mxu0 0
    %1532 = vmatpush1.bf16.msra.mxu0 0
    %1533 = vmatprep.subr.bf16.mxu0 0
    %1534 = vmatpush1.bf16.msra.mxu0 0
    %1535 = vmatprep.subr.bf16.mxu0 0
    %1536 = vmatpush1.bf16.msra.mxu0 0
    %1537 = vmatprep.subr.bf16.mxu0 0
    %1538 = vmatpush1.bf16.msra.mxu0 0
    %1539 = vmatprep.subr.bf16.mxu0 0
    %1540 = vmatpush1.bf16.msra.mxu0 0
    %1541 = vmatprep.subr.bf16.mxu0 0
    %1542 = vmatpush1.bf16.msra.mxu0 0
    %1543 = vmatprep.subr.bf16.mxu0 0
    %1544 = vmatpush1.bf16.msra.mxu0 0
    %1545 = vmatprep.subr.bf16.mxu0 0
    %1546 = vmatpush1.bf16.msra.mxu0 0
    %1547 = vmatprep.subr.bf16.mxu0 0
    %1548 = vmatpush1.bf16.msra.mxu0 0
    %1549 = vmatprep.subr.bf16.mxu0 0
    %1550 = vmatpush1.bf16.msra.mxu0 0
    %1551 = vmatprep.mubr.bf16.mxu0 0
    %1552 = vmatmul.mubr.bf16.gmra.mrb[0].mxu0 %v1517
    %v1553 = vpop.f32.mrb[0].mxu0
    %v1554 = vadd.f32 %v1471, %v1553
    %v1555 = vpop.f32.mrb[0].mxu0
    %v1556 = vadd.f32 %v1475, %v1555
    %v1557 = vpop.f32.mrb[0].mxu0
    %v1558 = vadd.f32 %v1471, %v1557
    %v1559 = vpop.f32.mrb[0].mxu0
    %v1560 = vadd.f32 %v1475, %v1559
    %1561 = vdwg.mxu0
    %v1562 = vmax.f32 %v1554, 0.0
    %v1563 = vmax.f32 %v1556, 0.0
    %v1564 = vmax.f32 %v1558, 0.0
    %v1565 = vmax.f32 %v1560, 0.0
    %v1566 = vpack.c.bf16 %v1564, %v1562
    %v1567 = vpack.c.bf16 %v1565, %v1563
    %v1568 = vld [vmem:[%s7] sm:$0xf]
    %v1569 = vld [vmem:[%s7 + $0x4] sm:$0xf]
    %v1570 = vld [vmem:[%s7 + $0x8] sm:$0xf]
    %v1571 = vld [vmem:[%s7 + $0xc] sm:$0xf]
    %v1572 = vld [vmem:[%s7 + $0x10] sm:$0xf]
    %v1573 = vld [vmem:[%s7 + $0x14] sm:$0xf]
    %v1574 = vld [vmem:[%s7 + $0x18] sm:$0xf]
    %v1575 = vld [vmem:[%s7 + $0x1c] sm:$0xf]
    %v1576 = vld [vmem:[%s7 + $0x20] sm:$0xf]
    %v1577 = vld [vmem:[%s7 + $0x24] sm:$0xf]
    %v1578 = vld [vmem:[%s7 + $0x28] sm:$0xf]
    %v1579 = vld [vmem:[%s7 + $0x2c] sm:$0xf]
    %v1580 = vld [vmem:[%s7 + $0x30] sm:$0xf]
    %v1581 = vld [vmem:[%s7 + $0x34] sm:$0xf]
    %v1582 = vld [vmem:[%s7 + $0x38] sm:$0xf]
    %v1583 = vld [vmem:[%s7 + $0x3c] sm:$0xf]
    %v1584 = vld [vmem:[%s7 + $0x40] sm:$0xf]
    %v1585 = vld [vmem:[%s7 + $0x44] sm:$0xf]
    %v1586 = vld [vmem:[%s7 + $0x48] sm:$0xf]
    %v1587 = vld [vmem:[%s7 + $0x4c] sm:$0xf]
    %v1588 = vld [vmem:[%s7 + $0x50] sm:$0xf]
    %v1589 = vld [vmem:[%s7 + $0x54] sm:$0xf]
    %v1590 = vld [vmem:[%s7 + $0x58] sm:$0xf]
    %v1591 = vld [vmem:[%s7 + $0x5c] sm:$0xf]
    %v1592 = vld [vmem:[%s7 + $0x60] sm:$0xf]
    %v1593 = vld [vmem:[%s7 + $0x64] sm:$0xf]
    %v1594 = vld [vmem:[%s7 + $0x68] sm:$0xf]
    %v1595 = vld [vmem:[%s7 + $0x6c] sm:$0xf]
    %v1596 = vld [vmem:[%s7 + $0x70] sm:$0xf]
    %v1597 = vld [vmem:[%s7 + $0x74] sm:$0xf]
    %v1598 = vld [vmem:[%s7 + $0x78] sm:$0xf]
    %v1599 = vld [vmem:[%s7 + $0x7c] sm:$0xf]
    %v1600 = vlaneseq
    %v1601 = vshrl.u32 %v1600, 7
    %v1602 = vsub.s32 3, %v1601
    %v1603 = vrot.slane %v201, %v1602
    %v1636 = vunpack.c.l.b16 %v1568
    %v1637 = vunpack.c.l.b16 %v1569
    %v1638 = vunpack.c.l.b16 %v1570
    %v1639 = vunpack.c.l.b16 %v1571
    %v1640 = vunpack.c.l.b16 %v1572
    %v1641 = vunpack.c.l.b16 %v1573
    %v1642 = vunpack.c.l.b16 %v1574
    %v1643 = vunpack.c.l.b16 %v1575
    %v1644 = vunpack.c.l.b16 %v1576
    %v1645 = vunpack.c.l.b16 %v1577
    %v1646 = vunpack.c.l.b16 %v1578
    %v1647 = vunpack.c.l.b16 %v1579
    %v1648 = vunpack.c.l.b16 %v1580
    %v1649 = vunpack.c.l.b16 %v1581
    %v1650 = vunpack.c.l.b16 %v1582
    %v1651 = vunpack.c.l.b16 %v1583
    %v1652 = vunpack.c.l.b16 %v1584
    %v1653 = vunpack.c.l.b16 %v1585
    %v1654 = vunpack.c.l.b16 %v1586
    %v1655 = vunpack.c.l.b16 %v1587
    %v1656 = vunpack.c.l.b16 %v1588
    %v1657 = vunpack.c.l.b16 %v1589
    %v1658 = vunpack.c.l.b16 %v1590
    %v1659 = vunpack.c.l.b16 %v1591
    %v1660 = vunpack.c.l.b16 %v1592
    %v1661 = vunpack.c.l.b16 %v1593
    %v1662 = vunpack.c.l.b16 %v1594
    %v1663 = vunpack.c.l.b16 %v1595
    %v1664 = vunpack.c.l.b16 %v1596
    %v1665 = vunpack.c.l.b16 %v1597
    %v1666 = vunpack.c.l.b16 %v1598
    %v1667 = vunpack.c.l.b16 %v1599
    %v1668 = vpack.c.b16 %v1637, %v1636
    %v1669 = vpack.c.b16 %v1639, %v1638
    %v1670 = vpack.c.b16 %v1641, %v1640
    %v1671 = vpack.c.b16 %v1643, %v1642
    %v1672 = vpack.c.b16 %v1645, %v1644
    %v1673 = vpack.c.b16 %v1647, %v1646
    %v1674 = vpack.c.b16 %v1649, %v1648
    %v1675 = vpack.c.b16 %v1651, %v1650
    %v1676 = vpack.c.b16 %v1653, %v1652
    %v1677 = vpack.c.b16 %v1655, %v1654
    %v1678 = vpack.c.b16 %v1657, %v1656
    %v1679 = vpack.c.b16 %v1659, %v1658
    %v1680 = vpack.c.b16 %v1661, %v1660
    %v1681 = vpack.c.b16 %v1663, %v1662
    %v1682 = vpack.c.b16 %v1665, %v1664
    %v1683 = vpack.c.b16 %v1667, %v1666
    %1700 = vmatprep.subr.bf16.mxu0 0
    %1701 = vmatpush1.bf16.msra.mxu0 %v1668
    %1702 = vmatprep.subr.bf16.mxu0 0
    %1703 = vmatpush1.bf16.msra.mxu0 %v1669
    %1704 = vmatprep.subr.bf16.mxu0 0
    %1705 = vmatpush1.bf16.msra.mxu0 %v1670
    %1706 = vmatprep.subr.bf16.mxu0 0
    %1707 = vmatpush1.bf16.msra.mxu0 %v1671
    %1708 = vmatprep.subr.bf16.mxu0 0
    %1709 = vmatpush1.bf16.msra.mxu0 %v1672
    %1710 = vmatprep.subr.bf16.mxu0 0
    %1711 = vmatpush1.bf16.msra.mxu0 %v1673
    %1712 = vmatprep.subr.bf16.mxu0 0
    %1713 = vmatpush1.bf16.msra.mxu0 %v1674
    %1714 = vmatprep.subr.bf16.mxu0 0
    %1715 = vmatpush1.bf16.msra.mxu0 %v1675
    %1716 = vmatprep.subr.bf16.mxu0 0
    %1717 = vmatpush1.bf16.msra.mxu0 %v1676
    %1718 = vmatprep.subr.bf16.mxu0 0
    %1719 = vmatpush1.bf16.msra.mxu0 %v1677
    %1720 = vmatprep.subr.bf16.mxu0 0
    %1721 = vmatpush1.bf16.msra.mxu0 %v1678
    %1722 = vmatprep.subr.bf16.mxu0 0
    %1723 = vmatpush1.bf16.msra.mxu0 %v1679
    %1724 = vmatprep.subr.bf16.mxu0 0
    %1725 = vmatpush1.bf16.msra.mxu0 %v1680
    %1726 = vmatprep.subr.bf16.mxu0 0
    %1727 = vmatpush1.bf16.msra.mxu0 %v1681
    %1728 = vmatprep.subr.bf16.mxu0 0
    %1729 = vmatpush1.bf16.msra.mxu0 %v1682
    %1730 = vmatprep.subr.bf16.mxu0 0
    %1731 = vmatpush1.bf16.msra.mxu0 %v1683
    %1732 = vmatprep.mubr.bf16.mxu0 %v1567
    %1733 = vmatmul.mubr.bf16.gmra.mrb[0].mxu0 %v1566
    %v1734 = vpop.f32.mrb[0].mxu0
    %v1735 = vadd.f32 %v1603, %v1734
    %v1736 = vpop.f32.mrb[0].mxu0
    %v1737 = vpop.f32.mrb[0].mxu0
    %v1738 = vadd.f32 %v1603, %v1737
    %v1739 = vpop.f32.mrb[0].mxu0
    %1740 = vdwg.mxu0
    %v1741 = vadd.f32 %v1457, %v1735
    %v1742 = vadd.f32 %v1458, %v1738
    %v1743 = vsel %vm268, %v1741, 0.0
    %1744 = vadd.xlane.f32.xlu0 %v1743
    %v1745 = vpop.xlane.xlu0 %1744
    %v1746 = vsel %vm268, %v1742, 0.0
    %1747 = vadd.xlane.f32.xlu0 %v1746
    %v1748 = vpop.xlane.xlu0 %1747
    %v1749 = vmul.f32 %v1745, %v1426
    %v1750 = vmul.f32 %v1748, %v1426
    %v1751 = vsub.f32 %v1741, %v1749
    %v1752 = vsub.f32 %v1742, %v1750
    %v1753 = vmul.f32 %v1751, %v1751
    %v1754 = vmul.f32 %v1752, %v1752
    %v1755 = vsel %vm268, %v1753, 0.0
    %1756 = vadd.xlane.f32.xlu0 %v1755
    %v1757 = vpop.xlane.xlu0 %1756
    %v1758 = vsel %vm268, %v1754, 0.0
    %1759 = vadd.xlane.f32.xlu0 %v1758
    %v1760 = vpop.xlane.xlu0 %1759
    %v1761 = vmul.f32 %v1757, %v1426
    %v1762 = vmul.f32 %v1760, %v1426
    %v1763 = vadd.f32 %v1761, 1e-05
    %v1764 = vadd.f32 %v1762, 1e-05
    %v1765 = vrsqrt.pop %v1763
    %v1766 = vrsqrt.pop %v1764
    %v1767 = vmul.f32 %v1751, %v1765
    %v1768 = vmul.f32 %v1752, %v1766
    %v1769 = vlaneseq
    %v1770 = vshrl.u32 %v1769, 7
    %v1771 = vsub.s32 6, %v1770
    %v1772 = vrot.slane %v201, %v1771
    %v1773 = vmul.f32 %v1767, %v1772
    %v1774 = vmul.f32 %v1768, %v1772
    %v1775 = vlaneseq
    %v1776 = vshrl.u32 %v1775, 7
    %v1777 = vsub.s32 7, %v1776
    %v1778 = vrot.slane %v201, %v1777
    %v1779 = vadd.f32 %v1773, %v1778
    %v1780 = vadd.f32 %v1774, %v1778
    %s1781 = scalar_lea.vmem %s8, 16
    %v1782 = vld [vmem:[%s1781] sm:$0xff]
    %v1783 = vld [vmem:[%s1781 + $0x8] sm:$0xff]
    %s1784 = scalar_lea.vmem %s5, 32
    %v1785 = vld [vmem:[%s1784] sm:$0xf]
    %v1786 = vld [vmem:[%s1784 + $0x4] sm:$0xf]
    %v1787 = vld [vmem:[%s1784 + $0x8] sm:$0xf]
    %v1788 = vld [vmem:[%s1784 + $0xc] sm:$0xf]
    %v1789 = vld [vmem:[%s1784 + $0x10] sm:$0xf]
    %v1790 = vld [vmem:[%s1784 + $0x14] sm:$0xf]
    %v1791 = vld [vmem:[%s1784 + $0x18] sm:$0xf]
    %v1792 = vld [vmem:[%s1784 + $0x1c] sm:$0xf]
    %v1793 = vpack.c.bf16 %v1780, %v1779
    %s1794 = scalar_lea.vmem %s4, 64
    %v1795 = vld [vmem:[%s1794] sm:$0xff]
    %v1796 = vld [vmem:[%s1794 + $0x8] sm:$0xff]
    %v1797 = vld [vmem:[%s1794 + $0x10] sm:$0xff]
    %v1798 = vld [vmem:[%s1794 + $0x18] sm:$0xff]
    %v1799 = vld [vmem:[%s1794 + $0x20] sm:$0xff]
    %v1800 = vld [vmem:[%s1794 + $0x28] sm:$0xff]
    %v1801 = vld [vmem:[%s1794 + $0x30] sm:$0xff]
    %v1802 = vld [vmem:[%s1794 + $0x38] sm:$0xff]
    %v1803 = vlaneseq
    %v1804 = vshrl.u32 %v1803, 7
    %v1805 = vsub.s32 0, %v1804
    %v1806 = vrot.slane %v1782, %v1805
    %v1807 = vlaneseq
    %v1808 = vshrl.u32 %v1807, 7
    %v1809 = vsub.s32 0, %v1808
    %v1810 = vrot.slane %v1783, %v1809
    %v1819 = vunpack.c.l.b16 %v1795
    %v1820 = vunpack.c.h.b16 %v1795
    %v1821 = vunpack.c.l.b16 %v1796
    %v1822 = vunpack.c.h.b16 %v1796
    %v1823 = vunpack.c.l.b16 %v1797
    %v1824 = vunpack.c.h.b16 %v1797
    %v1825 = vunpack.c.l.b16 %v1798
    %v1826 = vunpack.c.h.b16 %v1798
    %v1827 = vunpack.c.l.b16 %v1799
    %v1828 = vunpack.c.h.b16 %v1799
    %v1829 = vunpack.c.l.b16 %v1800
    %v1830 = vunpack.c.h.b16 %v1800
    %v1831 = vunpack.c.l.b16 %v1801
    %v1832 = vunpack.c.h.b16 %v1801
    %v1833 = vunpack.c.l.b16 %v1802
    %v1834 = vunpack.c.h.b16 %v1802
    %v1835 = vpack.c.b16 %v1821, %v1819
    %v1836 = vpack.c.b16 %v1822, %v1820
    %v1837 = vpack.c.b16 %v1825, %v1823
    %v1838 = vpack.c.b16 %v1826, %v1824
    %v1839 = vpack.c.b16 %v1829, %v1827
    %v1840 = vpack.c.b16 %v1830, %v1828
    %v1841 = vpack.c.b16 %v1833, %v1831
    %v1842 = vpack.c.b16 %v1834, %v1832
    %v1852 = vsel %vm268, %v1793, 0
    %1854 = vmatprep.subr.bf16.mxu0 %v1836
    %1855 = vmatpush1.bf16.msra.mxu0 %v1835
    %1856 = vmatprep.subr.bf16.mxu0 %v1838
    %1857 = vmatpush1.bf16.msra.mxu0 %v1837
    %1858 = vmatprep.subr.bf16.mxu0 %v1840
    %1859 = vmatpush1.bf16.msra.mxu0 %v1839
    %1860 = vmatprep.subr.bf16.mxu0 %v1842
    %1861 = vmatpush1.bf16.msra.mxu0 %v1841
    %1862 = vmatprep.subr.bf16.mxu0 0
    %1863 = vmatpush1.bf16.msra.mxu0 0
    %1864 = vmatprep.subr.bf16.mxu0 0
    %1865 = vmatpush1.bf16.msra.mxu0 0
    %1866 = vmatprep.subr.bf16.mxu0 0
    %1867 = vmatpush1.bf16.msra.mxu0 0
    %1868 = vmatprep.subr.bf16.mxu0 0
    %1869 = vmatpush1.bf16.msra.mxu0 0
    %1870 = vmatprep.subr.bf16.mxu0 0
    %1871 = vmatpush1.bf16.msra.mxu0 0
    %1872 = vmatprep.subr.bf16.mxu0 0
    %1873 = vmatpush1.bf16.msra.mxu0 0
    %1874 = vmatprep.subr.bf16.mxu0 0
    %1875 = vmatpush1.bf16.msra.mxu0 0
    %1876 = vmatprep.subr.bf16.mxu0 0
    %1877 = vmatpush1.bf16.msra.mxu0 0
    %1878 = vmatprep.subr.bf16.mxu0 0
    %1879 = vmatpush1.bf16.msra.mxu0 0
    %1880 = vmatprep.subr.bf16.mxu0 0
    %1881 = vmatpush1.bf16.msra.mxu0 0
    %1882 = vmatprep.subr.bf16.mxu0 0
    %1883 = vmatpush1.bf16.msra.mxu0 0
    %1884 = vmatprep.subr.bf16.mxu0 0
    %1885 = vmatpush1.bf16.msra.mxu0 0
    %1886 = vmatprep.mubr.bf16.mxu0 0
    %1887 = vmatmul.mubr.bf16.gmra.mrb[0].mxu0 %v1852
    %v1888 = vpop.f32.mrb[0].mxu0
    %v1889 = vadd.f32 %v1806, %v1888
    %v1890 = vpop.f32.mrb[0].mxu0
    %v1891 = vadd.f32 %v1810, %v1890
    %v1892 = vpop.f32.mrb[0].mxu0
    %v1893 = vadd.f32 %v1806, %v1892
    %v1894 = vpop.f32.mrb[0].mxu0
    %v1895 = vadd.f32 %v1810, %v1894
    %1896 = vdwg.mxu0
    %v1897 = vmul.f32 %v1889, 0.25
    %v1898 = vmul.f32 %v1893, 0.25
    %v1899 = vpack.c.bf16 %v1897, %v1897
    %v1900 = vpack.c.bf16 %v1898, %v1898
    %v1901 = vpack.c.bf16 %v1889, %v1889
    %v1902 = vpack.c.bf16 %v1893, %v1893
    %v1903 = vpack.c.bf16 %v1891, %v1891
    %v1904 = vpack.c.bf16 %v1895, %v1895
    %1906 = vrot.lane.b32.xlu0 %v1901, 64
    %v1907 = vpop.permute.xlu0 %1906
    %v1909 = vsel %vm326, %v1899, 0
    %v1912 = vsel %vm326, %v1907, 0
    %1914 = vmatprep.subr.bf16.mxu0 0
    %1915 = vmatpush1.bf16.xpose.msra.mxu0 %v1912
    %1916 = vmatprep.subr.bf16.mxu0 0
    %1917 = vmatpush1.bf16.xpose.msra.mxu0 0
    %1918 = vmatprep.subr.bf16.mxu0 0
    %1919 = vmatpush1.bf16.xpose.msra.mxu0 0
    %1920 = vmatprep.subr.bf16.mxu0 0
    %1921 = vmatpush1.bf16.xpose.msra.mxu0 0
    %1922 = vmatprep.subr.bf16.mxu0 0
    %1923 = vmatpush1.bf16.xpose.msra.mxu0 0
    %1924 = vmatprep.subr.bf16.mxu0 0
    %1925 = vmatpush1.bf16.xpose.msra.mxu0 0
    %1926 = vmatprep.subr.bf16.mxu0 0
    %1927 = vmatpush1.bf16.xpose.msra.mxu0 0
    %1928 = vmatprep.subr.bf16.mxu0 0
    %1929 = vmatpush1.bf16.xpose.msra.mxu0 0
    %1930 = vmatprep.subr.bf16.mxu0 0
    %1931 = vmatpush1.bf16.xpose.msra.mxu0 0
    %1932 = vmatprep.subr.bf16.mxu0 0
    %1933 = vmatpush1.bf16.xpose.msra.mxu0 0
    %1934 = vmatprep.subr.bf16.mxu0 0
    %1935 = vmatpush1.bf16.xpose.msra.mxu0 0
    %1936 = vmatprep.subr.bf16.mxu0 0
    %1937 = vmatpush1.bf16.xpose.msra.mxu0 0
    %1938 = vmatprep.subr.bf16.mxu0 0
    %1939 = vmatpush1.bf16.xpose.msra.mxu0 0
    %1940 = vmatprep.subr.bf16.mxu0 0
    %1941 = vmatpush1.bf16.xpose.msra.mxu0 0
    %1942 = vmatprep.subr.bf16.mxu0 0
    %1943 = vmatpush1.bf16.xpose.msra.mxu0 0
    %1944 = vmatprep.subr.bf16.mxu0 0
    %1945 = vmatpush1.bf16.xpose.msra.mxu0 0
    %1946 = vmatprep.mubr.bf16.mxu0 0
    %1947 = vmatmul.mubr.bf16.gmra.mrb[0].mxu0 %v1909
    %v1948 = vpop.f32.mrb[0].mxu0
    %v1949 = vadd.f32 %v194, %v1948
    %v1950 = vpop.f32.mrb[0].mxu0
    %v1951 = vpop.f32.mrb[0].mxu0
    %v1952 = vpop.f32.mrb[0].mxu0
    %1953 = vdwg.mxu0
    %1955 = vrot.lane.b32.xlu0 %v1902, 64
    %v1956 = vpop.permute.xlu0 %1955
    %v1958 = vsel %vm326, %v1900, 0
    %v1961 = vsel %vm326, %v1956, 0
    %1963 = vmatprep.subr.bf16.mxu0 0
    %1964 = vmatpush1.bf16.xpose.msra.mxu0 %v1961
    %1965 = vmatprep.subr.bf16.mxu0 0
    %1966 = vmatpush1.bf16.xpose.msra.mxu0 0
    %1967 = vmatprep.subr.bf16.mxu0 0
    %1968 = vmatpush1.bf16.xpose.msra.mxu0 0
    %1969 = vmatprep.subr.bf16.mxu0 0
    %1970 = vmatpush1.bf16.xpose.msra.mxu0 0
    %1971 = vmatprep.subr.bf16.mxu0 0
    %1972 = vmatpush1.bf16.xpose.msra.mxu0 0
    %1973 = vmatprep.subr.bf16.mxu0 0
    %1974 = vmatpush1.bf16.xpose.msra.mxu0 0
    %1975 = vmatprep.subr.bf16.mxu0 0
    %1976 = vmatpush1.bf16.xpose.msra.mxu0 0
    %1977 = vmatprep.subr.bf16.mxu0 0
    %1978 = vmatpush1.bf16.xpose.msra.mxu0 0
    %1979 = vmatprep.subr.bf16.mxu0 0
    %1980 = vmatpush1.bf16.xpose.msra.mxu0 0
    %1981 = vmatprep.subr.bf16.mxu0 0
    %1982 = vmatpush1.bf16.xpose.msra.mxu0 0
    %1983 = vmatprep.subr.bf16.mxu0 0
    %1984 = vmatpush1.bf16.xpose.msra.mxu0 0
    %1985 = vmatprep.subr.bf16.mxu0 0
    %1986 = vmatpush1.bf16.xpose.msra.mxu0 0
    %1987 = vmatprep.subr.bf16.mxu0 0
    %1988 = vmatpush1.bf16.xpose.msra.mxu0 0
    %1989 = vmatprep.subr.bf16.mxu0 0
    %1990 = vmatpush1.bf16.xpose.msra.mxu0 0
    %1991 = vmatprep.subr.bf16.mxu0 0
    %1992 = vmatpush1.bf16.xpose.msra.mxu0 0
    %1993 = vmatprep.subr.bf16.mxu0 0
    %1994 = vmatpush1.bf16.xpose.msra.mxu0 0
    %1995 = vmatprep.mubr.bf16.mxu0 0
    %1996 = vmatmul.mubr.bf16.gmra.mrb[0].mxu0 %v1958
    %v1997 = vpop.f32.mrb[0].mxu0
    %v1998 = vadd.f32 %v198, %v1997
    %v1999 = vpop.f32.mrb[0].mxu0
    %v2000 = vpop.f32.mrb[0].mxu0
    %v2001 = vpop.f32.mrb[0].mxu0
    %2002 = vdwg.mxu0
    %v2003 = vsel %vm422, %v1949, -inf
    %2004 = vmax.xlane.f32.xlu0 %v2003
    %v2005 = vpop.xlane.xlu0 %2004
    %v2006 = vsel %vm422, %v1998, -inf
    %2007 = vmax.xlane.f32.xlu0 %v2006
    %v2008 = vpop.xlane.xlu0 %2007
    %v2009 = vsub.f32 %v1949, %v2005
    %v2010 = vsub.f32 %v1998, %v2008
    %v2011 = vmul.f32 %v2009, 1.442695
    %v2012 = vpow.pop %v2011
    %v2013 = vmul.f32 %v2010, 1.442695
    %v2014 = vpow.pop %v2013
    %v2015 = vsel %vm422, %v2012, 0.0
    %2016 = vadd.xlane.f32.xlu0 %v2015
    %v2017 = vpop.xlane.xlu0 %2016
    %v2018 = vsel %vm422, %v2014, 0.0
    %2019 = vadd.xlane.f32.xlu0 %v2018
    %v2020 = vpop.xlane.xlu0 %2019
    %v2021 = vrcp.pop %v2017
    %v2022 = vrcp.pop %v2020
    %v2023 = vmul.f32 %v2012, %v2021
    %v2024 = vmul.f32 %v2014, %v2022
    %v2025 = vpack.c.bf16 %v2023, %v2023
    %v2026 = vpack.c.bf16 %v2024, %v2024
    %v2028 = vsel %vm422, %v2025, 0
    %v2031 = vsel %vm450, %v1903, 0
    %2033 = vmatprep.subr.bf16.mxu0 0
    %2034 = vmatpush1.bf16.msra.mxu0 %v2031
    %2035 = vmatprep.subr.bf16.mxu0 0
    %2036 = vmatpush1.bf16.msra.mxu0 0
    %2037 = vmatprep.subr.bf16.mxu0 0
    %2038 = vmatpush1.bf16.msra.mxu0 0
    %2039 = vmatprep.subr.bf16.mxu0 0
    %2040 = vmatpush1.bf16.msra.mxu0 0
    %2041 = vmatprep.subr.bf16.mxu0 0
    %2042 = vmatpush1.bf16.msra.mxu0 0
    %2043 = vmatprep.subr.bf16.mxu0 0
    %2044 = vmatpush1.bf16.msra.mxu0 0
    %2045 = vmatprep.subr.bf16.mxu0 0
    %2046 = vmatpush1.bf16.msra.mxu0 0
    %2047 = vmatprep.subr.bf16.mxu0 0
    %2048 = vmatpush1.bf16.msra.mxu0 0
    %2049 = vmatprep.subr.bf16.mxu0 0
    %2050 = vmatpush1.bf16.msra.mxu0 0
    %2051 = vmatprep.subr.bf16.mxu0 0
    %2052 = vmatpush1.bf16.msra.mxu0 0
    %2053 = vmatprep.subr.bf16.mxu0 0
    %2054 = vmatpush1.bf16.msra.mxu0 0
    %2055 = vmatprep.subr.bf16.mxu0 0
    %2056 = vmatpush1.bf16.msra.mxu0 0
    %2057 = vmatprep.subr.bf16.mxu0 0
    %2058 = vmatpush1.bf16.msra.mxu0 0
    %2059 = vmatprep.subr.bf16.mxu0 0
    %2060 = vmatpush1.bf16.msra.mxu0 0
    %2061 = vmatprep.subr.bf16.mxu0 0
    %2062 = vmatpush1.bf16.msra.mxu0 0
    %2063 = vmatprep.subr.bf16.mxu0 0
    %2064 = vmatpush1.bf16.msra.mxu0 0
    %2065 = vmatprep.mubr.bf16.mxu0 0
    %2066 = vmatmul.mubr.bf16.gmra.mrb[0].mxu0 %v2028
    %v2067 = vpop.f32.mrb[0].mxu0
    %v2068 = vadd.f32 0.0, %v2067
    %v2069 = vpop.f32.mrb[0].mxu0
    %v2070 = vpop.f32.mrb[0].mxu0
    %v2071 = vpop.f32.mrb[0].mxu0
    %2072 = vdwg.mxu0
    %v2074 = vsel %vm422, %v2026, 0
    %v2077 = vsel %vm450, %v1904, 0
    %2079 = vmatprep.subr.bf16.mxu0 0
    %2080 = vmatpush1.bf16.msra.mxu0 %v2077
    %2081 = vmatprep.subr.bf16.mxu0 0
    %2082 = vmatpush1.bf16.msra.mxu0 0
    %2083 = vmatprep.subr.bf16.mxu0 0
    %2084 = vmatpush1.bf16.msra.mxu0 0
    %2085 = vmatprep.subr.bf16.mxu0 0
    %2086 = vmatpush1.bf16.msra.mxu0 0
    %2087 = vmatprep.subr.bf16.mxu0 0
    %2088 = vmatpush1.bf16.msra.mxu0 0
    %2089 = vmatprep.subr.bf16.mxu0 0
    %2090 = vmatpush1.bf16.msra.mxu0 0
    %2091 = vmatprep.subr.bf16.mxu0 0
    %2092 = vmatpush1.bf16.msra.mxu0 0
    %2093 = vmatprep.subr.bf16.mxu0 0
    %2094 = vmatpush1.bf16.msra.mxu0 0
    %2095 = vmatprep.subr.bf16.mxu0 0
    %2096 = vmatpush1.bf16.msra.mxu0 0
    %2097 = vmatprep.subr.bf16.mxu0 0
    %2098 = vmatpush1.bf16.msra.mxu0 0
    %2099 = vmatprep.subr.bf16.mxu0 0
    %2100 = vmatpush1.bf16.msra.mxu0 0
    %2101 = vmatprep.subr.bf16.mxu0 0
    %2102 = vmatpush1.bf16.msra.mxu0 0
    %2103 = vmatprep.subr.bf16.mxu0 0
    %2104 = vmatpush1.bf16.msra.mxu0 0
    %2105 = vmatprep.subr.bf16.mxu0 0
    %2106 = vmatpush1.bf16.msra.mxu0 0
    %2107 = vmatprep.subr.bf16.mxu0 0
    %2108 = vmatpush1.bf16.msra.mxu0 0
    %2109 = vmatprep.subr.bf16.mxu0 0
    %2110 = vmatpush1.bf16.msra.mxu0 0
    %2111 = vmatprep.mubr.bf16.mxu0 0
    %2112 = vmatmul.mubr.bf16.gmra.mrb[0].mxu0 %v2074
    %v2113 = vpop.f32.mrb[0].mxu0
    %v2114 = vadd.f32 0.0, %v2113
    %v2115 = vpop.f32.mrb[0].mxu0
    %v2116 = vpop.f32.mrb[0].mxu0
    %v2117 = vpop.f32.mrb[0].mxu0
    %2118 = vdwg.mxu0
    %v2119 = vpack.c.bf16 %v2114, %v2068
    %2121 = vrot.lane.b32.xlu0 %v1899, 112
    %v2122 = vpop.permute.xlu0 %2121
    %2123 = vrot.lane.b32.xlu0 %v1901, 48
    %v2124 = vpop.permute.xlu0 %2123
    %v2126 = vsel %vm326, %v2122, 0
    %v2129 = vsel %vm326, %v2124, 0
    %2131 = vmatprep.subr.bf16.mxu0 0
    %2132 = vmatpush1.bf16.xpose.msra.mxu0 %v2129
    %2133 = vmatprep.subr.bf16.mxu0 0
    %2134 = vmatpush1.bf16.xpose.msra.mxu0 0
    %2135 = vmatprep.subr.bf16.mxu0 0
    %2136 = vmatpush1.bf16.xpose.msra.mxu0 0
    %2137 = vmatprep.subr.bf16.mxu0 0
    %2138 = vmatpush1.bf16.xpose.msra.mxu0 0
    %2139 = vmatprep.subr.bf16.mxu0 0
    %2140 = vmatpush1.bf16.xpose.msra.mxu0 0
    %2141 = vmatprep.subr.bf16.mxu0 0
    %2142 = vmatpush1.bf16.xpose.msra.mxu0 0
    %2143 = vmatprep.subr.bf16.mxu0 0
    %2144 = vmatpush1.bf16.xpose.msra.mxu0 0
    %2145 = vmatprep.subr.bf16.mxu0 0
    %2146 = vmatpush1.bf16.xpose.msra.mxu0 0
    %2147 = vmatprep.subr.bf16.mxu0 0
    %2148 = vmatpush1.bf16.xpose.msra.mxu0 0
    %2149 = vmatprep.subr.bf16.mxu0 0
    %2150 = vmatpush1.bf16.xpose.msra.mxu0 0
    %2151 = vmatprep.subr.bf16.mxu0 0
    %2152 = vmatpush1.bf16.xpose.msra.mxu0 0
    %2153 = vmatprep.subr.bf16.mxu0 0
    %2154 = vmatpush1.bf16.xpose.msra.mxu0 0
    %2155 = vmatprep.subr.bf16.mxu0 0
    %2156 = vmatpush1.bf16.xpose.msra.mxu0 0
    %2157 = vmatprep.subr.bf16.mxu0 0
    %2158 = vmatpush1.bf16.xpose.msra.mxu0 0
    %2159 = vmatprep.subr.bf16.mxu0 0
    %2160 = vmatpush1.bf16.xpose.msra.mxu0 0
    %2161 = vmatprep.subr.bf16.mxu0 0
    %2162 = vmatpush1.bf16.xpose.msra.mxu0 0
    %2163 = vmatprep.mubr.bf16.mxu0 0
    %2164 = vmatmul.mubr.bf16.gmra.mrb[0].mxu0 %v2126
    %v2165 = vpop.f32.mrb[0].mxu0
    %v2166 = vadd.f32 %v194, %v2165
    %v2167 = vpop.f32.mrb[0].mxu0
    %v2168 = vpop.f32.mrb[0].mxu0
    %v2169 = vpop.f32.mrb[0].mxu0
    %2170 = vdwg.mxu0
    %2172 = vrot.lane.b32.xlu0 %v1900, 112
    %v2173 = vpop.permute.xlu0 %2172
    %2174 = vrot.lane.b32.xlu0 %v1902, 48
    %v2175 = vpop.permute.xlu0 %2174
    %v2177 = vsel %vm326, %v2173, 0
    %v2180 = vsel %vm326, %v2175, 0
    %2182 = vmatprep.subr.bf16.mxu0 0
    %2183 = vmatpush1.bf16.xpose.msra.mxu0 %v2180
    %2184 = vmatprep.subr.bf16.mxu0 0
    %2185 = vmatpush1.bf16.xpose.msra.mxu0 0
    %2186 = vmatprep.subr.bf16.mxu0 0
    %2187 = vmatpush1.bf16.xpose.msra.mxu0 0
    %2188 = vmatprep.subr.bf16.mxu0 0
    %2189 = vmatpush1.bf16.xpose.msra.mxu0 0
    %2190 = vmatprep.subr.bf16.mxu0 0
    %2191 = vmatpush1.bf16.xpose.msra.mxu0 0
    %2192 = vmatprep.subr.bf16.mxu0 0
    %2193 = vmatpush1.bf16.xpose.msra.mxu0 0
    %2194 = vmatprep.subr.bf16.mxu0 0
    %2195 = vmatpush1.bf16.xpose.msra.mxu0 0
    %2196 = vmatprep.subr.bf16.mxu0 0
    %2197 = vmatpush1.bf16.xpose.msra.mxu0 0
    %2198 = vmatprep.subr.bf16.mxu0 0
    %2199 = vmatpush1.bf16.xpose.msra.mxu0 0
    %2200 = vmatprep.subr.bf16.mxu0 0
    %2201 = vmatpush1.bf16.xpose.msra.mxu0 0
    %2202 = vmatprep.subr.bf16.mxu0 0
    %2203 = vmatpush1.bf16.xpose.msra.mxu0 0
    %2204 = vmatprep.subr.bf16.mxu0 0
    %2205 = vmatpush1.bf16.xpose.msra.mxu0 0
    %2206 = vmatprep.subr.bf16.mxu0 0
    %2207 = vmatpush1.bf16.xpose.msra.mxu0 0
    %2208 = vmatprep.subr.bf16.mxu0 0
    %2209 = vmatpush1.bf16.xpose.msra.mxu0 0
    %2210 = vmatprep.subr.bf16.mxu0 0
    %2211 = vmatpush1.bf16.xpose.msra.mxu0 0
    %2212 = vmatprep.subr.bf16.mxu0 0
    %2213 = vmatpush1.bf16.xpose.msra.mxu0 0
    %2214 = vmatprep.mubr.bf16.mxu0 0
    %2215 = vmatmul.mubr.bf16.gmra.mrb[0].mxu0 %v2177
    %v2216 = vpop.f32.mrb[0].mxu0
    %v2217 = vadd.f32 %v198, %v2216
    %v2218 = vpop.f32.mrb[0].mxu0
    %v2219 = vpop.f32.mrb[0].mxu0
    %v2220 = vpop.f32.mrb[0].mxu0
    %2221 = vdwg.mxu0
    %v2222 = vsel %vm422, %v2166, -inf
    %2223 = vmax.xlane.f32.xlu0 %v2222
    %v2224 = vpop.xlane.xlu0 %2223
    %v2225 = vsel %vm422, %v2217, -inf
    %2226 = vmax.xlane.f32.xlu0 %v2225
    %v2227 = vpop.xlane.xlu0 %2226
    %v2228 = vsub.f32 %v2166, %v2224
    %v2229 = vsub.f32 %v2217, %v2227
    %v2230 = vmul.f32 %v2228, 1.442695
    %v2231 = vpow.pop %v2230
    %v2232 = vmul.f32 %v2229, 1.442695
    %v2233 = vpow.pop %v2232
    %v2234 = vsel %vm422, %v2231, 0.0
    %2235 = vadd.xlane.f32.xlu0 %v2234
    %v2236 = vpop.xlane.xlu0 %2235
    %v2237 = vsel %vm422, %v2233, 0.0
    %2238 = vadd.xlane.f32.xlu0 %v2237
    %v2239 = vpop.xlane.xlu0 %2238
    %v2240 = vrcp.pop %v2236
    %v2241 = vrcp.pop %v2239
    %v2242 = vmul.f32 %v2231, %v2240
    %v2243 = vmul.f32 %v2233, %v2241
    %v2244 = vpack.c.bf16 %v2242, %v2242
    %v2245 = vpack.c.bf16 %v2243, %v2243
    %2247 = vrot.lane.b32.xlu0 %v1903, 112
    %v2248 = vpop.permute.xlu0 %2247
    %v2250 = vsel %vm422, %v2244, 0
    %v2253 = vsel %vm450, %v2248, 0
    %2255 = vmatprep.subr.bf16.mxu0 0
    %2256 = vmatpush1.bf16.msra.mxu0 %v2253
    %2257 = vmatprep.subr.bf16.mxu0 0
    %2258 = vmatpush1.bf16.msra.mxu0 0
    %2259 = vmatprep.subr.bf16.mxu0 0
    %2260 = vmatpush1.bf16.msra.mxu0 0
    %2261 = vmatprep.subr.bf16.mxu0 0
    %2262 = vmatpush1.bf16.msra.mxu0 0
    %2263 = vmatprep.subr.bf16.mxu0 0
    %2264 = vmatpush1.bf16.msra.mxu0 0
    %2265 = vmatprep.subr.bf16.mxu0 0
    %2266 = vmatpush1.bf16.msra.mxu0 0
    %2267 = vmatprep.subr.bf16.mxu0 0
    %2268 = vmatpush1.bf16.msra.mxu0 0
    %2269 = vmatprep.subr.bf16.mxu0 0
    %2270 = vmatpush1.bf16.msra.mxu0 0
    %2271 = vmatprep.subr.bf16.mxu0 0
    %2272 = vmatpush1.bf16.msra.mxu0 0
    %2273 = vmatprep.subr.bf16.mxu0 0
    %2274 = vmatpush1.bf16.msra.mxu0 0
    %2275 = vmatprep.subr.bf16.mxu0 0
    %2276 = vmatpush1.bf16.msra.mxu0 0
    %2277 = vmatprep.subr.bf16.mxu0 0
    %2278 = vmatpush1.bf16.msra.mxu0 0
    %2279 = vmatprep.subr.bf16.mxu0 0
    %2280 = vmatpush1.bf16.msra.mxu0 0
    %2281 = vmatprep.subr.bf16.mxu0 0
    %2282 = vmatpush1.bf16.msra.mxu0 0
    %2283 = vmatprep.subr.bf16.mxu0 0
    %2284 = vmatpush1.bf16.msra.mxu0 0
    %2285 = vmatprep.subr.bf16.mxu0 0
    %2286 = vmatpush1.bf16.msra.mxu0 0
    %2287 = vmatprep.mubr.bf16.mxu0 0
    %2288 = vmatmul.mubr.bf16.gmra.mrb[0].mxu0 %v2250
    %v2289 = vpop.f32.mrb[0].mxu0
    %v2290 = vadd.f32 0.0, %v2289
    %v2291 = vpop.f32.mrb[0].mxu0
    %v2292 = vpop.f32.mrb[0].mxu0
    %v2293 = vpop.f32.mrb[0].mxu0
    %2294 = vdwg.mxu0
    %2296 = vrot.lane.b32.xlu0 %v1904, 112
    %v2297 = vpop.permute.xlu0 %2296
    %v2299 = vsel %vm422, %v2245, 0
    %v2302 = vsel %vm450, %v2297, 0
    %2304 = vmatprep.subr.bf16.mxu0 0
    %2305 = vmatpush1.bf16.msra.mxu0 %v2302
    %2306 = vmatprep.subr.bf16.mxu0 0
    %2307 = vmatpush1.bf16.msra.mxu0 0
    %2308 = vmatprep.subr.bf16.mxu0 0
    %2309 = vmatpush1.bf16.msra.mxu0 0
    %2310 = vmatprep.subr.bf16.mxu0 0
    %2311 = vmatpush1.bf16.msra.mxu0 0
    %2312 = vmatprep.subr.bf16.mxu0 0
    %2313 = vmatpush1.bf16.msra.mxu0 0
    %2314 = vmatprep.subr.bf16.mxu0 0
    %2315 = vmatpush1.bf16.msra.mxu0 0
    %2316 = vmatprep.subr.bf16.mxu0 0
    %2317 = vmatpush1.bf16.msra.mxu0 0
    %2318 = vmatprep.subr.bf16.mxu0 0
    %2319 = vmatpush1.bf16.msra.mxu0 0
    %2320 = vmatprep.subr.bf16.mxu0 0
    %2321 = vmatpush1.bf16.msra.mxu0 0
    %2322 = vmatprep.subr.bf16.mxu0 0
    %2323 = vmatpush1.bf16.msra.mxu0 0
    %2324 = vmatprep.subr.bf16.mxu0 0
    %2325 = vmatpush1.bf16.msra.mxu0 0
    %2326 = vmatprep.subr.bf16.mxu0 0
    %2327 = vmatpush1.bf16.msra.mxu0 0
    %2328 = vmatprep.subr.bf16.mxu0 0
    %2329 = vmatpush1.bf16.msra.mxu0 0
    %2330 = vmatprep.subr.bf16.mxu0 0
    %2331 = vmatpush1.bf16.msra.mxu0 0
    %2332 = vmatprep.subr.bf16.mxu0 0
    %2333 = vmatpush1.bf16.msra.mxu0 0
    %2334 = vmatprep.subr.bf16.mxu0 0
    %2335 = vmatpush1.bf16.msra.mxu0 0
    %2336 = vmatprep.mubr.bf16.mxu0 0
    %2337 = vmatmul.mubr.bf16.gmra.mrb[0].mxu0 %v2299
    %v2338 = vpop.f32.mrb[0].mxu0
    %v2339 = vadd.f32 0.0, %v2338
    %v2340 = vpop.f32.mrb[0].mxu0
    %v2341 = vpop.f32.mrb[0].mxu0
    %v2342 = vpop.f32.mrb[0].mxu0
    %2343 = vdwg.mxu0
    %v2344 = vpack.c.bf16 %v2339, %v2290
    %v2347 = vunpack.c.l.b16 %v1787
    %v2348 = vunpack.c.l.b16 %v1788
    %v2349 = vpack.c.b16 %v2348, %v2347
    %v2352 = vsel %vm326, %v2344, 0
    %2354 = vmatprep.subr.bf16.mxu0 0
    %2355 = vmatpush1.bf16.msra.mxu0 %v2349
    %2356 = vmatprep.subr.bf16.mxu0 0
    %2357 = vmatpush1.bf16.msra.mxu0 0
    %2358 = vmatprep.subr.bf16.mxu0 0
    %2359 = vmatpush1.bf16.msra.mxu0 0
    %2360 = vmatprep.subr.bf16.mxu0 0
    %2361 = vmatpush1.bf16.msra.mxu0 0
    %2362 = vmatprep.subr.bf16.mxu0 0
    %2363 = vmatpush1.bf16.msra.mxu0 0
    %2364 = vmatprep.subr.bf16.mxu0 0
    %2365 = vmatpush1.bf16.msra.mxu0 0
    %2366 = vmatprep.subr.bf16.mxu0 0
    %2367 = vmatpush1.bf16.msra.mxu0 0
    %2368 = vmatprep.subr.bf16.mxu0 0
    %2369 = vmatpush1.bf16.msra.mxu0 0
    %2370 = vmatprep.subr.bf16.mxu0 0
    %2371 = vmatpush1.bf16.msra.mxu0 0
    %2372 = vmatprep.subr.bf16.mxu0 0
    %2373 = vmatpush1.bf16.msra.mxu0 0
    %2374 = vmatprep.subr.bf16.mxu0 0
    %2375 = vmatpush1.bf16.msra.mxu0 0
    %2376 = vmatprep.subr.bf16.mxu0 0
    %2377 = vmatpush1.bf16.msra.mxu0 0
    %2378 = vmatprep.subr.bf16.mxu0 0
    %2379 = vmatpush1.bf16.msra.mxu0 0
    %2380 = vmatprep.subr.bf16.mxu0 0
    %2381 = vmatpush1.bf16.msra.mxu0 0
    %2382 = vmatprep.subr.bf16.mxu0 0
    %2383 = vmatpush1.bf16.msra.mxu0 0
    %2384 = vmatprep.subr.bf16.mxu0 0
    %2385 = vmatpush1.bf16.msra.mxu0 0
    %2386 = vmatprep.mubr.bf16.mxu0 0
    %2387 = vmatmul.mubr.bf16.gmra.mrb[0].mxu0 %v2352
    %v2388 = vpop.f32.mrb[0].mxu0
    %v2389 = vadd.f32 0.0, %v2388
    %v2390 = vpop.f32.mrb[0].mxu0
    %v2391 = vpop.f32.mrb[0].mxu0
    %v2392 = vadd.f32 0.0, %v2391
    %v2393 = vpop.f32.mrb[0].mxu0
    %2394 = vdwg.mxu0
    %v2397 = vunpack.c.l.b16 %v1785
    %v2398 = vunpack.c.l.b16 %v1786
    %v2399 = vpack.c.b16 %v2398, %v2397
    %v2402 = vsel %vm326, %v2119, 0
    %2404 = vmatprep.subr.bf16.mxu0 0
    %2405 = vmatpush1.bf16.msra.mxu0 %v2399
    %2406 = vmatprep.subr.bf16.mxu0 0
    %2407 = vmatpush1.bf16.msra.mxu0 0
    %2408 = vmatprep.subr.bf16.mxu0 0
    %2409 = vmatpush1.bf16.msra.mxu0 0
    %2410 = vmatprep.subr.bf16.mxu0 0
    %2411 = vmatpush1.bf16.msra.mxu0 0
    %2412 = vmatprep.subr.bf16.mxu0 0
    %2413 = vmatpush1.bf16.msra.mxu0 0
    %2414 = vmatprep.subr.bf16.mxu0 0
    %2415 = vmatpush1.bf16.msra.mxu0 0
    %2416 = vmatprep.subr.bf16.mxu0 0
    %2417 = vmatpush1.bf16.msra.mxu0 0
    %2418 = vmatprep.subr.bf16.mxu0 0
    %2419 = vmatpush1.bf16.msra.mxu0 0
    %2420 = vmatprep.subr.bf16.mxu0 0
    %2421 = vmatpush1.bf16.msra.mxu0 0
    %2422 = vmatprep.subr.bf16.mxu0 0
    %2423 = vmatpush1.bf16.msra.mxu0 0
    %2424 = vmatprep.subr.bf16.mxu0 0
    %2425 = vmatpush1.bf16.msra.mxu0 0
    %2426 = vmatprep.subr.bf16.mxu0 0
    %2427 = vmatpush1.bf16.msra.mxu0 0
    %2428 = vmatprep.subr.bf16.mxu0 0
    %2429 = vmatpush1.bf16.msra.mxu0 0
    %2430 = vmatprep.subr.bf16.mxu0 0
    %2431 = vmatpush1.bf16.msra.mxu0 0
    %2432 = vmatprep.subr.bf16.mxu0 0
    %2433 = vmatpush1.bf16.msra.mxu0 0
    %2434 = vmatprep.subr.bf16.mxu0 0
    %2435 = vmatpush1.bf16.msra.mxu0 0
    %2436 = vmatprep.mubr.bf16.mxu0 0
    %2437 = vmatmul.mubr.bf16.gmra.mrb[0].mxu0 %v2402
    %v2438 = vpop.f32.mrb[0].mxu0
    %v2439 = vadd.f32 %v2389, %v2438
    %v2440 = vpop.f32.mrb[0].mxu0
    %v2441 = vpop.f32.mrb[0].mxu0
    %v2442 = vadd.f32 %v2392, %v2441
    %v2443 = vpop.f32.mrb[0].mxu0
    %2444 = vdwg.mxu0
    %2445 = vrot.lane.b32.xlu0 %v1899, 96
    %v2446 = vpop.permute.xlu0 %2445
    %2447 = vrot.lane.b32.xlu0 %v1901, 32
    %v2448 = vpop.permute.xlu0 %2447
    %v2450 = vsel %vm326, %v2446, 0
    %v2453 = vsel %vm326, %v2448, 0
    %2455 = vmatprep.subr.bf16.mxu0 0
    %2456 = vmatpush1.bf16.xpose.msra.mxu0 %v2453
    %2457 = vmatprep.subr.bf16.mxu0 0
    %2458 = vmatpush1.bf16.xpose.msra.mxu0 0
    %2459 = vmatprep.subr.bf16.mxu0 0
    %2460 = vmatpush1.bf16.xpose.msra.mxu0 0
    %2461 = vmatprep.subr.bf16.mxu0 0
    %2462 = vmatpush1.bf16.xpose.msra.mxu0 0
    %2463 = vmatprep.subr.bf16.mxu0 0
    %2464 = vmatpush1.bf16.xpose.msra.mxu0 0
    %2465 = vmatprep.subr.bf16.mxu0 0
    %2466 = vmatpush1.bf16.xpose.msra.mxu0 0
    %2467 = vmatprep.subr.bf16.mxu0 0
    %2468 = vmatpush1.bf16.xpose.msra.mxu0 0
    %2469 = vmatprep.subr.bf16.mxu0 0
    %2470 = vmatpush1.bf16.xpose.msra.mxu0 0
    %2471 = vmatprep.subr.bf16.mxu0 0
    %2472 = vmatpush1.bf16.xpose.msra.mxu0 0
    %2473 = vmatprep.subr.bf16.mxu0 0
    %2474 = vmatpush1.bf16.xpose.msra.mxu0 0
    %2475 = vmatprep.subr.bf16.mxu0 0
    %2476 = vmatpush1.bf16.xpose.msra.mxu0 0
    %2477 = vmatprep.subr.bf16.mxu0 0
    %2478 = vmatpush1.bf16.xpose.msra.mxu0 0
    %2479 = vmatprep.subr.bf16.mxu0 0
    %2480 = vmatpush1.bf16.xpose.msra.mxu0 0
    %2481 = vmatprep.subr.bf16.mxu0 0
    %2482 = vmatpush1.bf16.xpose.msra.mxu0 0
    %2483 = vmatprep.subr.bf16.mxu0 0
    %2484 = vmatpush1.bf16.xpose.msra.mxu0 0
    %2485 = vmatprep.subr.bf16.mxu0 0
    %2486 = vmatpush1.bf16.xpose.msra.mxu0 0
    %2487 = vmatprep.mubr.bf16.mxu0 0
    %2488 = vmatmul.mubr.bf16.gmra.mrb[0].mxu0 %v2450
    %v2489 = vpop.f32.mrb[0].mxu0
    %v2490 = vadd.f32 %v194, %v2489
    %v2491 = vpop.f32.mrb[0].mxu0
    %v2492 = vpop.f32.mrb[0].mxu0
    %v2493 = vpop.f32.mrb[0].mxu0
    %2494 = vdwg.mxu0
    %2495 = vrot.lane.b32.xlu0 %v1900, 96
    %v2496 = vpop.permute.xlu0 %2495
    %2497 = vrot.lane.b32.xlu0 %v1902, 32
    %v2498 = vpop.permute.xlu0 %2497
    %v2500 = vsel %vm326, %v2496, 0
    %v2503 = vsel %vm326, %v2498, 0
    %2505 = vmatprep.subr.bf16.mxu0 0
    %2506 = vmatpush1.bf16.xpose.msra.mxu0 %v2503
    %2507 = vmatprep.subr.bf16.mxu0 0
    %2508 = vmatpush1.bf16.xpose.msra.mxu0 0
    %2509 = vmatprep.subr.bf16.mxu0 0
    %2510 = vmatpush1.bf16.xpose.msra.mxu0 0
    %2511 = vmatprep.subr.bf16.mxu0 0
    %2512 = vmatpush1.bf16.xpose.msra.mxu0 0
    %2513 = vmatprep.subr.bf16.mxu0 0
    %2514 = vmatpush1.bf16.xpose.msra.mxu0 0
    %2515 = vmatprep.subr.bf16.mxu0 0
    %2516 = vmatpush1.bf16.xpose.msra.mxu0 0
    %2517 = vmatprep.subr.bf16.mxu0 0
    %2518 = vmatpush1.bf16.xpose.msra.mxu0 0
    %2519 = vmatprep.subr.bf16.mxu0 0
    %2520 = vmatpush1.bf16.xpose.msra.mxu0 0
    %2521 = vmatprep.subr.bf16.mxu0 0
    %2522 = vmatpush1.bf16.xpose.msra.mxu0 0
    %2523 = vmatprep.subr.bf16.mxu0 0
    %2524 = vmatpush1.bf16.xpose.msra.mxu0 0
    %2525 = vmatprep.subr.bf16.mxu0 0
    %2526 = vmatpush1.bf16.xpose.msra.mxu0 0
    %2527 = vmatprep.subr.bf16.mxu0 0
    %2528 = vmatpush1.bf16.xpose.msra.mxu0 0
    %2529 = vmatprep.subr.bf16.mxu0 0
    %2530 = vmatpush1.bf16.xpose.msra.mxu0 0
    %2531 = vmatprep.subr.bf16.mxu0 0
    %2532 = vmatpush1.bf16.xpose.msra.mxu0 0
    %2533 = vmatprep.subr.bf16.mxu0 0
    %2534 = vmatpush1.bf16.xpose.msra.mxu0 0
    %2535 = vmatprep.subr.bf16.mxu0 0
    %2536 = vmatpush1.bf16.xpose.msra.mxu0 0
    %2537 = vmatprep.mubr.bf16.mxu0 0
    %2538 = vmatmul.mubr.bf16.gmra.mrb[0].mxu0 %v2500
    %v2539 = vpop.f32.mrb[0].mxu0
    %v2540 = vadd.f32 %v198, %v2539
    %v2541 = vpop.f32.mrb[0].mxu0
    %v2542 = vpop.f32.mrb[0].mxu0
    %v2543 = vpop.f32.mrb[0].mxu0
    %2544 = vdwg.mxu0
    %v2545 = vsel %vm422, %v2490, -inf
    %2546 = vmax.xlane.f32.xlu0 %v2545
    %v2547 = vpop.xlane.xlu0 %2546
    %v2548 = vsel %vm422, %v2540, -inf
    %2549 = vmax.xlane.f32.xlu0 %v2548
    %v2550 = vpop.xlane.xlu0 %2549
    %v2551 = vsub.f32 %v2490, %v2547
    %v2552 = vsub.f32 %v2540, %v2550
    %v2553 = vmul.f32 %v2551, 1.442695
    %v2554 = vpow.pop %v2553
    %v2555 = vmul.f32 %v2552, 1.442695
    %v2556 = vpow.pop %v2555
    %v2557 = vsel %vm422, %v2554, 0.0
    %2558 = vadd.xlane.f32.xlu0 %v2557
    %v2559 = vpop.xlane.xlu0 %2558
    %v2560 = vsel %vm422, %v2556, 0.0
    %2561 = vadd.xlane.f32.xlu0 %v2560
    %v2562 = vpop.xlane.xlu0 %2561
    %v2563 = vrcp.pop %v2559
    %v2564 = vrcp.pop %v2562
    %v2565 = vmul.f32 %v2554, %v2563
    %v2566 = vmul.f32 %v2556, %v2564
    %v2567 = vpack.c.bf16 %v2565, %v2565
    %v2568 = vpack.c.bf16 %v2566, %v2566
    %2569 = vrot.lane.b32.xlu0 %v1903, 96
    %v2570 = vpop.permute.xlu0 %2569
    %v2572 = vsel %vm422, %v2567, 0
    %v2575 = vsel %vm450, %v2570, 0
    %2577 = vmatprep.subr.bf16.mxu0 0
    %2578 = vmatpush1.bf16.msra.mxu0 %v2575
    %2579 = vmatprep.subr.bf16.mxu0 0
    %2580 = vmatpush1.bf16.msra.mxu0 0
    %2581 = vmatprep.subr.bf16.mxu0 0
    %2582 = vmatpush1.bf16.msra.mxu0 0
    %2583 = vmatprep.subr.bf16.mxu0 0
    %2584 = vmatpush1.bf16.msra.mxu0 0
    %2585 = vmatprep.subr.bf16.mxu0 0
    %2586 = vmatpush1.bf16.msra.mxu0 0
    %2587 = vmatprep.subr.bf16.mxu0 0
    %2588 = vmatpush1.bf16.msra.mxu0 0
    %2589 = vmatprep.subr.bf16.mxu0 0
    %2590 = vmatpush1.bf16.msra.mxu0 0
    %2591 = vmatprep.subr.bf16.mxu0 0
    %2592 = vmatpush1.bf16.msra.mxu0 0
    %2593 = vmatprep.subr.bf16.mxu0 0
    %2594 = vmatpush1.bf16.msra.mxu0 0
    %2595 = vmatprep.subr.bf16.mxu0 0
    %2596 = vmatpush1.bf16.msra.mxu0 0
    %2597 = vmatprep.subr.bf16.mxu0 0
    %2598 = vmatpush1.bf16.msra.mxu0 0
    %2599 = vmatprep.subr.bf16.mxu0 0
    %2600 = vmatpush1.bf16.msra.mxu0 0
    %2601 = vmatprep.subr.bf16.mxu0 0
    %2602 = vmatpush1.bf16.msra.mxu0 0
    %2603 = vmatprep.subr.bf16.mxu0 0
    %2604 = vmatpush1.bf16.msra.mxu0 0
    %2605 = vmatprep.subr.bf16.mxu0 0
    %2606 = vmatpush1.bf16.msra.mxu0 0
    %2607 = vmatprep.subr.bf16.mxu0 0
    %2608 = vmatpush1.bf16.msra.mxu0 0
    %2609 = vmatprep.mubr.bf16.mxu0 0
    %2610 = vmatmul.mubr.bf16.gmra.mrb[0].mxu0 %v2572
    %v2611 = vpop.f32.mrb[0].mxu0
    %v2612 = vadd.f32 0.0, %v2611
    %v2613 = vpop.f32.mrb[0].mxu0
    %v2614 = vpop.f32.mrb[0].mxu0
    %v2615 = vpop.f32.mrb[0].mxu0
    %2616 = vdwg.mxu0
    %2617 = vrot.lane.b32.xlu0 %v1904, 96
    %v2618 = vpop.permute.xlu0 %2617
    %v2620 = vsel %vm422, %v2568, 0
    %v2623 = vsel %vm450, %v2618, 0
    %2625 = vmatprep.subr.bf16.mxu0 0
    %2626 = vmatpush1.bf16.msra.mxu0 %v2623
    %2627 = vmatprep.subr.bf16.mxu0 0
    %2628 = vmatpush1.bf16.msra.mxu0 0
    %2629 = vmatprep.subr.bf16.mxu0 0
    %2630 = vmatpush1.bf16.msra.mxu0 0
    %2631 = vmatprep.subr.bf16.mxu0 0
    %2632 = vmatpush1.bf16.msra.mxu0 0
    %2633 = vmatprep.subr.bf16.mxu0 0
    %2634 = vmatpush1.bf16.msra.mxu0 0
    %2635 = vmatprep.subr.bf16.mxu0 0
    %2636 = vmatpush1.bf16.msra.mxu0 0
    %2637 = vmatprep.subr.bf16.mxu0 0
    %2638 = vmatpush1.bf16.msra.mxu0 0
    %2639 = vmatprep.subr.bf16.mxu0 0
    %2640 = vmatpush1.bf16.msra.mxu0 0
    %2641 = vmatprep.subr.bf16.mxu0 0
    %2642 = vmatpush1.bf16.msra.mxu0 0
    %2643 = vmatprep.subr.bf16.mxu0 0
    %2644 = vmatpush1.bf16.msra.mxu0 0
    %2645 = vmatprep.subr.bf16.mxu0 0
    %2646 = vmatpush1.bf16.msra.mxu0 0
    %2647 = vmatprep.subr.bf16.mxu0 0
    %2648 = vmatpush1.bf16.msra.mxu0 0
    %2649 = vmatprep.subr.bf16.mxu0 0
    %2650 = vmatpush1.bf16.msra.mxu0 0
    %2651 = vmatprep.subr.bf16.mxu0 0
    %2652 = vmatpush1.bf16.msra.mxu0 0
    %2653 = vmatprep.subr.bf16.mxu0 0
    %2654 = vmatpush1.bf16.msra.mxu0 0
    %2655 = vmatprep.subr.bf16.mxu0 0
    %2656 = vmatpush1.bf16.msra.mxu0 0
    %2657 = vmatprep.mubr.bf16.mxu0 0
    %2658 = vmatmul.mubr.bf16.gmra.mrb[0].mxu0 %v2620
    %v2659 = vpop.f32.mrb[0].mxu0
    %v2660 = vadd.f32 0.0, %v2659
    %v2661 = vpop.f32.mrb[0].mxu0
    %v2662 = vpop.f32.mrb[0].mxu0
    %v2663 = vpop.f32.mrb[0].mxu0
    %2664 = vdwg.mxu0
    %v2665 = vpack.c.bf16 %v2660, %v2612
    %v2668 = vunpack.c.l.b16 %v1789
    %v2669 = vunpack.c.l.b16 %v1790
    %v2670 = vpack.c.b16 %v2669, %v2668
    %v2673 = vsel %vm326, %v2665, 0
    %2675 = vmatprep.subr.bf16.mxu0 0
    %2676 = vmatpush1.bf16.msra.mxu0 %v2670
    %2677 = vmatprep.subr.bf16.mxu0 0
    %2678 = vmatpush1.bf16.msra.mxu0 0
    %2679 = vmatprep.subr.bf16.mxu0 0
    %2680 = vmatpush1.bf16.msra.mxu0 0
    %2681 = vmatprep.subr.bf16.mxu0 0
    %2682 = vmatpush1.bf16.msra.mxu0 0
    %2683 = vmatprep.subr.bf16.mxu0 0
    %2684 = vmatpush1.bf16.msra.mxu0 0
    %2685 = vmatprep.subr.bf16.mxu0 0
    %2686 = vmatpush1.bf16.msra.mxu0 0
    %2687 = vmatprep.subr.bf16.mxu0 0
    %2688 = vmatpush1.bf16.msra.mxu0 0
    %2689 = vmatprep.subr.bf16.mxu0 0
    %2690 = vmatpush1.bf16.msra.mxu0 0
    %2691 = vmatprep.subr.bf16.mxu0 0
    %2692 = vmatpush1.bf16.msra.mxu0 0
    %2693 = vmatprep.subr.bf16.mxu0 0
    %2694 = vmatpush1.bf16.msra.mxu0 0
    %2695 = vmatprep.subr.bf16.mxu0 0
    %2696 = vmatpush1.bf16.msra.mxu0 0
    %2697 = vmatprep.subr.bf16.mxu0 0
    %2698 = vmatpush1.bf16.msra.mxu0 0
    %2699 = vmatprep.subr.bf16.mxu0 0
    %2700 = vmatpush1.bf16.msra.mxu0 0
    %2701 = vmatprep.subr.bf16.mxu0 0
    %2702 = vmatpush1.bf16.msra.mxu0 0
    %2703 = vmatprep.subr.bf16.mxu0 0
    %2704 = vmatpush1.bf16.msra.mxu0 0
    %2705 = vmatprep.subr.bf16.mxu0 0
    %2706 = vmatpush1.bf16.msra.mxu0 0
    %2707 = vmatprep.mubr.bf16.mxu0 0
    %2708 = vmatmul.mubr.bf16.gmra.mrb[0].mxu0 %v2673
    %v2709 = vpop.f32.mrb[0].mxu0
    %v2710 = vadd.f32 0.0, %v2709
    %v2711 = vpop.f32.mrb[0].mxu0
    %v2712 = vpop.f32.mrb[0].mxu0
    %v2713 = vadd.f32 0.0, %v2712
    %v2714 = vpop.f32.mrb[0].mxu0
    %2715 = vdwg.mxu0
    %v2716 = vadd.f32 %v2439, %v2710
    %v2717 = vadd.f32 %v2442, %v2713
    %2718 = vrot.lane.b32.xlu0 %v1899, 80
    %v2719 = vpop.permute.xlu0 %2718
    %2720 = vrot.lane.b32.xlu0 %v1901, 16
    %v2721 = vpop.permute.xlu0 %2720
    %v2723 = vsel %vm326, %v2719, 0
    %v2726 = vsel %vm326, %v2721, 0
    %2728 = vmatprep.subr.bf16.mxu0 0
    %2729 = vmatpush1.bf16.xpose.msra.mxu0 %v2726
    %2730 = vmatprep.subr.bf16.mxu0 0
    %2731 = vmatpush1.bf16.xpose.msra.mxu0 0
    %2732 = vmatprep.subr.bf16.mxu0 0
    %2733 = vmatpush1.bf16.xpose.msra.mxu0 0
    %2734 = vmatprep.subr.bf16.mxu0 0
    %2735 = vmatpush1.bf16.xpose.msra.mxu0 0
    %2736 = vmatprep.subr.bf16.mxu0 0
    %2737 = vmatpush1.bf16.xpose.msra.mxu0 0
    %2738 = vmatprep.subr.bf16.mxu0 0
    %2739 = vmatpush1.bf16.xpose.msra.mxu0 0
    %2740 = vmatprep.subr.bf16.mxu0 0
    %2741 = vmatpush1.bf16.xpose.msra.mxu0 0
    %2742 = vmatprep.subr.bf16.mxu0 0
    %2743 = vmatpush1.bf16.xpose.msra.mxu0 0
    %2744 = vmatprep.subr.bf16.mxu0 0
    %2745 = vmatpush1.bf16.xpose.msra.mxu0 0
    %2746 = vmatprep.subr.bf16.mxu0 0
    %2747 = vmatpush1.bf16.xpose.msra.mxu0 0
    %2748 = vmatprep.subr.bf16.mxu0 0
    %2749 = vmatpush1.bf16.xpose.msra.mxu0 0
    %2750 = vmatprep.subr.bf16.mxu0 0
    %2751 = vmatpush1.bf16.xpose.msra.mxu0 0
    %2752 = vmatprep.subr.bf16.mxu0 0
    %2753 = vmatpush1.bf16.xpose.msra.mxu0 0
    %2754 = vmatprep.subr.bf16.mxu0 0
    %2755 = vmatpush1.bf16.xpose.msra.mxu0 0
    %2756 = vmatprep.subr.bf16.mxu0 0
    %2757 = vmatpush1.bf16.xpose.msra.mxu0 0
    %2758 = vmatprep.subr.bf16.mxu0 0
    %2759 = vmatpush1.bf16.xpose.msra.mxu0 0
    %2760 = vmatprep.mubr.bf16.mxu0 0
    %2761 = vmatmul.mubr.bf16.gmra.mrb[0].mxu0 %v2723
    %v2762 = vpop.f32.mrb[0].mxu0
    %v2763 = vadd.f32 %v194, %v2762
    %v2764 = vpop.f32.mrb[0].mxu0
    %v2765 = vpop.f32.mrb[0].mxu0
    %v2766 = vpop.f32.mrb[0].mxu0
    %2767 = vdwg.mxu0
    %2768 = vrot.lane.b32.xlu0 %v1900, 80
    %v2769 = vpop.permute.xlu0 %2768
    %2770 = vrot.lane.b32.xlu0 %v1902, 16
    %v2771 = vpop.permute.xlu0 %2770
    %v2773 = vsel %vm326, %v2769, 0
    %v2776 = vsel %vm326, %v2771, 0
    %2778 = vmatprep.subr.bf16.mxu0 0
    %2779 = vmatpush1.bf16.xpose.msra.mxu0 %v2776
    %2780 = vmatprep.subr.bf16.mxu0 0
    %2781 = vmatpush1.bf16.xpose.msra.mxu0 0
    %2782 = vmatprep.subr.bf16.mxu0 0
    %2783 = vmatpush1.bf16.xpose.msra.mxu0 0
    %2784 = vmatprep.subr.bf16.mxu0 0
    %2785 = vmatpush1.bf16.xpose.msra.mxu0 0
    %2786 = vmatprep.subr.bf16.mxu0 0
    %2787 = vmatpush1.bf16.xpose.msra.mxu0 0
    %2788 = vmatprep.subr.bf16.mxu0 0
    %2789 = vmatpush1.bf16.xpose.msra.mxu0 0
    %2790 = vmatprep.subr.bf16.mxu0 0
    %2791 = vmatpush1.bf16.xpose.msra.mxu0 0
    %2792 = vmatprep.subr.bf16.mxu0 0
    %2793 = vmatpush1.bf16.xpose.msra.mxu0 0
    %2794 = vmatprep.subr.bf16.mxu0 0
    %2795 = vmatpush1.bf16.xpose.msra.mxu0 0
    %2796 = vmatprep.subr.bf16.mxu0 0
    %2797 = vmatpush1.bf16.xpose.msra.mxu0 0
    %2798 = vmatprep.subr.bf16.mxu0 0
    %2799 = vmatpush1.bf16.xpose.msra.mxu0 0
    %2800 = vmatprep.subr.bf16.mxu0 0
    %2801 = vmatpush1.bf16.xpose.msra.mxu0 0
    %2802 = vmatprep.subr.bf16.mxu0 0
    %2803 = vmatpush1.bf16.xpose.msra.mxu0 0
    %2804 = vmatprep.subr.bf16.mxu0 0
    %2805 = vmatpush1.bf16.xpose.msra.mxu0 0
    %2806 = vmatprep.subr.bf16.mxu0 0
    %2807 = vmatpush1.bf16.xpose.msra.mxu0 0
    %2808 = vmatprep.subr.bf16.mxu0 0
    %2809 = vmatpush1.bf16.xpose.msra.mxu0 0
    %2810 = vmatprep.mubr.bf16.mxu0 0
    %2811 = vmatmul.mubr.bf16.gmra.mrb[0].mxu0 %v2773
    %v2812 = vpop.f32.mrb[0].mxu0
    %v2813 = vadd.f32 %v198, %v2812
    %v2814 = vpop.f32.mrb[0].mxu0
    %v2815 = vpop.f32.mrb[0].mxu0
    %v2816 = vpop.f32.mrb[0].mxu0
    %2817 = vdwg.mxu0
    %v2818 = vsel %vm422, %v2763, -inf
    %2819 = vmax.xlane.f32.xlu0 %v2818
    %v2820 = vpop.xlane.xlu0 %2819
    %v2821 = vsel %vm422, %v2813, -inf
    %2822 = vmax.xlane.f32.xlu0 %v2821
    %v2823 = vpop.xlane.xlu0 %2822
    %v2824 = vsub.f32 %v2763, %v2820
    %v2825 = vsub.f32 %v2813, %v2823
    %v2826 = vmul.f32 %v2824, 1.442695
    %v2827 = vpow.pop %v2826
    %v2828 = vmul.f32 %v2825, 1.442695
    %v2829 = vpow.pop %v2828
    %v2830 = vsel %vm422, %v2827, 0.0
    %2831 = vadd.xlane.f32.xlu0 %v2830
    %v2832 = vpop.xlane.xlu0 %2831
    %v2833 = vsel %vm422, %v2829, 0.0
    %2834 = vadd.xlane.f32.xlu0 %v2833
    %v2835 = vpop.xlane.xlu0 %2834
    %v2836 = vrcp.pop %v2832
    %v2837 = vrcp.pop %v2835
    %v2838 = vmul.f32 %v2827, %v2836
    %v2839 = vmul.f32 %v2829, %v2837
    %v2840 = vpack.c.bf16 %v2838, %v2838
    %v2841 = vpack.c.bf16 %v2839, %v2839
    %2842 = vrot.lane.b32.xlu0 %v1903, 80
    %v2843 = vpop.permute.xlu0 %2842
    %v2845 = vsel %vm422, %v2840, 0
    %v2848 = vsel %vm450, %v2843, 0
    %2850 = vmatprep.subr.bf16.mxu0 0
    %2851 = vmatpush1.bf16.msra.mxu0 %v2848
    %2852 = vmatprep.subr.bf16.mxu0 0
    %2853 = vmatpush1.bf16.msra.mxu0 0
    %2854 = vmatprep.subr.bf16.mxu0 0
    %2855 = vmatpush1.bf16.msra.mxu0 0
    %2856 = vmatprep.subr.bf16.mxu0 0
    %2857 = vmatpush1.bf16.msra.mxu0 0
    %2858 = vmatprep.subr.bf16.mxu0 0
    %2859 = vmatpush1.bf16.msra.mxu0 0
    %2860 = vmatprep.subr.bf16.mxu0 0
    %2861 = vmatpush1.bf16.msra.mxu0 0
    %2862 = vmatprep.subr.bf16.mxu0 0
    %2863 = vmatpush1.bf16.msra.mxu0 0
    %2864 = vmatprep.subr.bf16.mxu0 0
    %2865 = vmatpush1.bf16.msra.mxu0 0
    %2866 = vmatprep.subr.bf16.mxu0 0
    %2867 = vmatpush1.bf16.msra.mxu0 0
    %2868 = vmatprep.subr.bf16.mxu0 0
    %2869 = vmatpush1.bf16.msra.mxu0 0
    %2870 = vmatprep.subr.bf16.mxu0 0
    %2871 = vmatpush1.bf16.msra.mxu0 0
    %2872 = vmatprep.subr.bf16.mxu0 0
    %2873 = vmatpush1.bf16.msra.mxu0 0
    %2874 = vmatprep.subr.bf16.mxu0 0
    %2875 = vmatpush1.bf16.msra.mxu0 0
    %2876 = vmatprep.subr.bf16.mxu0 0
    %2877 = vmatpush1.bf16.msra.mxu0 0
    %2878 = vmatprep.subr.bf16.mxu0 0
    %2879 = vmatpush1.bf16.msra.mxu0 0
    %2880 = vmatprep.subr.bf16.mxu0 0
    %2881 = vmatpush1.bf16.msra.mxu0 0
    %2882 = vmatprep.mubr.bf16.mxu0 0
    %2883 = vmatmul.mubr.bf16.gmra.mrb[0].mxu0 %v2845
    %v2884 = vpop.f32.mrb[0].mxu0
    %v2885 = vadd.f32 0.0, %v2884
    %v2886 = vpop.f32.mrb[0].mxu0
    %v2887 = vpop.f32.mrb[0].mxu0
    %v2888 = vpop.f32.mrb[0].mxu0
    %2889 = vdwg.mxu0
    %2890 = vrot.lane.b32.xlu0 %v1904, 80
    %v2891 = vpop.permute.xlu0 %2890
    %v2893 = vsel %vm422, %v2841, 0
    %v2896 = vsel %vm450, %v2891, 0
    %2898 = vmatprep.subr.bf16.mxu0 0
    %2899 = vmatpush1.bf16.msra.mxu0 %v2896
    %2900 = vmatprep.subr.bf16.mxu0 0
    %2901 = vmatpush1.bf16.msra.mxu0 0
    %2902 = vmatprep.subr.bf16.mxu0 0
    %2903 = vmatpush1.bf16.msra.mxu0 0
    %2904 = vmatprep.subr.bf16.mxu0 0
    %2905 = vmatpush1.bf16.msra.mxu0 0
    %2906 = vmatprep.subr.bf16.mxu0 0
    %2907 = vmatpush1.bf16.msra.mxu0 0
    %2908 = vmatprep.subr.bf16.mxu0 0
    %2909 = vmatpush1.bf16.msra.mxu0 0
    %2910 = vmatprep.subr.bf16.mxu0 0
    %2911 = vmatpush1.bf16.msra.mxu0 0
    %2912 = vmatprep.subr.bf16.mxu0 0
    %2913 = vmatpush1.bf16.msra.mxu0 0
    %2914 = vmatprep.subr.bf16.mxu0 0
    %2915 = vmatpush1.bf16.msra.mxu0 0
    %2916 = vmatprep.subr.bf16.mxu0 0
    %2917 = vmatpush1.bf16.msra.mxu0 0
    %2918 = vmatprep.subr.bf16.mxu0 0
    %2919 = vmatpush1.bf16.msra.mxu0 0
    %2920 = vmatprep.subr.bf16.mxu0 0
    %2921 = vmatpush1.bf16.msra.mxu0 0
    %2922 = vmatprep.subr.bf16.mxu0 0
    %2923 = vmatpush1.bf16.msra.mxu0 0
    %2924 = vmatprep.subr.bf16.mxu0 0
    %2925 = vmatpush1.bf16.msra.mxu0 0
    %2926 = vmatprep.subr.bf16.mxu0 0
    %2927 = vmatpush1.bf16.msra.mxu0 0
    %2928 = vmatprep.subr.bf16.mxu0 0
    %2929 = vmatpush1.bf16.msra.mxu0 0
    %2930 = vmatprep.mubr.bf16.mxu0 0
    %2931 = vmatmul.mubr.bf16.gmra.mrb[0].mxu0 %v2893
    %v2932 = vpop.f32.mrb[0].mxu0
    %v2933 = vadd.f32 0.0, %v2932
    %v2934 = vpop.f32.mrb[0].mxu0
    %v2935 = vpop.f32.mrb[0].mxu0
    %v2936 = vpop.f32.mrb[0].mxu0
    %2937 = vdwg.mxu0
    %v2938 = vpack.c.bf16 %v2933, %v2885
    %v2941 = vunpack.c.l.b16 %v1791
    %v2942 = vunpack.c.l.b16 %v1792
    %v2943 = vpack.c.b16 %v2942, %v2941
    %v2946 = vsel %vm326, %v2938, 0
    %2948 = vmatprep.subr.bf16.mxu0 0
    %2949 = vmatpush1.bf16.msra.mxu0 %v2943
    %2950 = vmatprep.subr.bf16.mxu0 0
    %2951 = vmatpush1.bf16.msra.mxu0 0
    %2952 = vmatprep.subr.bf16.mxu0 0
    %2953 = vmatpush1.bf16.msra.mxu0 0
    %2954 = vmatprep.subr.bf16.mxu0 0
    %2955 = vmatpush1.bf16.msra.mxu0 0
    %2956 = vmatprep.subr.bf16.mxu0 0
    %2957 = vmatpush1.bf16.msra.mxu0 0
    %2958 = vmatprep.subr.bf16.mxu0 0
    %2959 = vmatpush1.bf16.msra.mxu0 0
    %2960 = vmatprep.subr.bf16.mxu0 0
    %2961 = vmatpush1.bf16.msra.mxu0 0
    %2962 = vmatprep.subr.bf16.mxu0 0
    %2963 = vmatpush1.bf16.msra.mxu0 0
    %2964 = vmatprep.subr.bf16.mxu0 0
    %2965 = vmatpush1.bf16.msra.mxu0 0
    %2966 = vmatprep.subr.bf16.mxu0 0
    %2967 = vmatpush1.bf16.msra.mxu0 0
    %2968 = vmatprep.subr.bf16.mxu0 0
    %2969 = vmatpush1.bf16.msra.mxu0 0
    %2970 = vmatprep.subr.bf16.mxu0 0
    %2971 = vmatpush1.bf16.msra.mxu0 0
    %2972 = vmatprep.subr.bf16.mxu0 0
    %2973 = vmatpush1.bf16.msra.mxu0 0
    %2974 = vmatprep.subr.bf16.mxu0 0
    %2975 = vmatpush1.bf16.msra.mxu0 0
    %2976 = vmatprep.subr.bf16.mxu0 0
    %2977 = vmatpush1.bf16.msra.mxu0 0
    %2978 = vmatprep.subr.bf16.mxu0 0
    %2979 = vmatpush1.bf16.msra.mxu0 0
    %2980 = vmatprep.mubr.bf16.mxu0 0
    %2981 = vmatmul.mubr.bf16.gmra.mrb[0].mxu0 %v2946
    %v2982 = vpop.f32.mrb[0].mxu0
    %v2983 = vadd.f32 0.0, %v2982
    %v2984 = vpop.f32.mrb[0].mxu0
    %v2985 = vpop.f32.mrb[0].mxu0
    %v2986 = vadd.f32 0.0, %v2985
    %v2987 = vpop.f32.mrb[0].mxu0
    %2988 = vdwg.mxu0
    %v2989 = vadd.f32 %v2716, %v2983
    %v2990 = vadd.f32 %v2717, %v2986
    %v2991 = vlaneseq
    %v2992 = vshrl.u32 %v2991, 7
    %v2993 = vsub.s32 1, %v2992
    %v2994 = vrot.slane %v1782, %v2993
    %v2995 = vadd.f32 %v2989, %v2994
    %v2996 = vadd.f32 %v2990, %v2994
    %v2997 = vadd.f32 %v1779, %v2995
    %v2998 = vadd.f32 %v1780, %v2996
    %v2999 = vsel %vm268, %v2997, 0.0
    %3000 = vadd.xlane.f32.xlu0 %v2999
    %v3001 = vpop.xlane.xlu0 %3000
    %v3002 = vsel %vm268, %v2998, 0.0
    %3003 = vadd.xlane.f32.xlu0 %v3002
    %v3004 = vpop.xlane.xlu0 %3003
    %v3005 = vmul.f32 %v3001, %v1426
    %v3006 = vmul.f32 %v3004, %v1426
    %v3007 = vsub.f32 %v2997, %v3005
    %v3008 = vsub.f32 %v2998, %v3006
    %v3009 = vmul.f32 %v3007, %v3007
    %v3010 = vmul.f32 %v3008, %v3008
    %v3011 = vsel %vm268, %v3009, 0.0
    %3012 = vadd.xlane.f32.xlu0 %v3011
    %v3013 = vpop.xlane.xlu0 %3012
    %v3014 = vsel %vm268, %v3010, 0.0
    %3015 = vadd.xlane.f32.xlu0 %v3014
    %v3016 = vpop.xlane.xlu0 %3015
    %v3017 = vmul.f32 %v3013, %v1426
    %v3018 = vmul.f32 %v3016, %v1426
    %v3019 = vadd.f32 %v3017, 1e-05
    %v3020 = vadd.f32 %v3018, 1e-05
    %v3021 = vrsqrt.pop %v3019
    %v3022 = vrsqrt.pop %v3020
    %v3023 = vmul.f32 %v3007, %v3021
    %v3024 = vmul.f32 %v3008, %v3022
    %v3025 = vlaneseq
    %v3026 = vshrl.u32 %v3025, 7
    %v3027 = vsub.s32 4, %v3026
    %v3028 = vrot.slane %v1782, %v3027
    %v3029 = vmul.f32 %v3023, %v3028
    %v3030 = vmul.f32 %v3024, %v3028
    %v3031 = vlaneseq
    %v3032 = vshrl.u32 %v3031, 7
    %v3033 = vsub.s32 5, %v3032
    %v3034 = vrot.slane %v1782, %v3033
    %v3035 = vadd.f32 %v3029, %v3034
    %v3036 = vadd.f32 %v3030, %v3034
    %v3037 = vpack.c.bf16 %v3036, %v3035
    %s3038 = scalar_lea.vmem %s6, 64
    %v3039 = vld [vmem:[%s3038] sm:$0xff]
    %v3040 = vld [vmem:[%s3038 + $0x8] sm:$0xff]
    %v3041 = vld [vmem:[%s3038 + $0x10] sm:$0xff]
    %v3042 = vld [vmem:[%s3038 + $0x18] sm:$0xff]
    %v3043 = vld [vmem:[%s3038 + $0x20] sm:$0xff]
    %v3044 = vld [vmem:[%s3038 + $0x28] sm:$0xff]
    %v3045 = vld [vmem:[%s3038 + $0x30] sm:$0xff]
    %v3046 = vld [vmem:[%s3038 + $0x38] sm:$0xff]
    %v3047 = vlaneseq
    %v3048 = vshrl.u32 %v3047, 7
    %v3049 = vsub.s32 2, %v3048
    %v3050 = vrot.slane %v1782, %v3049
    %v3051 = vlaneseq
    %v3052 = vshrl.u32 %v3051, 7
    %v3053 = vsub.s32 2, %v3052
    %v3054 = vrot.slane %v1783, %v3053
    %v3063 = vunpack.c.l.b16 %v3039
    %v3064 = vunpack.c.h.b16 %v3039
    %v3065 = vunpack.c.l.b16 %v3040
    %v3066 = vunpack.c.h.b16 %v3040
    %v3067 = vunpack.c.l.b16 %v3041
    %v3068 = vunpack.c.h.b16 %v3041
    %v3069 = vunpack.c.l.b16 %v3042
    %v3070 = vunpack.c.h.b16 %v3042
    %v3071 = vunpack.c.l.b16 %v3043
    %v3072 = vunpack.c.h.b16 %v3043
    %v3073 = vunpack.c.l.b16 %v3044
    %v3074 = vunpack.c.h.b16 %v3044
    %v3075 = vunpack.c.l.b16 %v3045
    %v3076 = vunpack.c.h.b16 %v3045
    %v3077 = vunpack.c.l.b16 %v3046
    %v3078 = vunpack.c.h.b16 %v3046
    %v3079 = vpack.c.b16 %v3065, %v3063
    %v3080 = vpack.c.b16 %v3066, %v3064
    %v3081 = vpack.c.b16 %v3069, %v3067
    %v3082 = vpack.c.b16 %v3070, %v3068
    %v3083 = vpack.c.b16 %v3073, %v3071
    %v3084 = vpack.c.b16 %v3074, %v3072
    %v3085 = vpack.c.b16 %v3077, %v3075
    %v3086 = vpack.c.b16 %v3078, %v3076
    %v3096 = vsel %vm268, %v3037, 0
    %3098 = vmatprep.subr.bf16.mxu0 %v3080
    %3099 = vmatpush1.bf16.msra.mxu0 %v3079
    %3100 = vmatprep.subr.bf16.mxu0 %v3082
    %3101 = vmatpush1.bf16.msra.mxu0 %v3081
    %3102 = vmatprep.subr.bf16.mxu0 %v3084
    %3103 = vmatpush1.bf16.msra.mxu0 %v3083
    %3104 = vmatprep.subr.bf16.mxu0 %v3086
    %3105 = vmatpush1.bf16.msra.mxu0 %v3085
    %3106 = vmatprep.subr.bf16.mxu0 0
    %3107 = vmatpush1.bf16.msra.mxu0 0
    %3108 = vmatprep.subr.bf16.mxu0 0
    %3109 = vmatpush1.bf16.msra.mxu0 0
    %3110 = vmatprep.subr.bf16.mxu0 0
    %3111 = vmatpush1.bf16.msra.mxu0 0
    %3112 = vmatprep.subr.bf16.mxu0 0
    %3113 = vmatpush1.bf16.msra.mxu0 0
    %3114 = vmatprep.subr.bf16.mxu0 0
    %3115 = vmatpush1.bf16.msra.mxu0 0
    %3116 = vmatprep.subr.bf16.mxu0 0
    %3117 = vmatpush1.bf16.msra.mxu0 0
    %3118 = vmatprep.subr.bf16.mxu0 0
    %3119 = vmatpush1.bf16.msra.mxu0 0
    %3120 = vmatprep.subr.bf16.mxu0 0
    %3121 = vmatpush1.bf16.msra.mxu0 0
    %3122 = vmatprep.subr.bf16.mxu0 0
    %3123 = vmatpush1.bf16.msra.mxu0 0
    %3124 = vmatprep.subr.bf16.mxu0 0
    %3125 = vmatpush1.bf16.msra.mxu0 0
    %3126 = vmatprep.subr.bf16.mxu0 0
    %3127 = vmatpush1.bf16.msra.mxu0 0
    %3128 = vmatprep.subr.bf16.mxu0 0
    %3129 = vmatpush1.bf16.msra.mxu0 0
    %3130 = vmatprep.mubr.bf16.mxu0 0
    %3131 = vmatmul.mubr.bf16.gmra.mrb[0].mxu0 %v3096
    %v3132 = vpop.f32.mrb[0].mxu0
    %v3133 = vadd.f32 %v3050, %v3132
    %v3134 = vpop.f32.mrb[0].mxu0
    %v3135 = vadd.f32 %v3054, %v3134
    %v3136 = vpop.f32.mrb[0].mxu0
    %v3137 = vadd.f32 %v3050, %v3136
    %v3138 = vpop.f32.mrb[0].mxu0
    %v3139 = vadd.f32 %v3054, %v3138
    %3140 = vdwg.mxu0
    %v3141 = vmax.f32 %v3133, 0.0
    %v3142 = vmax.f32 %v3135, 0.0
    %v3143 = vmax.f32 %v3137, 0.0
    %v3144 = vmax.f32 %v3139, 0.0
    %v3145 = vpack.c.bf16 %v3143, %v3141
    %v3146 = vpack.c.bf16 %v3144, %v3142
    %s3147 = scalar_lea.vmem %s7, 128
    %v3148 = vld [vmem:[%s3147] sm:$0xf]
    %v3149 = vld [vmem:[%s3147 + $0x4] sm:$0xf]
    %v3150 = vld [vmem:[%s3147 + $0x8] sm:$0xf]
    %v3151 = vld [vmem:[%s3147 + $0xc] sm:$0xf]
    %v3152 = vld [vmem:[%s3147 + $0x10] sm:$0xf]
    %v3153 = vld [vmem:[%s3147 + $0x14] sm:$0xf]
    %v3154 = vld [vmem:[%s3147 + $0x18] sm:$0xf]
    %v3155 = vld [vmem:[%s3147 + $0x1c] sm:$0xf]
    %v3156 = vld [vmem:[%s3147 + $0x20] sm:$0xf]
    %v3157 = vld [vmem:[%s3147 + $0x24] sm:$0xf]
    %v3158 = vld [vmem:[%s3147 + $0x28] sm:$0xf]
    %v3159 = vld [vmem:[%s3147 + $0x2c] sm:$0xf]
    %v3160 = vld [vmem:[%s3147 + $0x30] sm:$0xf]
    %v3161 = vld [vmem:[%s3147 + $0x34] sm:$0xf]
    %v3162 = vld [vmem:[%s3147 + $0x38] sm:$0xf]
    %v3163 = vld [vmem:[%s3147 + $0x3c] sm:$0xf]
    %v3164 = vld [vmem:[%s3147 + $0x40] sm:$0xf]
    %v3165 = vld [vmem:[%s3147 + $0x44] sm:$0xf]
    %v3166 = vld [vmem:[%s3147 + $0x48] sm:$0xf]
    %v3167 = vld [vmem:[%s3147 + $0x4c] sm:$0xf]
    %v3168 = vld [vmem:[%s3147 + $0x50] sm:$0xf]
    %v3169 = vld [vmem:[%s3147 + $0x54] sm:$0xf]
    %v3170 = vld [vmem:[%s3147 + $0x58] sm:$0xf]
    %v3171 = vld [vmem:[%s3147 + $0x5c] sm:$0xf]
    %v3172 = vld [vmem:[%s3147 + $0x60] sm:$0xf]
    %v3173 = vld [vmem:[%s3147 + $0x64] sm:$0xf]
    %v3174 = vld [vmem:[%s3147 + $0x68] sm:$0xf]
    %v3175 = vld [vmem:[%s3147 + $0x6c] sm:$0xf]
    %v3176 = vld [vmem:[%s3147 + $0x70] sm:$0xf]
    %v3177 = vld [vmem:[%s3147 + $0x74] sm:$0xf]
    %v3178 = vld [vmem:[%s3147 + $0x78] sm:$0xf]
    %v3179 = vld [vmem:[%s3147 + $0x7c] sm:$0xf]
    %v3180 = vlaneseq
    %v3181 = vshrl.u32 %v3180, 7
    %v3182 = vsub.s32 3, %v3181
    %v3183 = vrot.slane %v1782, %v3182
    %v3216 = vunpack.c.l.b16 %v3148
    %v3217 = vunpack.c.l.b16 %v3149
    %v3218 = vunpack.c.l.b16 %v3150
    %v3219 = vunpack.c.l.b16 %v3151
    %v3220 = vunpack.c.l.b16 %v3152
    %v3221 = vunpack.c.l.b16 %v3153
    %v3222 = vunpack.c.l.b16 %v3154
    %v3223 = vunpack.c.l.b16 %v3155
    %v3224 = vunpack.c.l.b16 %v3156
    %v3225 = vunpack.c.l.b16 %v3157
    %v3226 = vunpack.c.l.b16 %v3158
    %v3227 = vunpack.c.l.b16 %v3159
    %v3228 = vunpack.c.l.b16 %v3160
    %v3229 = vunpack.c.l.b16 %v3161
    %v3230 = vunpack.c.l.b16 %v3162
    %v3231 = vunpack.c.l.b16 %v3163
    %v3232 = vunpack.c.l.b16 %v3164
    %v3233 = vunpack.c.l.b16 %v3165
    %v3234 = vunpack.c.l.b16 %v3166
    %v3235 = vunpack.c.l.b16 %v3167
    %v3236 = vunpack.c.l.b16 %v3168
    %v3237 = vunpack.c.l.b16 %v3169
    %v3238 = vunpack.c.l.b16 %v3170
    %v3239 = vunpack.c.l.b16 %v3171
    %v3240 = vunpack.c.l.b16 %v3172
    %v3241 = vunpack.c.l.b16 %v3173
    %v3242 = vunpack.c.l.b16 %v3174
    %v3243 = vunpack.c.l.b16 %v3175
    %v3244 = vunpack.c.l.b16 %v3176
    %v3245 = vunpack.c.l.b16 %v3177
    %v3246 = vunpack.c.l.b16 %v3178
    %v3247 = vunpack.c.l.b16 %v3179
    %v3248 = vpack.c.b16 %v3217, %v3216
    %v3249 = vpack.c.b16 %v3219, %v3218
    %v3250 = vpack.c.b16 %v3221, %v3220
    %v3251 = vpack.c.b16 %v3223, %v3222
    %v3252 = vpack.c.b16 %v3225, %v3224
    %v3253 = vpack.c.b16 %v3227, %v3226
    %v3254 = vpack.c.b16 %v3229, %v3228
    %v3255 = vpack.c.b16 %v3231, %v3230
    %v3256 = vpack.c.b16 %v3233, %v3232
    %v3257 = vpack.c.b16 %v3235, %v3234
    %v3258 = vpack.c.b16 %v3237, %v3236
    %v3259 = vpack.c.b16 %v3239, %v3238
    %v3260 = vpack.c.b16 %v3241, %v3240
    %v3261 = vpack.c.b16 %v3243, %v3242
    %v3262 = vpack.c.b16 %v3245, %v3244
    %v3263 = vpack.c.b16 %v3247, %v3246
    %3280 = vmatprep.subr.bf16.mxu0 0
    %3281 = vmatpush1.bf16.msra.mxu0 %v3248
    %3282 = vmatprep.subr.bf16.mxu0 0
    %3283 = vmatpush1.bf16.msra.mxu0 %v3249
    %3284 = vmatprep.subr.bf16.mxu0 0
    %3285 = vmatpush1.bf16.msra.mxu0 %v3250
    %3286 = vmatprep.subr.bf16.mxu0 0
    %3287 = vmatpush1.bf16.msra.mxu0 %v3251
    %3288 = vmatprep.subr.bf16.mxu0 0
    %3289 = vmatpush1.bf16.msra.mxu0 %v3252
    %3290 = vmatprep.subr.bf16.mxu0 0
    %3291 = vmatpush1.bf16.msra.mxu0 %v3253
    %3292 = vmatprep.subr.bf16.mxu0 0
    %3293 = vmatpush1.bf16.msra.mxu0 %v3254
    %3294 = vmatprep.subr.bf16.mxu0 0
    %3295 = vmatpush1.bf16.msra.mxu0 %v3255
    %3296 = vmatprep.subr.bf16.mxu0 0
    %3297 = vmatpush1.bf16.msra.mxu0 %v3256
    %3298 = vmatprep.subr.bf16.mxu0 0
    %3299 = vmatpush1.bf16.msra.mxu0 %v3257
    %3300 = vmatprep.subr.bf16.mxu0 0
    %3301 = vmatpush1.bf16.msra.mxu0 %v3258
    %3302 = vmatprep.subr.bf16.mxu0 0
    %3303 = vmatpush1.bf16.msra.mxu0 %v3259
    %3304 = vmatprep.subr.bf16.mxu0 0
    %3305 = vmatpush1.bf16.msra.mxu0 %v3260
    %3306 = vmatprep.subr.bf16.mxu0 0
    %3307 = vmatpush1.bf16.msra.mxu0 %v3261
    %3308 = vmatprep.subr.bf16.mxu0 0
    %3309 = vmatpush1.bf16.msra.mxu0 %v3262
    %3310 = vmatprep.subr.bf16.mxu0 0
    %3311 = vmatpush1.bf16.msra.mxu0 %v3263
    %3312 = vmatprep.mubr.bf16.mxu0 %v3146
    %3313 = vmatmul.mubr.bf16.gmra.mrb[0].mxu0 %v3145
    %v3314 = vpop.f32.mrb[0].mxu0
    %v3315 = vadd.f32 %v3183, %v3314
    %v3316 = vpop.f32.mrb[0].mxu0
    %v3317 = vpop.f32.mrb[0].mxu0
    %v3318 = vadd.f32 %v3183, %v3317
    %v3319 = vpop.f32.mrb[0].mxu0
    %3320 = vdwg.mxu0
    %v3321 = vadd.f32 %v3035, %v3315
    %v3322 = vadd.f32 %v3036, %v3318
    %v3323 = vsel %vm268, %v3321, 0.0
    %3324 = vadd.xlane.f32.xlu0 %v3323
    %v3325 = vpop.xlane.xlu0 %3324
    %v3326 = vsel %vm268, %v3322, 0.0
    %3327 = vadd.xlane.f32.xlu0 %v3326
    %v3328 = vpop.xlane.xlu0 %3327
    %v3329 = vmul.f32 %v3325, %v1426
    %v3330 = vmul.f32 %v3328, %v1426
    %v3331 = vsub.f32 %v3321, %v3329
    %v3332 = vsub.f32 %v3322, %v3330
    %v3333 = vmul.f32 %v3331, %v3331
    %v3334 = vmul.f32 %v3332, %v3332
    %v3335 = vsel %vm268, %v3333, 0.0
    %3336 = vadd.xlane.f32.xlu0 %v3335
    %v3337 = vpop.xlane.xlu0 %3336
    %v3338 = vsel %vm268, %v3334, 0.0
    %3339 = vadd.xlane.f32.xlu0 %v3338
    %v3340 = vpop.xlane.xlu0 %3339
    %v3341 = vmul.f32 %v3337, %v1426
    %v3342 = vmul.f32 %v3340, %v1426
    %v3343 = vadd.f32 %v3341, 1e-05
    %v3344 = vadd.f32 %v3342, 1e-05
    %v3345 = vrsqrt.pop %v3343
    %v3346 = vrsqrt.pop %v3344
    %v3347 = vmul.f32 %v3331, %v3345
    %v3348 = vmul.f32 %v3332, %v3346
    %v3349 = vlaneseq
    %v3350 = vshrl.u32 %v3349, 7
    %v3351 = vsub.s32 6, %v3350
    %v3352 = vrot.slane %v1782, %v3351
    %v3353 = vmul.f32 %v3347, %v3352
    %v3354 = vmul.f32 %v3348, %v3352
    %v3355 = vlaneseq
    %v3356 = vshrl.u32 %v3355, 7
    %v3357 = vsub.s32 7, %v3356
    %v3358 = vrot.slane %v1782, %v3357
    %v3359 = vadd.f32 %v3353, %v3358
    %v3360 = vadd.f32 %v3354, %v3358
    %v3361 = vpack.c.bf16 %v3359, %v3359
    %v3362 = vpack.c.bf16 %v3360, %v3360
    %v3363 = vld [vmem:[%s9] sm:$0xf]
    %v3364 = vld [vmem:[%s9 + $0x4] sm:$0xf]
    %v3365 = vld [vmem:[%s9 + $0x8] sm:$0xf]
    %v3366 = vld [vmem:[%s9 + $0xc] sm:$0xf]
    %v3367 = vld [vmem:[%s9 + $0x10] sm:$0xf]
    %v3368 = vld [vmem:[%s9 + $0x14] sm:$0xf]
    %v3369 = vld [vmem:[%s9 + $0x18] sm:$0xf]
    %v3370 = vld [vmem:[%s9 + $0x1c] sm:$0xf]
    %v3371 = vld [vmem:[%s10] sm:$0x1]
    %v3373 = vlaneseq
    %v3374 = vshrl.u32 %v3373, 7
    %v3375 = vsub.s32 0, %v3374
    %v3376 = vrot.slane %v3371, %v3375
    %v3380 = vunpack.c.l.b16 %v3361
    %v3381 = vunpack.c.l.b16 %v3362
    %v3382 = vrot.slane %v3381, 7
    %vm3383 = vcmask 1041409
    %v3384 = vsel %vm3383, %v3382, %v3380
    %v3385 = vpack.c.b16 %v3384, %v3384
    %v3394 = vunpack.c.l.b16 %v3363
    %v3395 = vunpack.c.l.b16 %v3364
    %v3396 = vunpack.c.l.b16 %v3365
    %v3397 = vunpack.c.l.b16 %v3366
    %v3398 = vunpack.c.l.b16 %v3367
    %v3399 = vunpack.c.l.b16 %v3368
    %v3400 = vunpack.c.l.b16 %v3369
    %v3401 = vunpack.c.l.b16 %v3370
    %v3402 = vpack.c.b16 %v3395, %v3394
    %v3403 = vpack.c.b16 %v3397, %v3396
    %v3404 = vpack.c.b16 %v3399, %v3398
    %v3405 = vpack.c.b16 %v3401, %v3400
    %v3411 = vsel %vm268, %v3385, 0
    %3413 = vmatprep.subr.bf16.mxu0 0
    %3414 = vmatpush1.bf16.msra.mxu0 %v3402
    %3415 = vmatprep.subr.bf16.mxu0 0
    %3416 = vmatpush1.bf16.msra.mxu0 %v3403
    %3417 = vmatprep.subr.bf16.mxu0 0
    %3418 = vmatpush1.bf16.msra.mxu0 %v3404
    %3419 = vmatprep.subr.bf16.mxu0 0
    %3420 = vmatpush1.bf16.msra.mxu0 %v3405
    %3421 = vmatprep.subr.bf16.mxu0 0
    %3422 = vmatpush1.bf16.msra.mxu0 0
    %3423 = vmatprep.subr.bf16.mxu0 0
    %3424 = vmatpush1.bf16.msra.mxu0 0
    %3425 = vmatprep.subr.bf16.mxu0 0
    %3426 = vmatpush1.bf16.msra.mxu0 0
    %3427 = vmatprep.subr.bf16.mxu0 0
    %3428 = vmatpush1.bf16.msra.mxu0 0
    %3429 = vmatprep.subr.bf16.mxu0 0
    %3430 = vmatpush1.bf16.msra.mxu0 0
    %3431 = vmatprep.subr.bf16.mxu0 0
    %3432 = vmatpush1.bf16.msra.mxu0 0
    %3433 = vmatprep.subr.bf16.mxu0 0
    %3434 = vmatpush1.bf16.msra.mxu0 0
    %3435 = vmatprep.subr.bf16.mxu0 0
    %3436 = vmatpush1.bf16.msra.mxu0 0
    %3437 = vmatprep.subr.bf16.mxu0 0
    %3438 = vmatpush1.bf16.msra.mxu0 0
    %3439 = vmatprep.subr.bf16.mxu0 0
    %3440 = vmatpush1.bf16.msra.mxu0 0
    %3441 = vmatprep.subr.bf16.mxu0 0
    %3442 = vmatpush1.bf16.msra.mxu0 0
    %3443 = vmatprep.subr.bf16.mxu0 0
    %3444 = vmatpush1.bf16.msra.mxu0 0
    %3445 = vmatprep.mubr.bf16.mxu0 0
    %3446 = vmatmul.mubr.bf16.gmra.mrb[0].mxu0 %v3411
    %v3447 = vpop.f32.mrb[0].mxu0
    %v3448 = vadd.f32 %v3376, %v3447
    %v3449 = vpop.f32.mrb[0].mxu0
    %v3450 = vpop.f32.mrb[0].mxu0
    %v3451 = vpop.f32.mrb[0].mxu0
    %3452 = vdwg.mxu0
    %vm3453 = vcmask 41984
    %3454 = vst.msk [vmem:[#allocation2] sm:$0x3] %vm3453, %v3448
    // Predicated region
    $region46: #{forward.1} parent=1 // pred_check
      _
    $region47: #{forward.1} parent=1 // pred_check_branch
      %3456 = sbr.rel (0) target = $region49
    $region48: #{forward.1} parent=1 // pred_region
      %s3458 = ssub.s32 32, 32
      %3459 = vsyncadd [#allocation3], %s3458
      %s3461 = sshll.u32 [#allocation2], 4
      %s3462 = int_to_ptr.vmem [resolvable:$true] %s3461
      %3464 = dma.vmem_to_hbm [thread:$0]  %s3462, 32, %s11, [#allocation3]
    $region49: #{forward.1} parent=1 // pred_fallthru
      _
    // Predicated region
    $region50: #{forward.1} parent=1 // pred_check
      _
    $region51: #{forward.1} parent=1 // pred_check_branch
      %3466 = sbr.rel (0) target = $region53
    $region52: #{forward.1} parent=1 // pred_region
      %3467 = dma.done [#allocation3], 32
    $region53: #{forward.1} parent=1 // pred_fallthru
      _
    %3468 = vsyncpa [#allocation3], 1

</llo_original>
